<compile_context>
chip_gen: v6e
topology: v6e:2x2x1
jax: 0.10.0
libtpu: 0.0.40
codegen_flags: <defaults>
</compile_context>

<pallas_src>
import functools

import numpy as np
import jax
import jax.numpy as jnp
from jax import lax
from jax.experimental import pallas as pl
from jax.experimental.pallas import tpu as pltpu

NEG_INF = -1e30


# -----------------------------------------------------------------------------
# Fused kernel: conv -> pool -> proj -> transformer block -> classifier
# (one grid step == one batch element; everything stays in vregs/VMEM)
# -----------------------------------------------------------------------------
def _fused_kernel(patch_ref, convw_ref, convb_ref, pool_ref, projw_ref,
                  scat_ref, base_ref, ln1g_ref, ln1b_ref,
                  wq_ref, bq_ref, wkT_ref, bkT_ref, wv_ref, bv_ref,
                  tile4_ref, maskk_ref, colmask_ref, colvalid_ref,
                  tileT_ref, maskv_ref, attw_ref, attb_ref,
                  ln2g_ref, ln2b_ref, fc1w_ref, fc1b_ref, fc2w_ref, fc2b_ref,
                  lnfg_ref, lnfb_ref, clsw_ref, clsb_ref,
                  out_ref, *, HD):
    f32, bf16 = jnp.float32, jnp.bfloat16

    def ln(x, g, b, eps=1e-5):                       # LayerNorm over lane dim
        mu = jnp.mean(x, axis=-1, keepdims=True)
        xc = x - mu
        var = jnp.mean(xc * xc, axis=-1, keepdims=True)
        return xc * lax.rsqrt(var + eps) * g + b

    def mm(a, w):                                    # bf16 MXU matmul, f32 acc
        return jnp.dot(a.astype(bf16), w.astype(bf16), preferred_element_type=f32)

    # 1) CNN stand-in: im2col conv as one matmul + ReLU              (S, Ccnn)
    feat = jnp.maximum(mm(patch_ref[...], convw_ref[...]) + convb_ref[...], 0.0)

    # 2) adaptive average pool: shared (P, S) matrix (no block-diag) (P, Ccnn)
    pooled = mm(pool_ref[...], feat)

    # 3) feature projection (bias folded into `base`)                (P, D)
    proj = mm(pooled, projw_ref[...])

    # 4) residual stream: aligned scatter matmul puts tokens in rows 1..P,
    #    `base` carries cls+pos+proj_bias; rows >= T stay zero.      (Tpad, D)
    z = mm(scat_ref[...], proj) + base_ref[...]

    # 5) attention — all NH heads as one lane-dense score block.
    x1 = ln(z, ln1g_ref[...], ln1b_ref[...])
    xb = x1.astype(bf16)
    q = jnp.dot(xb, wq_ref[...], preferred_element_type=f32) + bq_ref[...]   # (Tpad, D)
    # k^T computed directly (transpose folded into host-side Wk^T weight).
    kT = lax.dot_general(wkT_ref[...], xb, (((1,), (1,)), ((), ())),
                         preferred_element_type=f32) + bkT_ref[...]          # (D, Tpad)
    v = jnp.dot(xb, wv_ref[...], preferred_element_type=f32) + bv_ref[...]   # (Tpad, D)

    # K replicated per head along lanes, masked to each head's block.
    k_big = mm(kT, tile4_ref[...]) * maskk_ref[...]                  # (D, NH*Tpad)
    s = mm(q, k_big) * (1.0 / float(np.sqrt(HD))) + colmask_ref[...] # (Tpad, NH*Tpad)
    m = jnp.max(s, axis=-1, keepdims=True)
    p = (jnp.exp(jnp.maximum(s - m, -30.0)) * colvalid_ref[...]).astype(bf16)

    # V replicated per head along rows, masked to that head's output columns:
    # p @ v_big directly yields the head-merged (Tpad, D) attention output.
    v_big = (mm(tileT_ref[...], v) * maskv_ref[...]).astype(bf16)    # (NH*Tpad, D)
    o_num = jnp.dot(p, v_big, preferred_element_type=f32)            # (Tpad, D)
    den = jnp.dot(p, maskv_ref[...].astype(bf16), preferred_element_type=f32)
    o = o_num * pl.reciprocal(den, approx=True)
    z = z + mm(o, attw_ref[...]) + attb_ref[...]

    # 6) MLP
    x2 = ln(z, ln2g_ref[...], ln2b_ref[...])
    h1 = mm(x2, fc1w_ref[...]) + fc1b_ref[...]                       # (Tpad, MLP)
    # TODO(synk): tanh-approx GELU; PyTorch nn.GELU default is the exact erf form.
    h1 = 0.5 * h1 * (1.0 + jnp.tanh(0.7978845608028654 * (h1 + 0.044715 * h1 * h1 * h1)))
    z = z + mm(h1, fc2w_ref[...]) + fc2b_ref[...]

    # 7) final LN + classifier (128-lane padded -> unmasked lane-dense store)
    zf = ln(z, lnfg_ref[...], lnfb_ref[...])
    out_ref[...] = (mm(zf, clsw_ref[...]) + clsb_ref[...]).astype(out_ref.dtype)


# -----------------------------------------------------------------------------
# Host-side helpers
# -----------------------------------------------------------------------------
def im2col_3x3_s2_p1(x_nhwc):
    """3x3/stride-2/pad-1 patches. x: (B,H,W,Cin) -> (B, OH*OW, 9*Cin)."""
    B, H, W, Cin = x_nhwc.shape
    OH, OW = H // 2, W // 2
    xp = jnp.pad(x_nhwc, ((0, 0), (1, 1), (1, 1), (0, 0)))
    cols = []
    for di in range(3):
        for dj in range(3):
            cols.append(xp[:, di:di + 2 * OH:2, dj:dj + 2 * OW:2, :])
    patches = jnp.concatenate(cols, axis=-1)
    return patches.reshape(B, OH * OW, 9 * Cin), OH, OW


@functools.lru_cache(maxsize=None)
def _pool_matrix(in_h, in_w, out_h, out_w):
    """Exact nn.AdaptiveAvgPool2d as a (out_h*out_w, in_h*in_w) matrix."""
    P = np.zeros((out_h * out_w, in_h * in_w), np.float32)
    for oh in range(out_h):
        h0, h1 = (oh * in_h) // out_h, -((-(oh + 1) * in_h) // out_h)
        for ow in range(out_w):
            w0, w1 = (ow * in_w) // out_w, -((-(ow + 1) * in_w) // out_w)
            cnt = (h1 - h0) * (w1 - w0)
            for ih in range(h0, h1):
                for iw in range(w0, w1):
                    P[oh * out_w + ow, ih * in_w + iw] = 1.0 / cnt
    return jnp.asarray(P, jnp.bfloat16)


@functools.lru_cache(maxsize=None)
def _attn_constants(T, Tpad, D, NH):
    """Head-packing constants for lane-dense multi-head attention."""
    HD = D // NH
    P = T - 1
    L = NH * Tpad
    scat = np.zeros((Tpad, P), np.float32)            # tokens -> rows 1..P
    for i in range(P):
        scat[1 + i, i] = 1.0
    tile4 = np.zeros((Tpad, L), np.float32)           # replicate kT per head block
    for hh in range(NH):
        tile4[np.arange(Tpad), hh * Tpad + np.arange(Tpad)] = 1.0
    maskk = np.zeros((D, L), np.float32)
    maskv = np.zeros((L, D), np.float32)
    for hh in range(NH):
        maskk[hh * HD:(hh + 1) * HD, hh * Tpad:(hh + 1) * Tpad] = 1.0
        maskv[hh * Tpad:(hh + 1) * Tpad, hh * HD:(hh + 1) * HD] = 1.0
    colmask = np.zeros((1, L), np.float32)
    colvalid = np.zeros((1, L), np.float32)
    for hh in range(NH):
        colmask[0, hh * Tpad + T:(hh + 1) * Tpad] = NEG_INF
        colvalid[0, hh * Tpad:hh * Tpad + T] = 1.0
    return dict(
        scatter=jnp.asarray(scat, jnp.bfloat16),
        tile4=jnp.asarray(tile4, jnp.bfloat16),
        tileT=jnp.asarray(tile4.T, jnp.bfloat16),
        maskk=jnp.asarray(maskk, jnp.float32),
        maskv=jnp.asarray(maskv, jnp.float32),
        colmask=jnp.asarray(colmask, jnp.float32),
        colvalid=jnp.asarray(colvalid, jnp.float32),
    )


def init_params(key, *, cin=3, c_cnn=32, d=32, nh=4, mlp_hidden=128,
                num_tokens=16, num_classes=10, n_pad=128):
    ks = jax.random.split(key, 12)
    s = 0.02
    f32, bf16 = jnp.float32, jnp.bfloat16
    p = {}
    kdim = 9 * cin
    kpad = ((kdim + 7) // 8) * 8                      # 27 -> 32 (aligned K)
    conv_w = s * jax.random.normal(ks[0], (kdim, c_cnn), f32)
    p["conv_w"] = jnp.pad(conv_w, ((0, kpad - kdim), (0, 0))).astype(bf16)
    p["conv_b"] = jnp.zeros((1, c_cnn), f32)
    p["proj_w"] = (s * jax.random.normal(ks[1], (c_cnn, d), f32)).astype(bf16)
    p["proj_b"] = jnp.zeros((1, d), f32)
    p["cls_token"] = s * jax.random.normal(ks[2], (1, d), f32)
    p["pos_embed"] = s * jax.random.normal(ks[3], (num_tokens + 1, d), f32)
    p["ln1_g"] = jnp.ones((1, d), f32); p["ln1_b"] = jnp.zeros((1, d), f32)
    wq = s * jax.random.normal(ks[4], (d, d), f32)
    wk = s * jax.random.normal(ks[5], (d, d), f32)
    wv = s * jax.random.normal(ks[6], (d, d), f32)
    p["wq"] = wq.astype(bf16)
    p["wk_t"] = wk.T.astype(bf16)                     # K transpose folded into weight
    p["wv"] = wv.astype(bf16)
    p["bq"] = jnp.zeros((1, d), f32)
    p["bk_t"] = jnp.zeros((d, 1), f32)                # column-vector bias for k^T
    p["bv"] = jnp.zeros((1, d), f32)
    p["attn_proj_w"] = (s * jax.random.normal(ks[7], (d, d), f32)).astype(bf16)
    p["attn_proj_b"] = jnp.zeros((1, d), f32)
    p["ln2_g"] = jnp.ones((1, d), f32); p["ln2_b"] = jnp.zeros((1, d), f32)
    p["fc1_w"] = (s * jax.random.normal(ks[8], (d, mlp_hidden), f32)).astype(bf16)
    p["fc1_b"] = jnp.zeros((1, mlp_hidden), f32)
    p["fc2_w"] = (s * jax.random.normal(ks[9], (mlp_hidden, d), f32)).astype(bf16)
    p["fc2_b"] = jnp.zeros((1, d), f32)
    p["lnf_g"] = jnp.ones((1, d), f32); p["lnf_b"] = jnp.zeros((1, d), f32)
    cls_w = s * jax.random.normal(ks[10], (d, num_classes), f32)
    p["cls_w"] = jnp.pad(cls_w, ((0, 0), (0, n_pad - num_classes))).astype(bf16)
    p["cls_b"] = jnp.zeros((1, n_pad), f32)
    return p


def hybrid_cnn_vit_forward(x_nchw, params, *, pool_hw=(4, 4), nh=4,
                           num_classes=10, t_pad=32):
    """x_nchw: (B, Cin, H, W) f32 -> logits (B, T, num_classes); T = P+1 incl. cls."""
    x = jnp.transpose(x_nchw, (0, 2, 3, 1)).astype(jnp.float32)     # NCHW -> NHWC

    patches, oh, ow = im2col_3x3_s2_p1(x)                           # (B, S, 27)
    B, S, kdim = patches.shape
    kpad = params["conv_w"].shape[0]
    patches = jnp.pad(patches, ((0, 0), (0, 0), (0, kpad - kdim)))
    patches = patches.reshape(B * S, kpad).astype(jnp.bfloat16)     # fold B into rows

    ph, pw = pool_hw
    P = ph * pw
    T = P + 1
    Tpad = t_pad
    D = params["proj_w"].shape[1]
    HD = D // nh
    Ccnn = params["conv_w"].shape[1]
    MLP = params["fc1_w"].shape[1]
    NPad = params["cls_w"].shape[1]
    L = nh * Tpad

    pool_mat = _pool_matrix(oh, ow, ph, pw)                         # shared (P, S)
    consts = _attn_constants(T, Tpad, D, nh)

    # residual-stream base: row0 = cls+pos0, rows 1..P = pos+proj_b, rest zero.
    base = jnp.zeros((Tpad, D), jnp.float32)
    base = base.at[0:1, :].set(params["cls_token"] + params["pos_embed"][0:1, :])
    base = base.at[1:T, :].set(params["pos_embed"][1:T, :] + params["proj_b"])

    weights = [
        params["conv_w"], params["conv_b"], pool_mat, params["proj_w"],
        consts["scatter"], base,
        params["ln1_g"], params["ln1_b"],
        params["wq"], params["bq"], params["wk_t"], params["bk_t"],
        params["wv"], params["bv"],
        consts["tile4"], consts["maskk"], consts["colmask"], consts["colvalid"],
        consts["tileT"], consts["maskv"],
        params["attn_proj_w"], params["attn_proj_b"],
        params["ln2_g"], params["ln2_b"],
        params["fc1_w"], params["fc1_b"], params["fc2_w"], params["fc2_b"],
        params["lnf_g"], params["lnf_b"], params["cls_w"], params["cls_b"],
    ]

    vmem = pltpu.MemorySpace.VMEM
    in_specs = [pl.BlockSpec((S, kpad), lambda b: (b, 0), memory_space=vmem)]
    for w in weights:
        assert w.ndim == 2
        in_specs.append(pl.BlockSpec(w.shape, lambda b: (0, 0), memory_space=vmem))
    out_spec = pl.BlockSpec((Tpad, NPad), lambda b: (b, 0), memory_space=vmem)

    mm_flops = 2 * (S * kpad * Ccnn + P * S * Ccnn + P * Ccnn * D + Tpad * P * D
                    + 3 * Tpad * D * D + D * Tpad * L + Tpad * D * L
                    + L * Tpad * D + 2 * Tpad * L * D + Tpad * D * D
                    + Tpad * D * MLP + Tpad * MLP * D + Tpad * D * NPad)
    bytes_accessed = (patches.size * patches.dtype.itemsize
                      + sum(int(w.size) * w.dtype.itemsize for w in weights)
                      + B * Tpad * NPad * 4)
    cost = pl.CostEstimate(flops=B * mm_flops,
                           transcendentals=B * (Tpad * L + Tpad * MLP),
                           bytes_accessed=int(bytes_accessed))

    kernel = functools.partial(_fused_kernel, HD=HD)
    out = pl.pallas_call(
        kernel,
        grid=(B,),
        in_specs=in_specs,
        out_specs=out_spec,
        out_shape=jax.ShapeDtypeStruct((B * Tpad, NPad), jnp.float32),
        compiler_params=pltpu.CompilerParams(dimension_semantics=("parallel",)),
        cost_estimate=cost,
    )(patches, *weights)

    logits = out.reshape(B, Tpad, NPad)[:, :T, :num_classes]
    return logits


# -----------------------------------------------------------------------------
if __name__ == "__main__":
    key = jax.random.PRNGKey(0)
    kx, kp = jax.random.split(key)

    B, Cin, H, W = 2, 3, 16, 16
    NUM_CLASSES = 10
    x = jax.random.normal(kx, (B, Cin, H, W), jnp.float32)          # NCHW like PyTorch

    params = init_params(kp, cin=Cin, c_cnn=32, d=32, nh=4, mlp_hidden=128,
                         num_tokens=16, num_classes=NUM_CLASSES)

    fwd = jax.jit(functools.partial(hybrid_cnn_vit_forward,
                                    pool_hw=(4, 4), nh=4, num_classes=NUM_CLASSES))
    logits = fwd(x, params)
    logits = jax.block_until_ready(logits)

    assert logits.shape == (B, 17, NUM_CLASSES), logits.shape
    assert bool(jnp.all(jnp.isfinite(logits)))
    print("KERNEL_OK")
</pallas_src>

<mosaic_0001>
module attributes {stable_mosaic.version = 11 : i64} {
  func.func @_fused_kernel(%arg0: i32, %arg1: memref<64x32xbf16, #tpu.memory_space<vmem>>, %arg2: memref<32x32xbf16, #tpu.memory_space<vmem>>, %arg3: memref<1x32xf32, #tpu.memory_space<vmem>>, %arg4: memref<16x64xbf16, #tpu.memory_space<vmem>>, %arg5: memref<32x32xbf16, #tpu.memory_space<vmem>>, %arg6: memref<32x16xbf16, #tpu.memory_space<vmem>>, %arg7: memref<32x32xf32, #tpu.memory_space<vmem>>, %arg8: memref<1x32xf32, #tpu.memory_space<vmem>>, %arg9: memref<1x32xf32, #tpu.memory_space<vmem>>, %arg10: memref<32x32xbf16, #tpu.memory_space<vmem>>, %arg11: memref<1x32xf32, #tpu.memory_space<vmem>>, %arg12: memref<32x32xbf16, #tpu.memory_space<vmem>>, %arg13: memref<32x1xf32, #tpu.memory_space<vmem>>, %arg14: memref<32x32xbf16, #tpu.memory_space<vmem>>, %arg15: memref<1x32xf32, #tpu.memory_space<vmem>>, %arg16: memref<32x128xbf16, #tpu.memory_space<vmem>>, %arg17: memref<32x128xf32, #tpu.memory_space<vmem>>, %arg18: memref<1x128xf32, #tpu.memory_space<vmem>>, %arg19: memref<1x128xf32, #tpu.memory_space<vmem>>, %arg20: memref<128x32xbf16, #tpu.memory_space<vmem>>, %arg21: memref<128x32xf32, #tpu.memory_space<vmem>>, %arg22: memref<32x32xbf16, #tpu.memory_space<vmem>>, %arg23: memref<1x32xf32, #tpu.memory_space<vmem>>, %arg24: memref<1x32xf32, #tpu.memory_space<vmem>>, %arg25: memref<1x32xf32, #tpu.memory_space<vmem>>, %arg26: memref<32x128xbf16, #tpu.memory_space<vmem>>, %arg27: memref<1x128xf32, #tpu.memory_space<vmem>>, %arg28: memref<128x32xbf16, #tpu.memory_space<vmem>>, %arg29: memref<1x32xf32, #tpu.memory_space<vmem>>, %arg30: memref<1x32xf32, #tpu.memory_space<vmem>>, %arg31: memref<1x32xf32, #tpu.memory_space<vmem>>, %arg32: memref<32x128xbf16, #tpu.memory_space<vmem>>, %arg33: memref<1x128xf32, #tpu.memory_space<vmem>>, %arg34: memref<32x128xf32, #tpu.memory_space<vmem>>) attributes {dimension_semantics = [#tpu.dimension_semantics<parallel>], iteration_bounds = array<i64: 2>, scalar_prefetch = 0 : i64, scratch_operands = 0 : i64, tpu.core_type = #tpu.core_type<tc>, window_params = [{transform_indices = @transform_0, window_bounds = array<i64: 64, 32>}, {pipeline_mode = #tpu.pipeline_mode<synchronous>, transform_indices = @transform_1, window_bounds = array<i64: 32, 32>}, {pipeline_mode = #tpu.pipeline_mode<synchronous>, transform_indices = @transform_2, window_bounds = array<i64: 1, 32>}, {pipeline_mode = #tpu.pipeline_mode<synchronous>, transform_indices = @transform_3, window_bounds = array<i64: 16, 64>}, {pipeline_mode = #tpu.pipeline_mode<synchronous>, transform_indices = @transform_4, window_bounds = array<i64: 32, 32>}, {pipeline_mode = #tpu.pipeline_mode<synchronous>, transform_indices = @transform_5, window_bounds = array<i64: 32, 16>}, {pipeline_mode = #tpu.pipeline_mode<synchronous>, transform_indices = @transform_6, window_bounds = array<i64: 32, 32>}, {pipeline_mode = #tpu.pipeline_mode<synchronous>, transform_indices = @transform_7, window_bounds = array<i64: 1, 32>}, {pipeline_mode = #tpu.pipeline_mode<synchronous>, transform_indices = @transform_8, window_bounds = array<i64: 1, 32>}, {pipeline_mode = #tpu.pipeline_mode<synchronous>, transform_indices = @transform_9, window_bounds = array<i64: 32, 32>}, {pipeline_mode = #tpu.pipeline_mode<synchronous>, transform_indices = @transform_10, window_bounds = array<i64: 1, 32>}, {pipeline_mode = #tpu.pipeline_mode<synchronous>, transform_indices = @transform_11, window_bounds = array<i64: 32, 32>}, {pipeline_mode = #tpu.pipeline_mode<synchronous>, transform_indices = @transform_12, window_bounds = array<i64: 32, 1>}, {pipeline_mode = #tpu.pipeline_mode<synchronous>, transform_indices = @transform_13, window_bounds = array<i64: 32, 32>}, {pipeline_mode = #tpu.pipeline_mode<synchronous>, transform_indices = @transform_14, window_bounds = array<i64: 1, 32>}, {pipeline_mode = #tpu.pipeline_mode<synchronous>, transform_indices = @transform_15, window_bounds = array<i64: 32, 128>}, {pipeline_mode = #tpu.pipeline_mode<synchronous>, transform_indices = @transform_16, window_bounds = array<i64: 32, 128>}, {pipeline_mode = #tpu.pipeline_mode<synchronous>, transform_indices = @transform_17, window_bounds = array<i64: 1, 128>}, {pipeline_mode = #tpu.pipeline_mode<synchronous>, transform_indices = @transform_18, window_bounds = array<i64: 1, 128>}, {pipeline_mode = #tpu.pipeline_mode<synchronous>, transform_indices = @transform_19, window_bounds = array<i64: 128, 32>}, {pipeline_mode = #tpu.pipeline_mode<synchronous>, transform_indices = @transform_20, window_bounds = array<i64: 128, 32>}, {pipeline_mode = #tpu.pipeline_mode<synchronous>, transform_indices = @transform_21, window_bounds = array<i64: 32, 32>}, {pipeline_mode = #tpu.pipeline_mode<synchronous>, transform_indices = @transform_22, window_bounds = array<i64: 1, 32>}, {pipeline_mode = #tpu.pipeline_mode<synchronous>, transform_indices = @transform_23, window_bounds = array<i64: 1, 32>}, {pipeline_mode = #tpu.pipeline_mode<synchronous>, transform_indices = @transform_24, window_bounds = array<i64: 1, 32>}, {pipeline_mode = #tpu.pipeline_mode<synchronous>, transform_indices = @transform_25, window_bounds = array<i64: 32, 128>}, {pipeline_mode = #tpu.pipeline_mode<synchronous>, transform_indices = @transform_26, window_bounds = array<i64: 1, 128>}, {pipeline_mode = #tpu.pipeline_mode<synchronous>, transform_indices = @transform_27, window_bounds = array<i64: 128, 32>}, {pipeline_mode = #tpu.pipeline_mode<synchronous>, transform_indices = @transform_28, window_bounds = array<i64: 1, 32>}, {pipeline_mode = #tpu.pipeline_mode<synchronous>, transform_indices = @transform_29, window_bounds = array<i64: 1, 32>}, {pipeline_mode = #tpu.pipeline_mode<synchronous>, transform_indices = @transform_30, window_bounds = array<i64: 1, 32>}, {pipeline_mode = #tpu.pipeline_mode<synchronous>, transform_indices = @transform_31, window_bounds = array<i64: 32, 128>}, {pipeline_mode = #tpu.pipeline_mode<synchronous>, transform_indices = @transform_32, window_bounds = array<i64: 1, 128>}, {transform_indices = @transform_33, window_bounds = array<i64: 32, 128>}]} {
    %c0 = arith.constant 0 : index
    %c0_0 = arith.constant 0 : index
    %0 = vector.load %arg1[%c0, %c0_0] : memref<64x32xbf16, #tpu.memory_space<vmem>>, vector<64x32xbf16>
    %c0_1 = arith.constant 0 : index
    %c0_2 = arith.constant 0 : index
    %1 = vector.load %arg2[%c0_1, %c0_2] : memref<32x32xbf16, #tpu.memory_space<vmem>>, vector<32x32xbf16>
    %cst = arith.constant dense<0.000000e+00> : vector<64x32xf32>
    %2 = tpu.matmul %0, %1, %cst {dimension_numbers = #tpu.dot_dimension_numbers<[1], [0], [0], [1], [0, 0, 1, 1], [], []>} : vector<64x32xbf16>, vector<32x32xbf16>, vector<64x32xf32> -> vector<64x32xf32>
    %c0_3 = arith.constant 0 : index
    %c0_4 = arith.constant 0 : index
    %3 = vector.load %arg3[%c0_3, %c0_4] : memref<1x32xf32, #tpu.memory_space<vmem>>, vector<1x32xf32>
    %4 = vector.broadcast %3 : vector<1x32xf32> to vector<64x32xf32>
    %5 = arith.addf %2, %4 : vector<64x32xf32>
    %cst_5 = arith.constant 0.000000e+00 : f32
    %6 = vector.broadcast %cst_5 : f32 to vector<64x32xf32>
    %7 = arith.maximumf %5, %6 : vector<64x32xf32>
    %c0_6 = arith.constant 0 : index
    %c0_7 = arith.constant 0 : index
    %8 = vector.load %arg4[%c0_6, %c0_7] : memref<16x64xbf16, #tpu.memory_space<vmem>>, vector<16x64xbf16>
    %9 = arith.truncf %7 : vector<64x32xf32> to vector<64x32xbf16>
    %cst_8 = arith.constant dense<0.000000e+00> : vector<16x32xf32>
    %10 = tpu.matmul %8, %9, %cst_8 {dimension_numbers = #tpu.dot_dimension_numbers<[1], [0], [0], [1], [0, 0, 1, 1], [], []>} : vector<16x64xbf16>, vector<64x32xbf16>, vector<16x32xf32> -> vector<16x32xf32>
    %c0_9 = arith.constant 0 : index
    %c0_10 = arith.constant 0 : index
    %11 = vector.load %arg5[%c0_9, %c0_10] : memref<32x32xbf16, #tpu.memory_space<vmem>>, vector<32x32xbf16>
    %12 = arith.truncf %10 : vector<16x32xf32> to vector<16x32xbf16>
    %cst_11 = arith.constant dense<0.000000e+00> : vector<16x32xf32>
    %13 = tpu.matmul %12, %11, %cst_11 {dimension_numbers = #tpu.dot_dimension_numbers<[1], [0], [0], [1], [0, 0, 1, 1], [], []>} : vector<16x32xbf16>, vector<32x32xbf16>, vector<16x32xf32> -> vector<16x32xf32>
    %c0_12 = arith.constant 0 : index
    %c0_13 = arith.constant 0 : index
    %14 = vector.load %arg6[%c0_12, %c0_13] : memref<32x16xbf16, #tpu.memory_space<vmem>>, vector<32x16xbf16>
    %15 = arith.truncf %13 : vector<16x32xf32> to vector<16x32xbf16>
    %cst_14 = arith.constant dense<0.000000e+00> : vector<32x32xf32>
    %16 = tpu.matmul %14, %15, %cst_14 {dimension_numbers = #tpu.dot_dimension_numbers<[1], [0], [0], [1], [0, 0, 1, 1], [], []>} : vector<32x16xbf16>, vector<16x32xbf16>, vector<32x32xf32> -> vector<32x32xf32>
    %c0_15 = arith.constant 0 : index
    %c0_16 = arith.constant 0 : index
    %17 = vector.load %arg7[%c0_15, %c0_16] : memref<32x32xf32, #tpu.memory_space<vmem>>, vector<32x32xf32>
    %18 = arith.addf %16, %17 : vector<32x32xf32>
    %c0_17 = arith.constant 0 : index
    %c0_18 = arith.constant 0 : index
    %19 = vector.load %arg8[%c0_17, %c0_18] : memref<1x32xf32, #tpu.memory_space<vmem>>, vector<1x32xf32>
    %c0_19 = arith.constant 0 : index
    %c0_20 = arith.constant 0 : index
    %20 = vector.load %arg9[%c0_19, %c0_20] : memref<1x32xf32, #tpu.memory_space<vmem>>, vector<1x32xf32>
    %cst_21 = arith.constant dense<0.000000e+00> : vector<32xf32>
    %21 = vector.multi_reduction <add>, %18, %cst_21 [1] : vector<32x32xf32> to vector<32xf32>
    %22 = vector.shape_cast %21 : vector<32xf32> to vector<32x1xf32>
    %cst_22 = arith.constant 3.200000e+01 : f32
    %23 = vector.broadcast %cst_22 : f32 to vector<32x1xf32>
    %24 = arith.divf %22, %23 : vector<32x1xf32>
    %25 = vector.broadcast %24 : vector<32x1xf32> to vector<32x32xf32>
    %26 = arith.subf %18, %25 : vector<32x32xf32>
    %27 = arith.mulf %26, %26 : vector<32x32xf32>
    %cst_23 = arith.constant dense<0.000000e+00> : vector<32xf32>
    %28 = vector.multi_reduction <add>, %27, %cst_23 [1] : vector<32x32xf32> to vector<32xf32>
    %29 = vector.shape_cast %28 : vector<32xf32> to vector<32x1xf32>
    %cst_24 = arith.constant 3.200000e+01 : f32
    %30 = vector.broadcast %cst_24 : f32 to vector<32x1xf32>
    %31 = arith.divf %29, %30 : vector<32x1xf32>
    %cst_25 = arith.constant 9.99999974E-6 : f32
    %32 = vector.broadcast %cst_25 : f32 to vector<32x1xf32>
    %33 = arith.addf %31, %32 : vector<32x1xf32>
    %34 = math.rsqrt %33 : vector<32x1xf32>
    %35 = vector.broadcast %34 : vector<32x1xf32> to vector<32x32xf32>
    %36 = arith.mulf %26, %35 : vector<32x32xf32>
    %37 = vector.broadcast %19 : vector<1x32xf32> to vector<32x32xf32>
    %38 = arith.mulf %36, %37 : vector<32x32xf32>
    %39 = vector.broadcast %20 : vector<1x32xf32> to vector<32x32xf32>
    %40 = arith.addf %38, %39 : vector<32x32xf32>
    %41 = arith.truncf %40 : vector<32x32xf32> to vector<32x32xbf16>
    %c0_26 = arith.constant 0 : index
    %c0_27 = arith.constant 0 : index
    %42 = vector.load %arg10[%c0_26, %c0_27] : memref<32x32xbf16, #tpu.memory_space<vmem>>, vector<32x32xbf16>
    %cst_28 = arith.constant dense<0.000000e+00> : vector<32x32xf32>
    %43 = tpu.matmul %41, %42, %cst_28 {dimension_numbers = #tpu.dot_dimension_numbers<[1], [0], [0], [1], [0, 0, 1, 1], [], []>} : vector<32x32xbf16>, vector<32x32xbf16>, vector<32x32xf32> -> vector<32x32xf32>
    %c0_29 = arith.constant 0 : index
    %c0_30 = arith.constant 0 : index
    %44 = vector.load %arg11[%c0_29, %c0_30] : memref<1x32xf32, #tpu.memory_space<vmem>>, vector<1x32xf32>
    %45 = vector.broadcast %44 : vector<1x32xf32> to vector<32x32xf32>
    %46 = arith.addf %43, %45 : vector<32x32xf32>
    %c0_31 = arith.constant 0 : index
    %c0_32 = arith.constant 0 : index
    %47 = vector.load %arg12[%c0_31, %c0_32] : memref<32x32xbf16, #tpu.memory_space<vmem>>, vector<32x32xbf16>
    %cst_33 = arith.constant dense<0.000000e+00> : vector<32x32xf32>
    %48 = tpu.matmul %47, %41, %cst_33 {dimension_numbers = #tpu.dot_dimension_numbers<[1], [1], [0], [0], [0, 0, 1, 0], [], []>} : vector<32x32xbf16>, vector<32x32xbf16>, vector<32x32xf32> -> vector<32x32xf32>
    %c0_34 = arith.constant 0 : index
    %c0_35 = arith.constant 0 : index
    %49 = vector.load %arg13[%c0_34, %c0_35] : memref<32x1xf32, #tpu.memory_space<vmem>>, vector<32x1xf32>
    %50 = vector.broadcast %49 : vector<32x1xf32> to vector<32x32xf32>
    %51 = arith.addf %48, %50 : vector<32x32xf32>
    %c0_36 = arith.constant 0 : index
    %c0_37 = arith.constant 0 : index
    %52 = vector.load %arg14[%c0_36, %c0_37] : memref<32x32xbf16, #tpu.memory_space<vmem>>, vector<32x32xbf16>
    %cst_38 = arith.constant dense<0.000000e+00> : vector<32x32xf32>
    %53 = tpu.matmul %41, %52, %cst_38 {dimension_numbers = #tpu.dot_dimension_numbers<[1], [0], [0], [1], [0, 0, 1, 1], [], []>} : vector<32x32xbf16>, vector<32x32xbf16>, vector<32x32xf32> -> vector<32x32xf32>
    %c0_39 = arith.constant 0 : index
    %c0_40 = arith.constant 0 : index
    %54 = vector.load %arg15[%c0_39, %c0_40] : memref<1x32xf32, #tpu.memory_space<vmem>>, vector<1x32xf32>
    %55 = vector.broadcast %54 : vector<1x32xf32> to vector<32x32xf32>
    %56 = arith.addf %53, %55 : vector<32x32xf32>
    %c0_41 = arith.constant 0 : index
    %c0_42 = arith.constant 0 : index
    %57 = vector.load %arg16[%c0_41, %c0_42] : memref<32x128xbf16, #tpu.memory_space<vmem>>, vector<32x128xbf16>
    %58 = arith.truncf %51 : vector<32x32xf32> to vector<32x32xbf16>
    %cst_43 = arith.constant dense<0.000000e+00> : vector<32x128xf32>
    %59 = tpu.matmul %58, %57, %cst_43 {dimension_numbers = #tpu.dot_dimension_numbers<[1], [0], [0], [1], [0, 0, 1, 1], [], []>} : vector<32x32xbf16>, vector<32x128xbf16>, vector<32x128xf32> -> vector<32x128xf32>
    %c0_44 = arith.constant 0 : index
    %c0_45 = arith.constant 0 : index
    %60 = vector.load %arg17[%c0_44, %c0_45] : memref<32x128xf32, #tpu.memory_space<vmem>>, vector<32x128xf32>
    %61 = arith.mulf %59, %60 : vector<32x128xf32>
    %62 = arith.truncf %46 : vector<32x32xf32> to vector<32x32xbf16>
    %63 = arith.truncf %61 : vector<32x128xf32> to vector<32x128xbf16>
    %cst_46 = arith.constant dense<0.000000e+00> : vector<32x128xf32>
    %64 = tpu.matmul %62, %63, %cst_46 {dimension_numbers = #tpu.dot_dimension_numbers<[1], [0], [0], [1], [0, 0, 1, 1], [], []>} : vector<32x32xbf16>, vector<32x128xbf16>, vector<32x128xf32> -> vector<32x128xf32>
    %cst_47 = arith.constant 0.353553385 : f32
    %65 = vector.broadcast %cst_47 : f32 to vector<32x128xf32>
    %66 = arith.mulf %64, %65 : vector<32x128xf32>
    %c0_48 = arith.constant 0 : index
    %c0_49 = arith.constant 0 : index
    %67 = vector.load %arg18[%c0_48, %c0_49] : memref<1x128xf32, #tpu.memory_space<vmem>>, vector<1x128xf32>
    %68 = vector.broadcast %67 : vector<1x128xf32> to vector<32x128xf32>
    %69 = arith.addf %66, %68 : vector<32x128xf32>
    %cst_50 = arith.constant dense<0xFF800000> : vector<32xf32>
    %70 = vector.multi_reduction <maximumf>, %69, %cst_50 [1] : vector<32x128xf32> to vector<32xf32>
    %71 = vector.shape_cast %70 : vector<32xf32> to vector<32x1xf32>
    %72 = vector.broadcast %71 : vector<32x1xf32> to vector<32x128xf32>
    %73 = arith.subf %69, %72 : vector<32x128xf32>
    %cst_51 = arith.constant -3.000000e+01 : f32
    %74 = vector.broadcast %cst_51 : f32 to vector<32x128xf32>
    %75 = arith.maximumf %73, %74 : vector<32x128xf32>
    %76 = math.exp %75 : vector<32x128xf32>
    %c0_52 = arith.constant 0 : index
    %c0_53 = arith.constant 0 : index
    %77 = vector.load %arg19[%c0_52, %c0_53] : memref<1x128xf32, #tpu.memory_space<vmem>>, vector<1x128xf32>
    %78 = vector.broadcast %77 : vector<1x128xf32> to vector<32x128xf32>
    %79 = arith.mulf %76, %78 : vector<32x128xf32>
    %80 = arith.truncf %79 : vector<32x128xf32> to vector<32x128xbf16>
    %c0_54 = arith.constant 0 : index
    %c0_55 = arith.constant 0 : index
    %81 = vector.load %arg20[%c0_54, %c0_55] : memref<128x32xbf16, #tpu.memory_space<vmem>>, vector<128x32xbf16>
    %82 = arith.truncf %56 : vector<32x32xf32> to vector<32x32xbf16>
    %cst_56 = arith.constant dense<0.000000e+00> : vector<128x32xf32>
    %83 = tpu.matmul %81, %82, %cst_56 {dimension_numbers = #tpu.dot_dimension_numbers<[1], [0], [0], [1], [0, 0, 1, 1], [], []>} : vector<128x32xbf16>, vector<32x32xbf16>, vector<128x32xf32> -> vector<128x32xf32>
    %c0_57 = arith.constant 0 : index
    %c0_58 = arith.constant 0 : index
    %84 = vector.load %arg21[%c0_57, %c0_58] : memref<128x32xf32, #tpu.memory_space<vmem>>, vector<128x32xf32>
    %85 = arith.mulf %83, %84 : vector<128x32xf32>
    %86 = arith.truncf %85 : vector<128x32xf32> to vector<128x32xbf16>
    %cst_59 = arith.constant dense<0.000000e+00> : vector<32x32xf32>
    %87 = tpu.matmul %80, %86, %cst_59 {dimension_numbers = #tpu.dot_dimension_numbers<[1], [0], [0], [1], [0, 0, 1, 1], [], []>} : vector<32x128xbf16>, vector<128x32xbf16>, vector<32x32xf32> -> vector<32x32xf32>
    %c0_60 = arith.constant 0 : index
    %c0_61 = arith.constant 0 : index
    %88 = vector.load %arg21[%c0_60, %c0_61] : memref<128x32xf32, #tpu.memory_space<vmem>>, vector<128x32xf32>
    %89 = arith.truncf %88 : vector<128x32xf32> to vector<128x32xbf16>
    %cst_62 = arith.constant dense<0.000000e+00> : vector<32x32xf32>
    %90 = tpu.matmul %80, %89, %cst_62 {dimension_numbers = #tpu.dot_dimension_numbers<[1], [0], [0], [1], [0, 0, 1, 1], [], []>} : vector<32x128xbf16>, vector<128x32xbf16>, vector<32x32xf32> -> vector<32x32xf32>
    %91 = tpu.reciprocal %90 {approx = true} : vector<32x32xf32> -> vector<32x32xf32>
    %92 = arith.mulf %87, %91 : vector<32x32xf32>
    %c0_63 = arith.constant 0 : index
    %c0_64 = arith.constant 0 : index
    %93 = vector.load %arg22[%c0_63, %c0_64] : memref<32x32xbf16, #tpu.memory_space<vmem>>, vector<32x32xbf16>
    %94 = arith.truncf %92 : vector<32x32xf32> to vector<32x32xbf16>
    %cst_65 = arith.constant dense<0.000000e+00> : vector<32x32xf32>
    %95 = tpu.matmul %94, %93, %cst_65 {dimension_numbers = #tpu.dot_dimension_numbers<[1], [0], [0], [1], [0, 0, 1, 1], [], []>} : vector<32x32xbf16>, vector<32x32xbf16>, vector<32x32xf32> -> vector<32x32xf32>
    %96 = arith.addf %18, %95 : vector<32x32xf32>
    %c0_66 = arith.constant 0 : index
    %c0_67 = arith.constant 0 : index
    %97 = vector.load %arg23[%c0_66, %c0_67] : memref<1x32xf32, #tpu.memory_space<vmem>>, vector<1x32xf32>
    %98 = vector.broadcast %97 : vector<1x32xf32> to vector<32x32xf32>
    %99 = arith.addf %96, %98 : vector<32x32xf32>
    %c0_68 = arith.constant 0 : index
    %c0_69 = arith.constant 0 : index
    %100 = vector.load %arg24[%c0_68, %c0_69] : memref<1x32xf32, #tpu.memory_space<vmem>>, vector<1x32xf32>
    %c0_70 = arith.constant 0 : index
    %c0_71 = arith.constant 0 : index
    %101 = vector.load %arg25[%c0_70, %c0_71] : memref<1x32xf32, #tpu.memory_space<vmem>>, vector<1x32xf32>
    %cst_72 = arith.constant dense<0.000000e+00> : vector<32xf32>
    %102 = vector.multi_reduction <add>, %99, %cst_72 [1] : vector<32x32xf32> to vector<32xf32>
    %103 = vector.shape_cast %102 : vector<32xf32> to vector<32x1xf32>
    %cst_73 = arith.constant 3.200000e+01 : f32
    %104 = vector.broadcast %cst_73 : f32 to vector<32x1xf32>
    %105 = arith.divf %103, %104 : vector<32x1xf32>
    %106 = vector.broadcast %105 : vector<32x1xf32> to vector<32x32xf32>
    %107 = arith.subf %99, %106 : vector<32x32xf32>
    %108 = arith.mulf %107, %107 : vector<32x32xf32>
    %cst_74 = arith.constant dense<0.000000e+00> : vector<32xf32>
    %109 = vector.multi_reduction <add>, %108, %cst_74 [1] : vector<32x32xf32> to vector<32xf32>
    %110 = vector.shape_cast %109 : vector<32xf32> to vector<32x1xf32>
    %cst_75 = arith.constant 3.200000e+01 : f32
    %111 = vector.broadcast %cst_75 : f32 to vector<32x1xf32>
    %112 = arith.divf %110, %111 : vector<32x1xf32>
    %cst_76 = arith.constant 9.99999974E-6 : f32
    %113 = vector.broadcast %cst_76 : f32 to vector<32x1xf32>
    %114 = arith.addf %112, %113 : vector<32x1xf32>
    %115 = math.rsqrt %114 : vector<32x1xf32>
    %116 = vector.broadcast %115 : vector<32x1xf32> to vector<32x32xf32>
    %117 = arith.mulf %107, %116 : vector<32x32xf32>
    %118 = vector.broadcast %100 : vector<1x32xf32> to vector<32x32xf32>
    %119 = arith.mulf %117, %118 : vector<32x32xf32>
    %120 = vector.broadcast %101 : vector<1x32xf32> to vector<32x32xf32>
    %121 = arith.addf %119, %120 : vector<32x32xf32>
    %c0_77 = arith.constant 0 : index
    %c0_78 = arith.constant 0 : index
    %122 = vector.load %arg26[%c0_77, %c0_78] : memref<32x128xbf16, #tpu.memory_space<vmem>>, vector<32x128xbf16>
    %123 = arith.truncf %121 : vector<32x32xf32> to vector<32x32xbf16>
    %cst_79 = arith.constant dense<0.000000e+00> : vector<32x128xf32>
    %124 = tpu.matmul %123, %122, %cst_79 {dimension_numbers = #tpu.dot_dimension_numbers<[1], [0], [0], [1], [0, 0, 1, 1], [], []>} : vector<32x32xbf16>, vector<32x128xbf16>, vector<32x128xf32> -> vector<32x128xf32>
    %c0_80 = arith.constant 0 : index
    %c0_81 = arith.constant 0 : index
    %125 = vector.load %arg27[%c0_80, %c0_81] : memref<1x128xf32, #tpu.memory_space<vmem>>, vector<1x128xf32>
    %126 = vector.broadcast %125 : vector<1x128xf32> to vector<32x128xf32>
    %127 = arith.addf %124, %126 : vector<32x128xf32>
    %cst_82 = arith.constant 5.000000e-01 : f32
    %128 = vector.broadcast %cst_82 : f32 to vector<32x128xf32>
    %129 = arith.mulf %128, %127 : vector<32x128xf32>
    %cst_83 = arith.constant 4.471500e-02 : f32
    %130 = vector.broadcast %cst_83 : f32 to vector<32x128xf32>
    %131 = arith.mulf %130, %127 : vector<32x128xf32>
    %132 = arith.mulf %131, %127 : vector<32x128xf32>
    %133 = arith.mulf %132, %127 : vector<32x128xf32>
    %134 = arith.addf %127, %133 : vector<32x128xf32>
    %cst_84 = arith.constant 0.797884583 : f32
    %135 = vector.broadcast %cst_84 : f32 to vector<32x128xf32>
    %136 = arith.mulf %135, %134 : vector<32x128xf32>
    %137 = math.tanh %136 : vector<32x128xf32>
    %cst_85 = arith.constant 1.000000e+00 : f32
    %138 = vector.broadcast %cst_85 : f32 to vector<32x128xf32>
    %139 = arith.addf %138, %137 : vector<32x128xf32>
    %140 = arith.mulf %129, %139 : vector<32x128xf32>
    %c0_86 = arith.constant 0 : index
    %c0_87 = arith.constant 0 : index
    %141 = vector.load %arg28[%c0_86, %c0_87] : memref<128x32xbf16, #tpu.memory_space<vmem>>, vector<128x32xbf16>
    %142 = arith.truncf %140 : vector<32x128xf32> to vector<32x128xbf16>
    %cst_88 = arith.constant dense<0.000000e+00> : vector<32x32xf32>
    %143 = tpu.matmul %142, %141, %cst_88 {dimension_numbers = #tpu.dot_dimension_numbers<[1], [0], [0], [1], [0, 0, 1, 1], [], []>} : vector<32x128xbf16>, vector<128x32xbf16>, vector<32x32xf32> -> vector<32x32xf32>
    %144 = arith.addf %99, %143 : vector<32x32xf32>
    %c0_89 = arith.constant 0 : index
    %c0_90 = arith.constant 0 : index
    %145 = vector.load %arg29[%c0_89, %c0_90] : memref<1x32xf32, #tpu.memory_space<vmem>>, vector<1x32xf32>
    %146 = vector.broadcast %145 : vector<1x32xf32> to vector<32x32xf32>
    %147 = arith.addf %144, %146 : vector<32x32xf32>
    %c0_91 = arith.constant 0 : index
    %c0_92 = arith.constant 0 : index
    %148 = vector.load %arg30[%c0_91, %c0_92] : memref<1x32xf32, #tpu.memory_space<vmem>>, vector<1x32xf32>
    %c0_93 = arith.constant 0 : index
    %c0_94 = arith.constant 0 : index
    %149 = vector.load %arg31[%c0_93, %c0_94] : memref<1x32xf32, #tpu.memory_space<vmem>>, vector<1x32xf32>
    %cst_95 = arith.constant dense<0.000000e+00> : vector<32xf32>
    %150 = vector.multi_reduction <add>, %147, %cst_95 [1] : vector<32x32xf32> to vector<32xf32>
    %151 = vector.shape_cast %150 : vector<32xf32> to vector<32x1xf32>
    %cst_96 = arith.constant 3.200000e+01 : f32
    %152 = vector.broadcast %cst_96 : f32 to vector<32x1xf32>
    %153 = arith.divf %151, %152 : vector<32x1xf32>
    %154 = vector.broadcast %153 : vector<32x1xf32> to vector<32x32xf32>
    %155 = arith.subf %147, %154 : vector<32x32xf32>
    %156 = arith.mulf %155, %155 : vector<32x32xf32>
    %cst_97 = arith.constant dense<0.000000e+00> : vector<32xf32>
    %157 = vector.multi_reduction <add>, %156, %cst_97 [1] : vector<32x32xf32> to vector<32xf32>
    %158 = vector.shape_cast %157 : vector<32xf32> to vector<32x1xf32>
    %cst_98 = arith.constant 3.200000e+01 : f32
    %159 = vector.broadcast %cst_98 : f32 to vector<32x1xf32>
    %160 = arith.divf %158, %159 : vector<32x1xf32>
    %cst_99 = arith.constant 9.99999974E-6 : f32
    %161 = vector.broadcast %cst_99 : f32 to vector<32x1xf32>
    %162 = arith.addf %160, %161 : vector<32x1xf32>
    %163 = math.rsqrt %162 : vector<32x1xf32>
    %164 = vector.broadcast %163 : vector<32x1xf32> to vector<32x32xf32>
    %165 = arith.mulf %155, %164 : vector<32x32xf32>
    %166 = vector.broadcast %148 : vector<1x32xf32> to vector<32x32xf32>
    %167 = arith.mulf %165, %166 : vector<32x32xf32>
    %168 = vector.broadcast %149 : vector<1x32xf32> to vector<32x32xf32>
    %169 = arith.addf %167, %168 : vector<32x32xf32>
    %c0_100 = arith.constant 0 : index
    %c0_101 = arith.constant 0 : index
    %170 = vector.load %arg32[%c0_100, %c0_101] : memref<32x128xbf16, #tpu.memory_space<vmem>>, vector<32x128xbf16>
    %171 = arith.truncf %169 : vector<32x32xf32> to vector<32x32xbf16>
    %cst_102 = arith.constant dense<0.000000e+00> : vector<32x128xf32>
    %172 = tpu.matmul %171, %170, %cst_102 {dimension_numbers = #tpu.dot_dimension_numbers<[1], [0], [0], [1], [0, 0, 1, 1], [], []>} : vector<32x32xbf16>, vector<32x128xbf16>, vector<32x128xf32> -> vector<32x128xf32>
    %c0_103 = arith.constant 0 : index
    %c0_104 = arith.constant 0 : index
    %173 = vector.load %arg33[%c0_103, %c0_104] : memref<1x128xf32, #tpu.memory_space<vmem>>, vector<1x128xf32>
    %174 = vector.broadcast %173 : vector<1x128xf32> to vector<32x128xf32>
    %175 = arith.addf %172, %174 : vector<32x128xf32>
    %c0_105 = arith.constant 0 : index
    %c0_106 = arith.constant 0 : index
    %176 = vector.load %arg34[%c0_105, %c0_106] : memref<32x128xf32, #tpu.memory_space<vmem>>, vector<32x128xf32>
    tpu.vector_store %arg34[%c0_105, %c0_106], %175 {strides = array<i32>} : memref<32x128xf32, #tpu.memory_space<vmem>>, vector<32x128xf32>,
    return
  }
  func.func @transform_0(%arg0: i32) -> (i32, i32) {
    %c0_i32 = arith.constant 0 : i32
    %c0_i32_0 = arith.constant 0 : i32
    return %arg0, %c0_i32 : i32, i32
  }
  func.func @transform_1(%arg0: i32) -> (i32, i32) {
    %c0_i32 = arith.constant 0 : i32
    %c0_i32_0 = arith.constant 0 : i32
    %c0_i32_1 = arith.constant 0 : i32
    return %c0_i32, %c0_i32_0 : i32, i32
  }
  func.func @transform_2(%arg0: i32) -> (i32, i32) {
    %c0_i32 = arith.constant 0 : i32
    %c0_i32_0 = arith.constant 0 : i32
    %c0_i32_1 = arith.constant 0 : i32
    return %c0_i32, %c0_i32_0 : i32, i32
  }
  func.func @transform_3(%arg0: i32) -> (i32, i32) {
    %c0_i32 = arith.constant 0 : i32
    %c0_i32_0 = arith.constant 0 : i32
    %c0_i32_1 = arith.constant 0 : i32
    return %c0_i32, %c0_i32_0 : i32, i32
  }
  func.func @transform_4(%arg0: i32) -> (i32, i32) {
    %c0_i32 = arith.constant 0 : i32
    %c0_i32_0 = arith.constant 0 : i32
    %c0_i32_1 = arith.constant 0 : i32
    return %c0_i32, %c0_i32_0 : i32, i32
  }
  func.func @transform_5(%arg0: i32) -> (i32, i32) {
    %c0_i32 = arith.constant 0 : i32
    %c0_i32_0 = arith.constant 0 : i32
    %c0_i32_1 = arith.constant 0 : i32
    return %c0_i32, %c0_i32_0 : i32, i32
  }
  func.func @transform_6(%arg0: i32) -> (i32, i32) {
    %c0_i32 = arith.constant 0 : i32
    %c0_i32_0 = arith.constant 0 : i32
    %c0_i32_1 = arith.constant 0 : i32
    return %c0_i32, %c0_i32_0 : i32, i32
  }
  func.func @transform_7(%arg0: i32) -> (i32, i32) {
    %c0_i32 = arith.constant 0 : i32
    %c0_i32_0 = arith.constant 0 : i32
    %c0_i32_1 = arith.constant 0 : i32
    return %c0_i32, %c0_i32_0 : i32, i32
  }
  func.func @transform_8(%arg0: i32) -> (i32, i32) {
    %c0_i32 = arith.constant 0 : i32
    %c0_i32_0 = arith.constant 0 : i32
    %c0_i32_1 = arith.constant 0 : i32
    return %c0_i32, %c0_i32_0 : i32, i32
  }
  func.func @transform_9(%arg0: i32) -> (i32, i32) {
    %c0_i32 = arith.constant 0 : i32
    %c0_i32_0 = arith.constant 0 : i32
    %c0_i32_1 = arith.constant 0 : i32
    return %c0_i32, %c0_i32_0 : i32, i32
  }
  func.func @transform_10(%arg0: i32) -> (i32, i32) {
    %c0_i32 = arith.constant 0 : i32
    %c0_i32_0 = arith.constant 0 : i32
    %c0_i32_1 = arith.constant 0 : i32
    return %c0_i32, %c0_i32_0 : i32, i32
  }
  func.func @transform_11(%arg0: i32) -> (i32, i32) {
    %c0_i32 = arith.constant 0 : i32
    %c0_i32_0 = arith.constant 0 : i32
    %c0_i32_1 = arith.constant 0 : i32
    return %c0_i32, %c0_i32_0 : i32, i32
  }
  func.func @transform_12(%arg0: i32) -> (i32, i32) {
    %c0_i32 = arith.constant 0 : i32
    %c0_i32_0 = arith.constant 0 : i32
    %c0_i32_1 = arith.constant 0 : i32
    return %c0_i32, %c0_i32_0 : i32, i32
  }
  func.func @transform_13(%arg0: i32) -> (i32, i32) {
    %c0_i32 = arith.constant 0 : i32
    %c0_i32_0 = arith.constant 0 : i32
    %c0_i32_1 = arith.constant 0 : i32
    return %c0_i32, %c0_i32_0 : i32, i32
  }
  func.func @transform_14(%arg0: i32) -> (i32, i32) {
    %c0_i32 = arith.constant 0 : i32
    %c0_i32_0 = arith.constant 0 : i32
    %c0_i32_1 = arith.constant 0 : i32
    return %c0_i32, %c0_i32_0 : i32, i32
  }
  func.func @transform_15(%arg0: i32) -> (i32, i32) {
    %c0_i32 = arith.constant 0 : i32
    %c0_i32_0 = arith.constant 0 : i32
    %c0_i32_1 = arith.constant 0 : i32
    return %c0_i32, %c0_i32_0 : i32, i32
  }
  func.func @transform_16(%arg0: i32) -> (i32, i32) {
    %c0_i32 = arith.constant 0 : i32
    %c0_i32_0 = arith.constant 0 : i32
    %c0_i32_1 = arith.constant 0 : i32
    return %c0_i32, %c0_i32_0 : i32, i32
  }
  func.func @transform_17(%arg0: i32) -> (i32, i32) {
    %c0_i32 = arith.constant 0 : i32
    %c0_i32_0 = arith.constant 0 : i32
    %c0_i32_1 = arith.constant 0 : i32
    return %c0_i32, %c0_i32_0 : i32, i32
  }
  func.func @transform_18(%arg0: i32) -> (i32, i32) {
    %c0_i32 = arith.constant 0 : i32
    %c0_i32_0 = arith.constant 0 : i32
    %c0_i32_1 = arith.constant 0 : i32
    return %c0_i32, %c0_i32_0 : i32, i32
  }
  func.func @transform_19(%arg0: i32) -> (i32, i32) {
    %c0_i32 = arith.constant 0 : i32
    %c0_i32_0 = arith.constant 0 : i32
    %c0_i32_1 = arith.constant 0 : i32
    return %c0_i32, %c0_i32_0 : i32, i32
  }
  func.func @transform_20(%arg0: i32) -> (i32, i32) {
    %c0_i32 = arith.constant 0 : i32
    %c0_i32_0 = arith.constant 0 : i32
    %c0_i32_1 = arith.constant 0 : i32
    return %c0_i32, %c0_i32_0 : i32, i32
  }
  func.func @transform_21(%arg0: i32) -> (i32, i32) {
    %c0_i32 = arith.constant 0 : i32
    %c0_i32_0 = arith.constant 0 : i32
    %c0_i32_1 = arith.constant 0 : i32
    return %c0_i32, %c0_i32_0 : i32, i32
  }
  func.func @transform_22(%arg0: i32) -> (i32, i32) {
    %c0_i32 = arith.constant 0 : i32
    %c0_i32_0 = arith.constant 0 : i32
    %c0_i32_1 = arith.constant 0 : i32
    return %c0_i32, %c0_i32_0 : i32, i32
  }
  func.func @transform_23(%arg0: i32) -> (i32, i32) {
    %c0_i32 = arith.constant 0 : i32
    %c0_i32_0 = arith.constant 0 : i32
    %c0_i32_1 = arith.constant 0 : i32
    return %c0_i32, %c0_i32_0 : i32, i32
  }
  func.func @transform_24(%arg0: i32) -> (i32, i32) {
    %c0_i32 = arith.constant 0 : i32
    %c0_i32_0 = arith.constant 0 : i32
    %c0_i32_1 = arith.constant 0 : i32
    return %c0_i32, %c0_i32_0 : i32, i32
  }
  func.func @transform_25(%arg0: i32) -> (i32, i32) {
    %c0_i32 = arith.constant 0 : i32
    %c0_i32_0 = arith.constant 0 : i32
    %c0_i32_1 = arith.constant 0 : i32
    return %c0_i32, %c0_i32_0 : i32, i32
  }
  func.func @transform_26(%arg0: i32) -> (i32, i32) {
    %c0_i32 = arith.constant 0 : i32
    %c0_i32_0 = arith.constant 0 : i32
    %c0_i32_1 = arith.constant 0 : i32
    return %c0_i32, %c0_i32_0 : i32, i32
  }
  func.func @transform_27(%arg0: i32) -> (i32, i32) {
    %c0_i32 = arith.constant 0 : i32
    %c0_i32_0 = arith.constant 0 : i32
    %c0_i32_1 = arith.constant 0 : i32
    return %c0_i32, %c0_i32_0 : i32, i32
  }
  func.func @transform_28(%arg0: i32) -> (i32, i32) {
    %c0_i32 = arith.constant 0 : i32
    %c0_i32_0 = arith.constant 0 : i32
    %c0_i32_1 = arith.constant 0 : i32
    return %c0_i32, %c0_i32_0 : i32, i32
  }
  func.func @transform_29(%arg0: i32) -> (i32, i32) {
    %c0_i32 = arith.constant 0 : i32
    %c0_i32_0 = arith.constant 0 : i32
    %c0_i32_1 = arith.constant 0 : i32
    return %c0_i32, %c0_i32_0 : i32, i32
  }
  func.func @transform_30(%arg0: i32) -> (i32, i32) {
    %c0_i32 = arith.constant 0 : i32
    %c0_i32_0 = arith.constant 0 : i32
    %c0_i32_1 = arith.constant 0 : i32
    return %c0_i32, %c0_i32_0 : i32, i32
  }
  func.func @transform_31(%arg0: i32) -> (i32, i32) {
    %c0_i32 = arith.constant 0 : i32
    %c0_i32_0 = arith.constant 0 : i32
    %c0_i32_1 = arith.constant 0 : i32
    return %c0_i32, %c0_i32_0 : i32, i32
  }
  func.func @transform_32(%arg0: i32) -> (i32, i32) {
    %c0_i32 = arith.constant 0 : i32
    %c0_i32_0 = arith.constant 0 : i32
    %c0_i32_1 = arith.constant 0 : i32
    return %c0_i32, %c0_i32_0 : i32, i32
  }
  func.func @transform_33(%arg0: i32) -> (i32, i32) {
    %c0_i32 = arith.constant 0 : i32
    %c0_i32_0 = arith.constant 0 : i32
    return %arg0, %c0_i32 : i32, i32
  }
}

</mosaic_0001>

<llo_original>
// kernel: hybrid_cnn_vit_forward.1
$region0: #{hybrid_cnn_vit_forward.1}
  #allocation0 [shape = 'u32[]', space=smem, size = 0x4, offset = 0x4, fixed_abs, tag = 'smem constant byte address 0x4 - core index']
  #allocation1 [shape = 'u32[144,128]{1,0:T(1,128)}', space=vmem, size = 0x12000, scoped, tag = 'internal scratch']
  %s0 = inlined_call_operand.smem [shape: u32[34], index: -1, kind: input, shape index: {}]
  %s1 = sld [smem:[%s0]]
  %s2 = scalar_lea.smem %s0, 1
  %s3 = sld [smem:[%s2]]
  %s4 = scalar_lea.smem %s0, 2
  %s5 = sld [smem:[%s4]]
  %s6 = scalar_lea.smem %s0, 3
  %s7 = sld [smem:[%s6]]
  %s8 = scalar_lea.smem %s0, 4
  %s9 = sld [smem:[%s8]]
  %s10 = scalar_lea.smem %s0, 5
  %s11 = sld [smem:[%s10]]
  %s12 = scalar_lea.smem %s0, 6
  %s13 = sld [smem:[%s12]]
  %s14 = scalar_lea.smem %s0, 7
  %s15 = sld [smem:[%s14]]
  %s16 = scalar_lea.smem %s0, 8
  %s17 = sld [smem:[%s16]]
  %s18 = scalar_lea.smem %s0, 9
  %s19 = sld [smem:[%s18]]
  %s20 = scalar_lea.smem %s0, 10
  %s21 = sld [smem:[%s20]]
  %s22 = scalar_lea.smem %s0, 11
  %s23 = sld [smem:[%s22]]
  %s24 = scalar_lea.smem %s0, 12
  %s25 = sld [smem:[%s24]]
  %s26 = scalar_lea.smem %s0, 13
  %s27 = sld [smem:[%s26]]
  %s28 = scalar_lea.smem %s0, 14
  %s29 = sld [smem:[%s28]]
  %s30 = scalar_lea.smem %s0, 15
  %s31 = sld [smem:[%s30]]
  %s32 = scalar_lea.smem %s0, 16
  %s33 = sld [smem:[%s32]]
  %s34 = scalar_lea.smem %s0, 17
  %s35 = sld [smem:[%s34]]
  %s36 = scalar_lea.smem %s0, 18
  %s37 = sld [smem:[%s36]]
  %s38 = scalar_lea.smem %s0, 19
  %s39 = sld [smem:[%s38]]
  %s40 = scalar_lea.smem %s0, 20
  %s41 = sld [smem:[%s40]]
  %s42 = scalar_lea.smem %s0, 21
  %s43 = sld [smem:[%s42]]
  %s44 = scalar_lea.smem %s0, 22
  %s45 = sld [smem:[%s44]]
  %s46 = scalar_lea.smem %s0, 23
  %s47 = sld [smem:[%s46]]
  %s48 = scalar_lea.smem %s0, 24
  %s49 = sld [smem:[%s48]]
  %s50 = scalar_lea.smem %s0, 25
  %s51 = sld [smem:[%s50]]
  %s52 = scalar_lea.smem %s0, 26
  %s53 = sld [smem:[%s52]]
  %s54 = scalar_lea.smem %s0, 27
  %s55 = sld [smem:[%s54]]
  %s56 = scalar_lea.smem %s0, 28
  %s57 = sld [smem:[%s56]]
  %s58 = scalar_lea.smem %s0, 29
  %s59 = sld [smem:[%s58]]
  %s60 = scalar_lea.smem %s0, 30
  %s61 = sld [smem:[%s60]]
  %s62 = scalar_lea.smem %s0, 31
  %s63 = sld [smem:[%s62]]
  %s64 = scalar_lea.smem %s0, 32
  %s65 = sld [smem:[%s64]]
  %s66 = scalar_lea.smem %s0, 33
  %s67 = sld [smem:[%s66]]
  %s68 = sld [smem:[#allocation0]]
  $region165: #{hybrid_cnn_vit_forward.1} parent=0
    _
  %s70 = ssub.s32 1, %s68
  %s71 = scalar_select 0, %s70, %s68
  loop: start=0, step=1, limit=4
  $region2: #{hybrid_cnn_vit_forward.1} parent=0 // loop_pre_header
    _
  $region3: #{hybrid_cnn_vit_forward.1} parent=0 // loop_header
    %s73 = sphi 0, %s77
    %p74 = scmp.ge.s32.totalorder %s73, 4
    %s83 = sphi 0, %s85
    %s86 = sphi 0, %s83
    %s87 = sphi 0, %s86
    %s103 = sphi 0, %s87
    %s107 = sphi 0, %s107
    %s109 = sphi 0, %s107
    %s110 = sphi 0, %s109
    %s124 = sphi 0, %s110
    %s128 = sphi 0, %s128
    %s130 = sphi 0, %s128
    %s131 = sphi 0, %s130
    %s145 = sphi 0, %s131
    %s149 = sphi 0, %s149
    %s151 = sphi 0, %s149
    %s152 = sphi 0, %s151
    %s166 = sphi 0, %s152
    %s170 = sphi 0, %s170
    %s172 = sphi 0, %s170
    %s173 = sphi 0, %s172
    %s187 = sphi 0, %s173
    %s191 = sphi 0, %s191
    %s193 = sphi 0, %s191
    %s194 = sphi 0, %s193
    %s208 = sphi 0, %s194
    %s212 = sphi 0, %s212
    %s214 = sphi 0, %s212
    %s215 = sphi 0, %s214
    %s229 = sphi 0, %s215
    %s233 = sphi 0, %s233
    %s235 = sphi 0, %s233
    %s236 = sphi 0, %s235
    %s250 = sphi 0, %s236
    %s254 = sphi 0, %s254
    %s256 = sphi 0, %s254
    %s257 = sphi 0, %s256
    %s271 = sphi 0, %s257
    %s275 = sphi 0, %s275
    %s277 = sphi 0, %s275
    %s278 = sphi 0, %s277
    %s292 = sphi 0, %s278
    %s296 = sphi 0, %s296
    %s298 = sphi 0, %s296
    %s299 = sphi 0, %s298
    %s313 = sphi 0, %s299
    %s317 = sphi 0, %s317
    %s319 = sphi 0, %s317
    %s320 = sphi 0, %s319
    %s334 = sphi 0, %s320
    %s338 = sphi 0, %s338
    %s340 = sphi 0, %s338
    %s341 = sphi 0, %s340
    %s355 = sphi 0, %s341
    %s359 = sphi 0, %s359
    %s361 = sphi 0, %s359
    %s362 = sphi 0, %s361
    %s376 = sphi 0, %s362
    %s380 = sphi 0, %s380
    %s382 = sphi 0, %s380
    %s383 = sphi 0, %s382
    %s397 = sphi 0, %s383
    %s401 = sphi 0, %s401
    %s403 = sphi 0, %s401
    %s404 = sphi 0, %s403
    %s418 = sphi 0, %s404
    %s422 = sphi 0, %s422
    %s424 = sphi 0, %s422
    %s425 = sphi 0, %s424
    %s439 = sphi 0, %s425
    %s443 = sphi 0, %s443
    %s445 = sphi 0, %s443
    %s446 = sphi 0, %s445
    %s460 = sphi 0, %s446
    %s464 = sphi 0, %s464
    %s466 = sphi 0, %s464
    %s467 = sphi 0, %s466
    %s481 = sphi 0, %s467
    %s485 = sphi 0, %s485
    %s487 = sphi 0, %s485
    %s488 = sphi 0, %s487
    %s502 = sphi 0, %s488
    %s506 = sphi 0, %s506
    %s508 = sphi 0, %s506
    %s509 = sphi 0, %s508
    %s523 = sphi 0, %s509
    %s527 = sphi 0, %s527
    %s529 = sphi 0, %s527
    %s530 = sphi 0, %s529
    %s544 = sphi 0, %s530
    %s548 = sphi 0, %s548
    %s550 = sphi 0, %s548
    %s551 = sphi 0, %s550
    %s565 = sphi 0, %s551
    %s569 = sphi 0, %s569
    %s571 = sphi 0, %s569
    %s572 = sphi 0, %s571
    %s586 = sphi 0, %s572
    %s590 = sphi 0, %s590
    %s592 = sphi 0, %s590
    %s593 = sphi 0, %s592
    %s607 = sphi 0, %s593
    %s611 = sphi 0, %s611
    %s613 = sphi 0, %s611
    %s614 = sphi 0, %s613
    %s628 = sphi 0, %s614
    %s632 = sphi 0, %s632
    %s634 = sphi 0, %s632
    %s635 = sphi 0, %s634
    %s649 = sphi 0, %s635
    %s653 = sphi 0, %s653
    %s655 = sphi 0, %s653
    %s656 = sphi 0, %s655
    %s670 = sphi 0, %s656
    %s674 = sphi 0, %s674
    %s676 = sphi 0, %s674
    %s677 = sphi 0, %s676
    %s691 = sphi 0, %s677
    %s695 = sphi 0, %s695
    %s697 = sphi 0, %s695
    %s698 = sphi 0, %s697
    %s712 = sphi 0, %s698
    %s716 = sphi 0, %s716
    %s718 = sphi 0, %s716
    %s719 = sphi 0, %s718
    %s733 = sphi 0, %s719
    %s737 = sphi 0, %s737
    %s739 = sphi 0, %s737
    %s740 = sphi 0, %s739
    %s754 = sphi 0, %s740
    %s758 = sphi 0, %s758
    %s760 = sphi 0, %s758
    %s761 = sphi 0, %s760
    %s775 = sphi 0, %s761
    %s781 = sphi 0, %s783
    %s784 = sphi 0, %s781
    %s785 = sphi 0, %s784
    %s801 = sphi 0, %s785
  $region4: #{hybrid_cnn_vit_forward.1} parent=0 // loop_header_branch
    %76 = sbr.rel (%p74) target = $region8
  $region5: #{hybrid_cnn_vit_forward.1} parent=0 // loop_body
    %s78 = ssub.s32 %s73, 1
    %s79 = ssub.s32 %s73, 2
    %s80 = sadd.s32 %s73, 1
    %s81 = ssub.s32 %s73, %s80
    %p82 = scmp.eq.s32.totalorder %s81, 0
    %s84 = sadd.s32 %s83, 1
    %s85 = scalar_select %p82, %s83, %s84
    %p88 = pneg %p82
    %p89 = scmp.eq.s32.totalorder %s73, 1
    %p90 = por %p88, %p89
    %p91 = scmp.ne.s32.totalorder %s83, %s86
    %p92 = scmp.eq.s32.totalorder %s73, 0
    %p93 = por %p91, %p92
    %p94 = scmp.ne.s32.totalorder %s83, %s86
    %p95 = scmp.eq.s32.totalorder %s78, 1
    %p96 = por %p94, %p95
    %p97 = scmp.ne.s32.totalorder %s86, %s87
    %p98 = scmp.eq.s32.totalorder %s78, 0
    %p99 = por %p97, %p98
    %p100 = scmp.ne.s32.totalorder %s86, %s87
    %p101 = scmp.eq.s32.totalorder %s79, 1
    %p102 = por %p100, %p101
    %p104 = scmp.ne.s32.totalorder %s87, %s103
    %p105 = scmp.eq.s32.totalorder %s79, 0
    %p106 = por %p104, %p105
    %s108 = sadd.s32 %s107, 1
    %p111 = scmp.eq.s32.totalorder %s73, 1
    %p112 = scmp.ne.s32.totalorder %s107, %s109
    %p113 = scmp.eq.s32.totalorder %s73, 0
    %p114 = por %p112, %p113
    %p115 = scmp.ne.s32.totalorder %s107, %s109
    %p116 = scmp.eq.s32.totalorder %s78, 1
    %p117 = por %p115, %p116
    %p118 = scmp.ne.s32.totalorder %s109, %s110
    %p119 = scmp.eq.s32.totalorder %s78, 0
    %p120 = por %p118, %p119
    %p121 = scmp.ne.s32.totalorder %s109, %s110
    %p122 = scmp.eq.s32.totalorder %s79, 1
    %p123 = por %p121, %p122
    %p125 = scmp.ne.s32.totalorder %s110, %s124
    %p126 = scmp.eq.s32.totalorder %s79, 0
    %p127 = por %p125, %p126
    %s129 = sadd.s32 %s128, 1
    %p132 = scmp.eq.s32.totalorder %s73, 1
    %p133 = scmp.ne.s32.totalorder %s128, %s130
    %p134 = scmp.eq.s32.totalorder %s73, 0
    %p135 = por %p133, %p134
    %p136 = scmp.ne.s32.totalorder %s128, %s130
    %p137 = scmp.eq.s32.totalorder %s78, 1
    %p138 = por %p136, %p137
    %p139 = scmp.ne.s32.totalorder %s130, %s131
    %p140 = scmp.eq.s32.totalorder %s78, 0
    %p141 = por %p139, %p140
    %p142 = scmp.ne.s32.totalorder %s130, %s131
    %p143 = scmp.eq.s32.totalorder %s79, 1
    %p144 = por %p142, %p143
    %p146 = scmp.ne.s32.totalorder %s131, %s145
    %p147 = scmp.eq.s32.totalorder %s79, 0
    %p148 = por %p146, %p147
    %s150 = sadd.s32 %s149, 1
    %p153 = scmp.eq.s32.totalorder %s73, 1
    %p154 = scmp.ne.s32.totalorder %s149, %s151
    %p155 = scmp.eq.s32.totalorder %s73, 0
    %p156 = por %p154, %p155
    %p157 = scmp.ne.s32.totalorder %s149, %s151
    %p158 = scmp.eq.s32.totalorder %s78, 1
    %p159 = por %p157, %p158
    %p160 = scmp.ne.s32.totalorder %s151, %s152
    %p161 = scmp.eq.s32.totalorder %s78, 0
    %p162 = por %p160, %p161
    %p163 = scmp.ne.s32.totalorder %s151, %s152
    %p164 = scmp.eq.s32.totalorder %s79, 1
    %p165 = por %p163, %p164
    %p167 = scmp.ne.s32.totalorder %s152, %s166
    %p168 = scmp.eq.s32.totalorder %s79, 0
    %p169 = por %p167, %p168
    %s171 = sadd.s32 %s170, 1
    %p174 = scmp.eq.s32.totalorder %s73, 1
    %p175 = scmp.ne.s32.totalorder %s170, %s172
    %p176 = scmp.eq.s32.totalorder %s73, 0
    %p177 = por %p175, %p176
    %p178 = scmp.ne.s32.totalorder %s170, %s172
    %p179 = scmp.eq.s32.totalorder %s78, 1
    %p180 = por %p178, %p179
    %p181 = scmp.ne.s32.totalorder %s172, %s173
    %p182 = scmp.eq.s32.totalorder %s78, 0
    %p183 = por %p181, %p182
    %p184 = scmp.ne.s32.totalorder %s172, %s173
    %p185 = scmp.eq.s32.totalorder %s79, 1
    %p186 = por %p184, %p185
    %p188 = scmp.ne.s32.totalorder %s173, %s187
    %p189 = scmp.eq.s32.totalorder %s79, 0
    %p190 = por %p188, %p189
    %s192 = sadd.s32 %s191, 1
    %p195 = scmp.eq.s32.totalorder %s73, 1
    %p196 = scmp.ne.s32.totalorder %s191, %s193
    %p197 = scmp.eq.s32.totalorder %s73, 0
    %p198 = por %p196, %p197
    %p199 = scmp.ne.s32.totalorder %s191, %s193
    %p200 = scmp.eq.s32.totalorder %s78, 1
    %p201 = por %p199, %p200
    %p202 = scmp.ne.s32.totalorder %s193, %s194
    %p203 = scmp.eq.s32.totalorder %s78, 0
    %p204 = por %p202, %p203
    %p205 = scmp.ne.s32.totalorder %s193, %s194
    %p206 = scmp.eq.s32.totalorder %s79, 1
    %p207 = por %p205, %p206
    %p209 = scmp.ne.s32.totalorder %s194, %s208
    %p210 = scmp.eq.s32.totalorder %s79, 0
    %p211 = por %p209, %p210
    %s213 = sadd.s32 %s212, 1
    %p216 = scmp.eq.s32.totalorder %s73, 1
    %p217 = scmp.ne.s32.totalorder %s212, %s214
    %p218 = scmp.eq.s32.totalorder %s73, 0
    %p219 = por %p217, %p218
    %p220 = scmp.ne.s32.totalorder %s212, %s214
    %p221 = scmp.eq.s32.totalorder %s78, 1
    %p222 = por %p220, %p221
    %p223 = scmp.ne.s32.totalorder %s214, %s215
    %p224 = scmp.eq.s32.totalorder %s78, 0
    %p225 = por %p223, %p224
    %p226 = scmp.ne.s32.totalorder %s214, %s215
    %p227 = scmp.eq.s32.totalorder %s79, 1
    %p228 = por %p226, %p227
    %p230 = scmp.ne.s32.totalorder %s215, %s229
    %p231 = scmp.eq.s32.totalorder %s79, 0
    %p232 = por %p230, %p231
    %s234 = sadd.s32 %s233, 1
    %p237 = scmp.eq.s32.totalorder %s73, 1
    %p238 = scmp.ne.s32.totalorder %s233, %s235
    %p239 = scmp.eq.s32.totalorder %s73, 0
    %p240 = por %p238, %p239
    %p241 = scmp.ne.s32.totalorder %s233, %s235
    %p242 = scmp.eq.s32.totalorder %s78, 1
    %p243 = por %p241, %p242
    %p244 = scmp.ne.s32.totalorder %s235, %s236
    %p245 = scmp.eq.s32.totalorder %s78, 0
    %p246 = por %p244, %p245
    %p247 = scmp.ne.s32.totalorder %s235, %s236
    %p248 = scmp.eq.s32.totalorder %s79, 1
    %p249 = por %p247, %p248
    %p251 = scmp.ne.s32.totalorder %s236, %s250
    %p252 = scmp.eq.s32.totalorder %s79, 0
    %p253 = por %p251, %p252
    %s255 = sadd.s32 %s254, 1
    %p258 = scmp.eq.s32.totalorder %s73, 1
    %p259 = scmp.ne.s32.totalorder %s254, %s256
    %p260 = scmp.eq.s32.totalorder %s73, 0
    %p261 = por %p259, %p260
    %p262 = scmp.ne.s32.totalorder %s254, %s256
    %p263 = scmp.eq.s32.totalorder %s78, 1
    %p264 = por %p262, %p263
    %p265 = scmp.ne.s32.totalorder %s256, %s257
    %p266 = scmp.eq.s32.totalorder %s78, 0
    %p267 = por %p265, %p266
    %p268 = scmp.ne.s32.totalorder %s256, %s257
    %p269 = scmp.eq.s32.totalorder %s79, 1
    %p270 = por %p268, %p269
    %p272 = scmp.ne.s32.totalorder %s257, %s271
    %p273 = scmp.eq.s32.totalorder %s79, 0
    %p274 = por %p272, %p273
    %s276 = sadd.s32 %s275, 1
    %p279 = scmp.eq.s32.totalorder %s73, 1
    %p280 = scmp.ne.s32.totalorder %s275, %s277
    %p281 = scmp.eq.s32.totalorder %s73, 0
    %p282 = por %p280, %p281
    %p283 = scmp.ne.s32.totalorder %s275, %s277
    %p284 = scmp.eq.s32.totalorder %s78, 1
    %p285 = por %p283, %p284
    %p286 = scmp.ne.s32.totalorder %s277, %s278
    %p287 = scmp.eq.s32.totalorder %s78, 0
    %p288 = por %p286, %p287
    %p289 = scmp.ne.s32.totalorder %s277, %s278
    %p290 = scmp.eq.s32.totalorder %s79, 1
    %p291 = por %p289, %p290
    %p293 = scmp.ne.s32.totalorder %s278, %s292
    %p294 = scmp.eq.s32.totalorder %s79, 0
    %p295 = por %p293, %p294
    %s297 = sadd.s32 %s296, 1
    %p300 = scmp.eq.s32.totalorder %s73, 1
    %p301 = scmp.ne.s32.totalorder %s296, %s298
    %p302 = scmp.eq.s32.totalorder %s73, 0
    %p303 = por %p301, %p302
    %p304 = scmp.ne.s32.totalorder %s296, %s298
    %p305 = scmp.eq.s32.totalorder %s78, 1
    %p306 = por %p304, %p305
    %p307 = scmp.ne.s32.totalorder %s298, %s299
    %p308 = scmp.eq.s32.totalorder %s78, 0
    %p309 = por %p307, %p308
    %p310 = scmp.ne.s32.totalorder %s298, %s299
    %p311 = scmp.eq.s32.totalorder %s79, 1
    %p312 = por %p310, %p311
    %p314 = scmp.ne.s32.totalorder %s299, %s313
    %p315 = scmp.eq.s32.totalorder %s79, 0
    %p316 = por %p314, %p315
    %s318 = sadd.s32 %s317, 1
    %p321 = scmp.eq.s32.totalorder %s73, 1
    %p322 = scmp.ne.s32.totalorder %s317, %s319
    %p323 = scmp.eq.s32.totalorder %s73, 0
    %p324 = por %p322, %p323
    %p325 = scmp.ne.s32.totalorder %s317, %s319
    %p326 = scmp.eq.s32.totalorder %s78, 1
    %p327 = por %p325, %p326
    %p328 = scmp.ne.s32.totalorder %s319, %s320
    %p329 = scmp.eq.s32.totalorder %s78, 0
    %p330 = por %p328, %p329
    %p331 = scmp.ne.s32.totalorder %s319, %s320
    %p332 = scmp.eq.s32.totalorder %s79, 1
    %p333 = por %p331, %p332
    %p335 = scmp.ne.s32.totalorder %s320, %s334
    %p336 = scmp.eq.s32.totalorder %s79, 0
    %p337 = por %p335, %p336
    %s339 = sadd.s32 %s338, 1
    %p342 = scmp.eq.s32.totalorder %s73, 1
    %p343 = scmp.ne.s32.totalorder %s338, %s340
    %p344 = scmp.eq.s32.totalorder %s73, 0
    %p345 = por %p343, %p344
    %p346 = scmp.ne.s32.totalorder %s338, %s340
    %p347 = scmp.eq.s32.totalorder %s78, 1
    %p348 = por %p346, %p347
    %p349 = scmp.ne.s32.totalorder %s340, %s341
    %p350 = scmp.eq.s32.totalorder %s78, 0
    %p351 = por %p349, %p350
    %p352 = scmp.ne.s32.totalorder %s340, %s341
    %p353 = scmp.eq.s32.totalorder %s79, 1
    %p354 = por %p352, %p353
    %p356 = scmp.ne.s32.totalorder %s341, %s355
    %p357 = scmp.eq.s32.totalorder %s79, 0
    %p358 = por %p356, %p357
    %s360 = sadd.s32 %s359, 1
    %p363 = scmp.eq.s32.totalorder %s73, 1
    %p364 = scmp.ne.s32.totalorder %s359, %s361
    %p365 = scmp.eq.s32.totalorder %s73, 0
    %p366 = por %p364, %p365
    %p367 = scmp.ne.s32.totalorder %s359, %s361
    %p368 = scmp.eq.s32.totalorder %s78, 1
    %p369 = por %p367, %p368
    %p370 = scmp.ne.s32.totalorder %s361, %s362
    %p371 = scmp.eq.s32.totalorder %s78, 0
    %p372 = por %p370, %p371
    %p373 = scmp.ne.s32.totalorder %s361, %s362
    %p374 = scmp.eq.s32.totalorder %s79, 1
    %p375 = por %p373, %p374
    %p377 = scmp.ne.s32.totalorder %s362, %s376
    %p378 = scmp.eq.s32.totalorder %s79, 0
    %p379 = por %p377, %p378
    %s381 = sadd.s32 %s380, 1
    %p384 = scmp.eq.s32.totalorder %s73, 1
    %p385 = scmp.ne.s32.totalorder %s380, %s382
    %p386 = scmp.eq.s32.totalorder %s73, 0
    %p387 = por %p385, %p386
    %p388 = scmp.ne.s32.totalorder %s380, %s382
    %p389 = scmp.eq.s32.totalorder %s78, 1
    %p390 = por %p388, %p389
    %p391 = scmp.ne.s32.totalorder %s382, %s383
    %p392 = scmp.eq.s32.totalorder %s78, 0
    %p393 = por %p391, %p392
    %p394 = scmp.ne.s32.totalorder %s382, %s383
    %p395 = scmp.eq.s32.totalorder %s79, 1
    %p396 = por %p394, %p395
    %p398 = scmp.ne.s32.totalorder %s383, %s397
    %p399 = scmp.eq.s32.totalorder %s79, 0
    %p400 = por %p398, %p399
    %s402 = sadd.s32 %s401, 1
    %p405 = scmp.eq.s32.totalorder %s73, 1
    %p406 = scmp.ne.s32.totalorder %s401, %s403
    %p407 = scmp.eq.s32.totalorder %s73, 0
    %p408 = por %p406, %p407
    %p409 = scmp.ne.s32.totalorder %s401, %s403
    %p410 = scmp.eq.s32.totalorder %s78, 1
    %p411 = por %p409, %p410
    %p412 = scmp.ne.s32.totalorder %s403, %s404
    %p413 = scmp.eq.s32.totalorder %s78, 0
    %p414 = por %p412, %p413
    %p415 = scmp.ne.s32.totalorder %s403, %s404
    %p416 = scmp.eq.s32.totalorder %s79, 1
    %p417 = por %p415, %p416
    %p419 = scmp.ne.s32.totalorder %s404, %s418
    %p420 = scmp.eq.s32.totalorder %s79, 0
    %p421 = por %p419, %p420
    %s423 = sadd.s32 %s422, 1
    %p426 = scmp.eq.s32.totalorder %s73, 1
    %p427 = scmp.ne.s32.totalorder %s422, %s424
    %p428 = scmp.eq.s32.totalorder %s73, 0
    %p429 = por %p427, %p428
    %p430 = scmp.ne.s32.totalorder %s422, %s424
    %p431 = scmp.eq.s32.totalorder %s78, 1
    %p432 = por %p430, %p431
    %p433 = scmp.ne.s32.totalorder %s424, %s425
    %p434 = scmp.eq.s32.totalorder %s78, 0
    %p435 = por %p433, %p434
    %p436 = scmp.ne.s32.totalorder %s424, %s425
    %p437 = scmp.eq.s32.totalorder %s79, 1
    %p438 = por %p436, %p437
    %p440 = scmp.ne.s32.totalorder %s425, %s439
    %p441 = scmp.eq.s32.totalorder %s79, 0
    %p442 = por %p440, %p441
    %s444 = sadd.s32 %s443, 1
    %p447 = scmp.eq.s32.totalorder %s73, 1
    %p448 = scmp.ne.s32.totalorder %s443, %s445
    %p449 = scmp.eq.s32.totalorder %s73, 0
    %p450 = por %p448, %p449
    %p451 = scmp.ne.s32.totalorder %s443, %s445
    %p452 = scmp.eq.s32.totalorder %s78, 1
    %p453 = por %p451, %p452
    %p454 = scmp.ne.s32.totalorder %s445, %s446
    %p455 = scmp.eq.s32.totalorder %s78, 0
    %p456 = por %p454, %p455
    %p457 = scmp.ne.s32.totalorder %s445, %s446
    %p458 = scmp.eq.s32.totalorder %s79, 1
    %p459 = por %p457, %p458
    %p461 = scmp.ne.s32.totalorder %s446, %s460
    %p462 = scmp.eq.s32.totalorder %s79, 0
    %p463 = por %p461, %p462
    %s465 = sadd.s32 %s464, 1
    %p468 = scmp.eq.s32.totalorder %s73, 1
    %p469 = scmp.ne.s32.totalorder %s464, %s466
    %p470 = scmp.eq.s32.totalorder %s73, 0
    %p471 = por %p469, %p470
    %p472 = scmp.ne.s32.totalorder %s464, %s466
    %p473 = scmp.eq.s32.totalorder %s78, 1
    %p474 = por %p472, %p473
    %p475 = scmp.ne.s32.totalorder %s466, %s467
    %p476 = scmp.eq.s32.totalorder %s78, 0
    %p477 = por %p475, %p476
    %p478 = scmp.ne.s32.totalorder %s466, %s467
    %p479 = scmp.eq.s32.totalorder %s79, 1
    %p480 = por %p478, %p479
    %p482 = scmp.ne.s32.totalorder %s467, %s481
    %p483 = scmp.eq.s32.totalorder %s79, 0
    %p484 = por %p482, %p483
    %s486 = sadd.s32 %s485, 1
    %p489 = scmp.eq.s32.totalorder %s73, 1
    %p490 = scmp.ne.s32.totalorder %s485, %s487
    %p491 = scmp.eq.s32.totalorder %s73, 0
    %p492 = por %p490, %p491
    %p493 = scmp.ne.s32.totalorder %s485, %s487
    %p494 = scmp.eq.s32.totalorder %s78, 1
    %p495 = por %p493, %p494
    %p496 = scmp.ne.s32.totalorder %s487, %s488
    %p497 = scmp.eq.s32.totalorder %s78, 0
    %p498 = por %p496, %p497
    %p499 = scmp.ne.s32.totalorder %s487, %s488
    %p500 = scmp.eq.s32.totalorder %s79, 1
    %p501 = por %p499, %p500
    %p503 = scmp.ne.s32.totalorder %s488, %s502
    %p504 = scmp.eq.s32.totalorder %s79, 0
    %p505 = por %p503, %p504
    %s507 = sadd.s32 %s506, 1
    %p510 = scmp.eq.s32.totalorder %s73, 1
    %p511 = scmp.ne.s32.totalorder %s506, %s508
    %p512 = scmp.eq.s32.totalorder %s73, 0
    %p513 = por %p511, %p512
    %p514 = scmp.ne.s32.totalorder %s506, %s508
    %p515 = scmp.eq.s32.totalorder %s78, 1
    %p516 = por %p514, %p515
    %p517 = scmp.ne.s32.totalorder %s508, %s509
    %p518 = scmp.eq.s32.totalorder %s78, 0
    %p519 = por %p517, %p518
    %p520 = scmp.ne.s32.totalorder %s508, %s509
    %p521 = scmp.eq.s32.totalorder %s79, 1
    %p522 = por %p520, %p521
    %p524 = scmp.ne.s32.totalorder %s509, %s523
    %p525 = scmp.eq.s32.totalorder %s79, 0
    %p526 = por %p524, %p525
    %s528 = sadd.s32 %s527, 1
    %p531 = scmp.eq.s32.totalorder %s73, 1
    %p532 = scmp.ne.s32.totalorder %s527, %s529
    %p533 = scmp.eq.s32.totalorder %s73, 0
    %p534 = por %p532, %p533
    %p535 = scmp.ne.s32.totalorder %s527, %s529
    %p536 = scmp.eq.s32.totalorder %s78, 1
    %p537 = por %p535, %p536
    %p538 = scmp.ne.s32.totalorder %s529, %s530
    %p539 = scmp.eq.s32.totalorder %s78, 0
    %p540 = por %p538, %p539
    %p541 = scmp.ne.s32.totalorder %s529, %s530
    %p542 = scmp.eq.s32.totalorder %s79, 1
    %p543 = por %p541, %p542
    %p545 = scmp.ne.s32.totalorder %s530, %s544
    %p546 = scmp.eq.s32.totalorder %s79, 0
    %p547 = por %p545, %p546
    %s549 = sadd.s32 %s548, 1
    %p552 = scmp.eq.s32.totalorder %s73, 1
    %p553 = scmp.ne.s32.totalorder %s548, %s550
    %p554 = scmp.eq.s32.totalorder %s73, 0
    %p555 = por %p553, %p554
    %p556 = scmp.ne.s32.totalorder %s548, %s550
    %p557 = scmp.eq.s32.totalorder %s78, 1
    %p558 = por %p556, %p557
    %p559 = scmp.ne.s32.totalorder %s550, %s551
    %p560 = scmp.eq.s32.totalorder %s78, 0
    %p561 = por %p559, %p560
    %p562 = scmp.ne.s32.totalorder %s550, %s551
    %p563 = scmp.eq.s32.totalorder %s79, 1
    %p564 = por %p562, %p563
    %p566 = scmp.ne.s32.totalorder %s551, %s565
    %p567 = scmp.eq.s32.totalorder %s79, 0
    %p568 = por %p566, %p567
    %s570 = sadd.s32 %s569, 1
    %p573 = scmp.eq.s32.totalorder %s73, 1
    %p574 = scmp.ne.s32.totalorder %s569, %s571
    %p575 = scmp.eq.s32.totalorder %s73, 0
    %p576 = por %p574, %p575
    %p577 = scmp.ne.s32.totalorder %s569, %s571
    %p578 = scmp.eq.s32.totalorder %s78, 1
    %p579 = por %p577, %p578
    %p580 = scmp.ne.s32.totalorder %s571, %s572
    %p581 = scmp.eq.s32.totalorder %s78, 0
    %p582 = por %p580, %p581
    %p583 = scmp.ne.s32.totalorder %s571, %s572
    %p584 = scmp.eq.s32.totalorder %s79, 1
    %p585 = por %p583, %p584
    %p587 = scmp.ne.s32.totalorder %s572, %s586
    %p588 = scmp.eq.s32.totalorder %s79, 0
    %p589 = por %p587, %p588
    %s591 = sadd.s32 %s590, 1
    %p594 = scmp.eq.s32.totalorder %s73, 1
    %p595 = scmp.ne.s32.totalorder %s590, %s592
    %p596 = scmp.eq.s32.totalorder %s73, 0
    %p597 = por %p595, %p596
    %p598 = scmp.ne.s32.totalorder %s590, %s592
    %p599 = scmp.eq.s32.totalorder %s78, 1
    %p600 = por %p598, %p599
    %p601 = scmp.ne.s32.totalorder %s592, %s593
    %p602 = scmp.eq.s32.totalorder %s78, 0
    %p603 = por %p601, %p602
    %p604 = scmp.ne.s32.totalorder %s592, %s593
    %p605 = scmp.eq.s32.totalorder %s79, 1
    %p606 = por %p604, %p605
    %p608 = scmp.ne.s32.totalorder %s593, %s607
    %p609 = scmp.eq.s32.totalorder %s79, 0
    %p610 = por %p608, %p609
    %s612 = sadd.s32 %s611, 1
    %p615 = scmp.eq.s32.totalorder %s73, 1
    %p616 = scmp.ne.s32.totalorder %s611, %s613
    %p617 = scmp.eq.s32.totalorder %s73, 0
    %p618 = por %p616, %p617
    %p619 = scmp.ne.s32.totalorder %s611, %s613
    %p620 = scmp.eq.s32.totalorder %s78, 1
    %p621 = por %p619, %p620
    %p622 = scmp.ne.s32.totalorder %s613, %s614
    %p623 = scmp.eq.s32.totalorder %s78, 0
    %p624 = por %p622, %p623
    %p625 = scmp.ne.s32.totalorder %s613, %s614
    %p626 = scmp.eq.s32.totalorder %s79, 1
    %p627 = por %p625, %p626
    %p629 = scmp.ne.s32.totalorder %s614, %s628
    %p630 = scmp.eq.s32.totalorder %s79, 0
    %p631 = por %p629, %p630
    %s633 = sadd.s32 %s632, 1
    %p636 = scmp.eq.s32.totalorder %s73, 1
    %p637 = scmp.ne.s32.totalorder %s632, %s634
    %p638 = scmp.eq.s32.totalorder %s73, 0
    %p639 = por %p637, %p638
    %p640 = scmp.ne.s32.totalorder %s632, %s634
    %p641 = scmp.eq.s32.totalorder %s78, 1
    %p642 = por %p640, %p641
    %p643 = scmp.ne.s32.totalorder %s634, %s635
    %p644 = scmp.eq.s32.totalorder %s78, 0
    %p645 = por %p643, %p644
    %p646 = scmp.ne.s32.totalorder %s634, %s635
    %p647 = scmp.eq.s32.totalorder %s79, 1
    %p648 = por %p646, %p647
    %p650 = scmp.ne.s32.totalorder %s635, %s649
    %p651 = scmp.eq.s32.totalorder %s79, 0
    %p652 = por %p650, %p651
    %s654 = sadd.s32 %s653, 1
    %p657 = scmp.eq.s32.totalorder %s73, 1
    %p658 = scmp.ne.s32.totalorder %s653, %s655
    %p659 = scmp.eq.s32.totalorder %s73, 0
    %p660 = por %p658, %p659
    %p661 = scmp.ne.s32.totalorder %s653, %s655
    %p662 = scmp.eq.s32.totalorder %s78, 1
    %p663 = por %p661, %p662
    %p664 = scmp.ne.s32.totalorder %s655, %s656
    %p665 = scmp.eq.s32.totalorder %s78, 0
    %p666 = por %p664, %p665
    %p667 = scmp.ne.s32.totalorder %s655, %s656
    %p668 = scmp.eq.s32.totalorder %s79, 1
    %p669 = por %p667, %p668
    %p671 = scmp.ne.s32.totalorder %s656, %s670
    %p672 = scmp.eq.s32.totalorder %s79, 0
    %p673 = por %p671, %p672
    %s675 = sadd.s32 %s674, 1
    %p678 = scmp.eq.s32.totalorder %s73, 1
    %p679 = scmp.ne.s32.totalorder %s674, %s676
    %p680 = scmp.eq.s32.totalorder %s73, 0
    %p681 = por %p679, %p680
    %p682 = scmp.ne.s32.totalorder %s674, %s676
    %p683 = scmp.eq.s32.totalorder %s78, 1
    %p684 = por %p682, %p683
    %p685 = scmp.ne.s32.totalorder %s676, %s677
    %p686 = scmp.eq.s32.totalorder %s78, 0
    %p687 = por %p685, %p686
    %p688 = scmp.ne.s32.totalorder %s676, %s677
    %p689 = scmp.eq.s32.totalorder %s79, 1
    %p690 = por %p688, %p689
    %p692 = scmp.ne.s32.totalorder %s677, %s691
    %p693 = scmp.eq.s32.totalorder %s79, 0
    %p694 = por %p692, %p693
    %s696 = sadd.s32 %s695, 1
    %p699 = scmp.eq.s32.totalorder %s73, 1
    %p700 = scmp.ne.s32.totalorder %s695, %s697
    %p701 = scmp.eq.s32.totalorder %s73, 0
    %p702 = por %p700, %p701
    %p703 = scmp.ne.s32.totalorder %s695, %s697
    %p704 = scmp.eq.s32.totalorder %s78, 1
    %p705 = por %p703, %p704
    %p706 = scmp.ne.s32.totalorder %s697, %s698
    %p707 = scmp.eq.s32.totalorder %s78, 0
    %p708 = por %p706, %p707
    %p709 = scmp.ne.s32.totalorder %s697, %s698
    %p710 = scmp.eq.s32.totalorder %s79, 1
    %p711 = por %p709, %p710
    %p713 = scmp.ne.s32.totalorder %s698, %s712
    %p714 = scmp.eq.s32.totalorder %s79, 0
    %p715 = por %p713, %p714
    %s717 = sadd.s32 %s716, 1
    %p720 = scmp.eq.s32.totalorder %s73, 1
    %p721 = scmp.ne.s32.totalorder %s716, %s718
    %p722 = scmp.eq.s32.totalorder %s73, 0
    %p723 = por %p721, %p722
    %p724 = scmp.ne.s32.totalorder %s716, %s718
    %p725 = scmp.eq.s32.totalorder %s78, 1
    %p726 = por %p724, %p725
    %p727 = scmp.ne.s32.totalorder %s718, %s719
    %p728 = scmp.eq.s32.totalorder %s78, 0
    %p729 = por %p727, %p728
    %p730 = scmp.ne.s32.totalorder %s718, %s719
    %p731 = scmp.eq.s32.totalorder %s79, 1
    %p732 = por %p730, %p731
    %p734 = scmp.ne.s32.totalorder %s719, %s733
    %p735 = scmp.eq.s32.totalorder %s79, 0
    %p736 = por %p734, %p735
    %s738 = sadd.s32 %s737, 1
    %p741 = scmp.eq.s32.totalorder %s73, 1
    %p742 = scmp.ne.s32.totalorder %s737, %s739
    %p743 = scmp.eq.s32.totalorder %s73, 0
    %p744 = por %p742, %p743
    %p745 = scmp.ne.s32.totalorder %s737, %s739
    %p746 = scmp.eq.s32.totalorder %s78, 1
    %p747 = por %p745, %p746
    %p748 = scmp.ne.s32.totalorder %s739, %s740
    %p749 = scmp.eq.s32.totalorder %s78, 0
    %p750 = por %p748, %p749
    %p751 = scmp.ne.s32.totalorder %s739, %s740
    %p752 = scmp.eq.s32.totalorder %s79, 1
    %p753 = por %p751, %p752
    %p755 = scmp.ne.s32.totalorder %s740, %s754
    %p756 = scmp.eq.s32.totalorder %s79, 0
    %p757 = por %p755, %p756
    %s759 = sadd.s32 %s758, 1
    %p762 = scmp.eq.s32.totalorder %s73, 1
    %p763 = scmp.ne.s32.totalorder %s758, %s760
    %p764 = scmp.eq.s32.totalorder %s73, 0
    %p765 = por %p763, %p764
    %p766 = scmp.ne.s32.totalorder %s758, %s760
    %p767 = scmp.eq.s32.totalorder %s78, 1
    %p768 = por %p766, %p767
    %p769 = scmp.ne.s32.totalorder %s760, %s761
    %p770 = scmp.eq.s32.totalorder %s78, 0
    %p771 = por %p769, %p770
    %p772 = scmp.ne.s32.totalorder %s760, %s761
    %p773 = scmp.eq.s32.totalorder %s79, 1
    %p774 = por %p772, %p773
    %p776 = scmp.ne.s32.totalorder %s761, %s775
    %p777 = scmp.eq.s32.totalorder %s79, 0
    %p778 = por %p776, %p777
    %s779 = ssub.s32 %s73, %s80
    %p780 = scmp.eq.s32.totalorder %s779, 0
    %s782 = sadd.s32 %s781, 1
    %s783 = scalar_select %p780, %s781, %s782
    %p786 = pneg %p780
    %p787 = scmp.eq.s32.totalorder %s73, 1
    %p788 = por %p786, %p787
    %p789 = scmp.ne.s32.totalorder %s781, %s784
    %p790 = scmp.eq.s32.totalorder %s73, 0
    %p791 = por %p789, %p790
    %p792 = scmp.ne.s32.totalorder %s781, %s784
    %p793 = scmp.eq.s32.totalorder %s78, 1
    %p794 = por %p792, %p793
    %p795 = scmp.ne.s32.totalorder %s784, %s785
    %p796 = scmp.eq.s32.totalorder %s78, 0
    %p797 = por %p795, %p796
    %p798 = scmp.ne.s32.totalorder %s784, %s785
    %p799 = scmp.eq.s32.totalorder %s79, 1
    %p800 = por %p798, %p799
    %p802 = scmp.ne.s32.totalorder %s785, %s801
    %p803 = scmp.eq.s32.totalorder %s79, 0
    %p804 = por %p802, %p803
    %p805 = scmp.le.s32.totalorder 1, %s73
    %p806 = scmp.lt.s32.totalorder %s73, 3
    %p807 = pnand %p805, %p806
    %p808 = pneg %p807
    // Predicated region
    $region9: #{hybrid_cnn_vit_forward.1} parent=5 // pred_check
      _
    $region10: #{hybrid_cnn_vit_forward.1} parent=5 // pred_check_branch
      %810 = sbr.rel (%p807) target = $region12
    $region11: #{hybrid_cnn_vit_forward.1} parent=5 // pred_region
      %s811 = ssub.s32 %s73, 1
      // Predicated region
      $region13: #{hybrid_cnn_vit_forward.1} parent=11 // pred_check
        %p812 = pneg %p120
      $region14: #{hybrid_cnn_vit_forward.1} parent=11 // pred_check_branch
        %814 = sbr.rel (%p812) target = $region16
      $region15: #{hybrid_cnn_vit_forward.1} parent=11 // pred_region
        _
      $region16: #{hybrid_cnn_vit_forward.1} parent=11 // pred_fallthru
        _
      // Predicated region
      $region17: #{hybrid_cnn_vit_forward.1} parent=11 // pred_check
        %p815 = pneg %p141
      $region18: #{hybrid_cnn_vit_forward.1} parent=11 // pred_check_branch
        %817 = sbr.rel (%p815) target = $region20
      $region19: #{hybrid_cnn_vit_forward.1} parent=11 // pred_region
        _
      $region20: #{hybrid_cnn_vit_forward.1} parent=11 // pred_fallthru
        _
      // Predicated region
      $region21: #{hybrid_cnn_vit_forward.1} parent=11 // pred_check
        %p818 = pneg %p162
      $region22: #{hybrid_cnn_vit_forward.1} parent=11 // pred_check_branch
        %820 = sbr.rel (%p818) target = $region24
      $region23: #{hybrid_cnn_vit_forward.1} parent=11 // pred_region
        _
      $region24: #{hybrid_cnn_vit_forward.1} parent=11 // pred_fallthru
        _
      // Predicated region
      $region25: #{hybrid_cnn_vit_forward.1} parent=11 // pred_check
        %p821 = pneg %p183
      $region26: #{hybrid_cnn_vit_forward.1} parent=11 // pred_check_branch
        %823 = sbr.rel (%p821) target = $region28
      $region27: #{hybrid_cnn_vit_forward.1} parent=11 // pred_region
        _
      $region28: #{hybrid_cnn_vit_forward.1} parent=11 // pred_fallthru
        _
      // Predicated region
      $region29: #{hybrid_cnn_vit_forward.1} parent=11 // pred_check
        %p824 = pneg %p204
      $region30: #{hybrid_cnn_vit_forward.1} parent=11 // pred_check_branch
        %826 = sbr.rel (%p824) target = $region32
      $region31: #{hybrid_cnn_vit_forward.1} parent=11 // pred_region
        _
      $region32: #{hybrid_cnn_vit_forward.1} parent=11 // pred_fallthru
        _
      // Predicated region
      $region33: #{hybrid_cnn_vit_forward.1} parent=11 // pred_check
        %p827 = pneg %p225
      $region34: #{hybrid_cnn_vit_forward.1} parent=11 // pred_check_branch
        %829 = sbr.rel (%p827) target = $region36
      $region35: #{hybrid_cnn_vit_forward.1} parent=11 // pred_region
        _
      $region36: #{hybrid_cnn_vit_forward.1} parent=11 // pred_fallthru
        _
      // Predicated region
      $region37: #{hybrid_cnn_vit_forward.1} parent=11 // pred_check
        %p830 = pneg %p246
      $region38: #{hybrid_cnn_vit_forward.1} parent=11 // pred_check_branch
        %832 = sbr.rel (%p830) target = $region40
      $region39: #{hybrid_cnn_vit_forward.1} parent=11 // pred_region
        _
      $region40: #{hybrid_cnn_vit_forward.1} parent=11 // pred_fallthru
        _
      // Predicated region
      $region41: #{hybrid_cnn_vit_forward.1} parent=11 // pred_check
        %p833 = pneg %p267
      $region42: #{hybrid_cnn_vit_forward.1} parent=11 // pred_check_branch
        %835 = sbr.rel (%p833) target = $region44
      $region43: #{hybrid_cnn_vit_forward.1} parent=11 // pred_region
        _
      $region44: #{hybrid_cnn_vit_forward.1} parent=11 // pred_fallthru
        _
      // Predicated region
      $region45: #{hybrid_cnn_vit_forward.1} parent=11 // pred_check
        %p836 = pneg %p288
      $region46: #{hybrid_cnn_vit_forward.1} parent=11 // pred_check_branch
        %838 = sbr.rel (%p836) target = $region48
      $region47: #{hybrid_cnn_vit_forward.1} parent=11 // pred_region
        _
      $region48: #{hybrid_cnn_vit_forward.1} parent=11 // pred_fallthru
        _
      // Predicated region
      $region49: #{hybrid_cnn_vit_forward.1} parent=11 // pred_check
        %p839 = pneg %p309
      $region50: #{hybrid_cnn_vit_forward.1} parent=11 // pred_check_branch
        %841 = sbr.rel (%p839) target = $region52
      $region51: #{hybrid_cnn_vit_forward.1} parent=11 // pred_region
        _
      $region52: #{hybrid_cnn_vit_forward.1} parent=11 // pred_fallthru
        _
      // Predicated region
      $region53: #{hybrid_cnn_vit_forward.1} parent=11 // pred_check
        %p842 = pneg %p330
      $region54: #{hybrid_cnn_vit_forward.1} parent=11 // pred_check_branch
        %844 = sbr.rel (%p842) target = $region56
      $region55: #{hybrid_cnn_vit_forward.1} parent=11 // pred_region
        _
      $region56: #{hybrid_cnn_vit_forward.1} parent=11 // pred_fallthru
        _
      // Predicated region
      $region57: #{hybrid_cnn_vit_forward.1} parent=11 // pred_check
        %p845 = pneg %p351
      $region58: #{hybrid_cnn_vit_forward.1} parent=11 // pred_check_branch
        %847 = sbr.rel (%p845) target = $region60
      $region59: #{hybrid_cnn_vit_forward.1} parent=11 // pred_region
        _
      $region60: #{hybrid_cnn_vit_forward.1} parent=11 // pred_fallthru
        _
      // Predicated region
      $region61: #{hybrid_cnn_vit_forward.1} parent=11 // pred_check
        %p848 = pneg %p372
      $region62: #{hybrid_cnn_vit_forward.1} parent=11 // pred_check_branch
        %850 = sbr.rel (%p848) target = $region64
      $region63: #{hybrid_cnn_vit_forward.1} parent=11 // pred_region
        _
      $region64: #{hybrid_cnn_vit_forward.1} parent=11 // pred_fallthru
        _
      // Predicated region
      $region65: #{hybrid_cnn_vit_forward.1} parent=11 // pred_check
        %p851 = pneg %p393
      $region66: #{hybrid_cnn_vit_forward.1} parent=11 // pred_check_branch
        %853 = sbr.rel (%p851) target = $region68
      $region67: #{hybrid_cnn_vit_forward.1} parent=11 // pred_region
        _
      $region68: #{hybrid_cnn_vit_forward.1} parent=11 // pred_fallthru
        _
      // Predicated region
      $region69: #{hybrid_cnn_vit_forward.1} parent=11 // pred_check
        %p854 = pneg %p414
      $region70: #{hybrid_cnn_vit_forward.1} parent=11 // pred_check_branch
        %856 = sbr.rel (%p854) target = $region72
      $region71: #{hybrid_cnn_vit_forward.1} parent=11 // pred_region
        _
      $region72: #{hybrid_cnn_vit_forward.1} parent=11 // pred_fallthru
        _
      // Predicated region
      $region73: #{hybrid_cnn_vit_forward.1} parent=11 // pred_check
        %p857 = pneg %p435
      $region74: #{hybrid_cnn_vit_forward.1} parent=11 // pred_check_branch
        %859 = sbr.rel (%p857) target = $region76
      $region75: #{hybrid_cnn_vit_forward.1} parent=11 // pred_region
        _
      $region76: #{hybrid_cnn_vit_forward.1} parent=11 // pred_fallthru
        _
      // Predicated region
      $region77: #{hybrid_cnn_vit_forward.1} parent=11 // pred_check
        %p860 = pneg %p456
      $region78: #{hybrid_cnn_vit_forward.1} parent=11 // pred_check_branch
        %862 = sbr.rel (%p860) target = $region80
      $region79: #{hybrid_cnn_vit_forward.1} parent=11 // pred_region
        _
      $region80: #{hybrid_cnn_vit_forward.1} parent=11 // pred_fallthru
        _
      // Predicated region
      $region81: #{hybrid_cnn_vit_forward.1} parent=11 // pred_check
        %p863 = pneg %p477
      $region82: #{hybrid_cnn_vit_forward.1} parent=11 // pred_check_branch
        %865 = sbr.rel (%p863) target = $region84
      $region83: #{hybrid_cnn_vit_forward.1} parent=11 // pred_region
        _
      $region84: #{hybrid_cnn_vit_forward.1} parent=11 // pred_fallthru
        _
      // Predicated region
      $region85: #{hybrid_cnn_vit_forward.1} parent=11 // pred_check
        %p866 = pneg %p498
      $region86: #{hybrid_cnn_vit_forward.1} parent=11 // pred_check_branch
        %868 = sbr.rel (%p866) target = $region88
      $region87: #{hybrid_cnn_vit_forward.1} parent=11 // pred_region
        _
      $region88: #{hybrid_cnn_vit_forward.1} parent=11 // pred_fallthru
        _
      // Predicated region
      $region89: #{hybrid_cnn_vit_forward.1} parent=11 // pred_check
        %p869 = pneg %p519
      $region90: #{hybrid_cnn_vit_forward.1} parent=11 // pred_check_branch
        %871 = sbr.rel (%p869) target = $region92
      $region91: #{hybrid_cnn_vit_forward.1} parent=11 // pred_region
        _
      $region92: #{hybrid_cnn_vit_forward.1} parent=11 // pred_fallthru
        _
      // Predicated region
      $region93: #{hybrid_cnn_vit_forward.1} parent=11 // pred_check
        %p872 = pneg %p540
      $region94: #{hybrid_cnn_vit_forward.1} parent=11 // pred_check_branch
        %874 = sbr.rel (%p872) target = $region96
      $region95: #{hybrid_cnn_vit_forward.1} parent=11 // pred_region
        _
      $region96: #{hybrid_cnn_vit_forward.1} parent=11 // pred_fallthru
        _
      // Predicated region
      $region97: #{hybrid_cnn_vit_forward.1} parent=11 // pred_check
        %p875 = pneg %p561
      $region98: #{hybrid_cnn_vit_forward.1} parent=11 // pred_check_branch
        %877 = sbr.rel (%p875) target = $region100
      $region99: #{hybrid_cnn_vit_forward.1} parent=11 // pred_region
        _
      $region100: #{hybrid_cnn_vit_forward.1} parent=11 // pred_fallthru
        _
      // Predicated region
      $region101: #{hybrid_cnn_vit_forward.1} parent=11 // pred_check
        %p878 = pneg %p582
      $region102: #{hybrid_cnn_vit_forward.1} parent=11 // pred_check_branch
        %880 = sbr.rel (%p878) target = $region104
      $region103: #{hybrid_cnn_vit_forward.1} parent=11 // pred_region
        _
      $region104: #{hybrid_cnn_vit_forward.1} parent=11 // pred_fallthru
        _
      // Predicated region
      $region105: #{hybrid_cnn_vit_forward.1} parent=11 // pred_check
        %p881 = pneg %p603
      $region106: #{hybrid_cnn_vit_forward.1} parent=11 // pred_check_branch
        %883 = sbr.rel (%p881) target = $region108
      $region107: #{hybrid_cnn_vit_forward.1} parent=11 // pred_region
        _
      $region108: #{hybrid_cnn_vit_forward.1} parent=11 // pred_fallthru
        _
      // Predicated region
      $region109: #{hybrid_cnn_vit_forward.1} parent=11 // pred_check
        %p884 = pneg %p624
      $region110: #{hybrid_cnn_vit_forward.1} parent=11 // pred_check_branch
        %886 = sbr.rel (%p884) target = $region112
      $region111: #{hybrid_cnn_vit_forward.1} parent=11 // pred_region
        _
      $region112: #{hybrid_cnn_vit_forward.1} parent=11 // pred_fallthru
        _
      // Predicated region
      $region113: #{hybrid_cnn_vit_forward.1} parent=11 // pred_check
        %p887 = pneg %p645
      $region114: #{hybrid_cnn_vit_forward.1} parent=11 // pred_check_branch
        %889 = sbr.rel (%p887) target = $region116
      $region115: #{hybrid_cnn_vit_forward.1} parent=11 // pred_region
        _
      $region116: #{hybrid_cnn_vit_forward.1} parent=11 // pred_fallthru
        _
      // Predicated region
      $region117: #{hybrid_cnn_vit_forward.1} parent=11 // pred_check
        %p890 = pneg %p666
      $region118: #{hybrid_cnn_vit_forward.1} parent=11 // pred_check_branch
        %892 = sbr.rel (%p890) target = $region120
      $region119: #{hybrid_cnn_vit_forward.1} parent=11 // pred_region
        _
      $region120: #{hybrid_cnn_vit_forward.1} parent=11 // pred_fallthru
        _
      // Predicated region
      $region121: #{hybrid_cnn_vit_forward.1} parent=11 // pred_check
        %p893 = pneg %p687
      $region122: #{hybrid_cnn_vit_forward.1} parent=11 // pred_check_branch
        %895 = sbr.rel (%p893) target = $region124
      $region123: #{hybrid_cnn_vit_forward.1} parent=11 // pred_region
        _
      $region124: #{hybrid_cnn_vit_forward.1} parent=11 // pred_fallthru
        _
      // Predicated region
      $region125: #{hybrid_cnn_vit_forward.1} parent=11 // pred_check
        %p896 = pneg %p708
      $region126: #{hybrid_cnn_vit_forward.1} parent=11 // pred_check_branch
        %898 = sbr.rel (%p896) target = $region128
      $region127: #{hybrid_cnn_vit_forward.1} parent=11 // pred_region
        _
      $region128: #{hybrid_cnn_vit_forward.1} parent=11 // pred_fallthru
        _
      // Predicated region
      $region129: #{hybrid_cnn_vit_forward.1} parent=11 // pred_check
        %p899 = pneg %p729
      $region130: #{hybrid_cnn_vit_forward.1} parent=11 // pred_check_branch
        %901 = sbr.rel (%p899) target = $region132
      $region131: #{hybrid_cnn_vit_forward.1} parent=11 // pred_region
        _
      $region132: #{hybrid_cnn_vit_forward.1} parent=11 // pred_fallthru
        _
      // Predicated region
      $region133: #{hybrid_cnn_vit_forward.1} parent=11 // pred_check
        %p902 = pneg %p750
      $region134: #{hybrid_cnn_vit_forward.1} parent=11 // pred_check_branch
        %904 = sbr.rel (%p902) target = $region136
      $region135: #{hybrid_cnn_vit_forward.1} parent=11 // pred_region
        _
      $region136: #{hybrid_cnn_vit_forward.1} parent=11 // pred_fallthru
        _
      // Predicated region
      $region137: #{hybrid_cnn_vit_forward.1} parent=11 // pred_check
        %p905 = pneg %p771
      $region138: #{hybrid_cnn_vit_forward.1} parent=11 // pred_check_branch
        %907 = sbr.rel (%p905) target = $region140
      $region139: #{hybrid_cnn_vit_forward.1} parent=11 // pred_region
        _
      $region140: #{hybrid_cnn_vit_forward.1} parent=11 // pred_fallthru
        _
    $region12: #{hybrid_cnn_vit_forward.1} parent=5 // pred_fallthru
      _
    %p908 = scmp.lt.s32.totalorder %s73, 2
    // Predicated region
    $region141: #{hybrid_cnn_vit_forward.1} parent=5 // pred_check
      %p909 = pneg %p908
    $region142: #{hybrid_cnn_vit_forward.1} parent=5 // pred_check_branch
      %911 = sbr.rel (%p909) target = $region144
    $region143: #{hybrid_cnn_vit_forward.1} parent=5 // pred_region
      // Predicated region
      $region145: #{hybrid_cnn_vit_forward.1} parent=143 // pred_check
        %p912 = pneg %p93
      $region146: #{hybrid_cnn_vit_forward.1} parent=143 // pred_check_branch
        %914 = sbr.rel (%p912) target = $region148
      $region147: #{hybrid_cnn_vit_forward.1} parent=143 // pred_region
        %s915 = smul.u32 8, %s73
        %p916 = scmp.lt.s32.totalorder %s915, 15
        %s917 = scalar_select %p916, %s915, 15
        %s918 = smul.addr %s917, 4
        %s919 = scalar_lea.vmem %s1, %s918
        %s920 = smul.u32 8, %s73
      $region148: #{hybrid_cnn_vit_forward.1} parent=143 // pred_fallthru
        _
    $region144: #{hybrid_cnn_vit_forward.1} parent=5 // pred_fallthru
      _
    %p921 = scmp.le.s32.totalorder 1, %s73
    %p922 = scmp.lt.s32.totalorder %s73, 3
    %p923 = pnand %p921, %p922
    %p924 = pneg %p923
    // Predicated region
    $region149: #{hybrid_cnn_vit_forward.1} parent=5 // pred_check
      _
    $region150: #{hybrid_cnn_vit_forward.1} parent=5 // pred_check_branch
      %926 = sbr.rel (%p923) target = $region152
    $region151: #{hybrid_cnn_vit_forward.1} parent=5 // pred_region
      %s927 = ssub.s32 %s73, 1
      %s928 = smul.u32 8, %s78
      %p929 = scmp.lt.s32.totalorder %s928, 15
      %s930 = scalar_select %p929, %s928, 15
      %s931 = smul.addr %s930, 4
      %s932 = scalar_lea.vmem %s1, %s931
      %p933 = pneg %p99
      %p934 = pneg %p96
      %p935 = pneg %p120
      %p936 = pneg %p117
      %p937 = pneg %p141
      %p938 = pneg %p138
      %p939 = pneg %p162
      %p940 = pneg %p159
      %p941 = pneg %p183
      %p942 = pneg %p180
      %p943 = pneg %p204
      %p944 = pneg %p201
      %p945 = pneg %p225
      %p946 = pneg %p222
      %p947 = pneg %p246
      %p948 = pneg %p243
      %p949 = pneg %p267
      %p950 = pneg %p264
      %p951 = pneg %p288
      %p952 = pneg %p285
      %p953 = pneg %p309
      %p954 = pneg %p306
      %p955 = pneg %p330
      %p956 = pneg %p327
      %p957 = pneg %p351
      %p958 = pneg %p348
      %p959 = pneg %p372
      %p960 = pneg %p369
      %p961 = pneg %p393
      %p962 = pneg %p390
      %p963 = pneg %p414
      %p964 = pneg %p411
      %p965 = pneg %p435
      %p966 = pneg %p432
      %p967 = pneg %p456
      %p968 = pneg %p453
      %p969 = pneg %p477
      %p970 = pneg %p474
      %p971 = pneg %p498
      %p972 = pneg %p495
      %p973 = pneg %p519
      %p974 = pneg %p516
      %p975 = pneg %p540
      %p976 = pneg %p537
      %p977 = pneg %p561
      %p978 = pneg %p558
      %p979 = pneg %p582
      %p980 = pneg %p579
      %p981 = pneg %p603
      %p982 = pneg %p600
      %p983 = pneg %p624
      %p984 = pneg %p621
      %p985 = pneg %p645
      %p986 = pneg %p642
      %p987 = pneg %p666
      %p988 = pneg %p663
      %p989 = pneg %p687
      %p990 = pneg %p684
      %p991 = pneg %p708
      %p992 = pneg %p705
      %p993 = pneg %p729
      %p994 = pneg %p726
      %p995 = pneg %p750
      %p996 = pneg %p747
      %p997 = pneg %p771
      %p998 = pneg %p768
      %p999 = pneg %p797
      %p1000 = pneg %p794
      %s1001 = smul.u32 4, %s78
      %p1002 = scmp.lt.s32.totalorder %s1001, 7
      %s1003 = scalar_select %p1002, %s1001, 7
      %s1004 = smul.addr %s1003, 8
      %s1005 = scalar_lea.vmem %s67, %s1004
      %s1006 = smul.u32 8, %s78
      %p1007 = scmp.lt.s32.totalorder %s1006, 15
      %s1008 = scalar_select %p1007, %s1006, 15
      %s1009 = smul.addr %s1008, 4
      %s1010 = scalar_lea.vmem %s1, %s1009
      %s1011 = smul.u32 8, %s78
      %s1012 = smul.u32 4, %s78
      %p1013 = scmp.lt.s32.totalorder %s1012, 7
      %s1014 = scalar_select %p1013, %s1012, 7
      %s1015 = smul.addr %s1014, 8
      %s1016 = scalar_lea.vmem %s67, %s1015
      %s1017 = smul.u32 4, %s78
      %v1019 = vld [vmem:[%s1010] sm:$0xf]
      %v1020 = vld [vmem:[%s1010 + $0x4] sm:$0xf]
      %v1021 = vld [vmem:[%s1010 + $0x8] sm:$0xf]
      %v1022 = vld [vmem:[%s1010 + $0xc] sm:$0xf]
      %v1023 = vld [vmem:[%s1010 + $0x10] sm:$0xf]
      %v1024 = vld [vmem:[%s1010 + $0x14] sm:$0xf]
      %v1025 = vld [vmem:[%s1010 + $0x18] sm:$0xf]
      %v1026 = vld [vmem:[%s1010 + $0x1c] sm:$0xf]
      %v1027 = vld [vmem:[%s3] sm:$0xf]
      %v1028 = vld [vmem:[%s3 + $0x4] sm:$0xf]
      %v1029 = vld [vmem:[%s3 + $0x8] sm:$0xf]
      %v1030 = vld [vmem:[%s3 + $0xc] sm:$0xf]
      %v1031 = vld [vmem:[%s5] sm:$0x1]
      %v1033 = vlaneseq
      %v1034 = vshrl.u32 %v1033, 7
      %v1035 = vsub.s32 0, %v1034
      %v1036 = vrot.slane %v1031, %v1035
      %v1046 = vunpack.c.l.b16 %v1019
      %v1047 = vunpack.c.l.b16 %v1020
      %v1048 = vunpack.c.l.b16 %v1021
      %v1049 = vunpack.c.l.b16 %v1022
      %v1050 = vunpack.c.l.b16 %v1023
      %v1051 = vunpack.c.l.b16 %v1024
      %v1052 = vunpack.c.l.b16 %v1025
      %v1053 = vunpack.c.l.b16 %v1026
      %v1054 = vpack.c.b16 %v1047, %v1046
      %v1055 = vpack.c.b16 %v1049, %v1048
      %v1056 = vpack.c.b16 %v1051, %v1050
      %v1057 = vpack.c.b16 %v1053, %v1052
      %v1062 = vunpack.c.l.b16 %v1027
      %v1063 = vunpack.c.l.b16 %v1028
      %v1064 = vunpack.c.l.b16 %v1029
      %v1065 = vunpack.c.l.b16 %v1030
      %v1066 = vpack.c.b16 %v1063, %v1062
      %v1067 = vpack.c.b16 %v1065, %v1064
      %vm1070 = vcmask 261120
      %v1072 = vsel %vm1070, %v1054, 0
      %v1075 = vsel %vm1070, %v1055, 0
      %v1078 = vsel %vm1070, %v1056, 0
      %v1081 = vsel %vm1070, %v1057, 0
      %1083 = vmatprep.subr.bf16.mxu0 0
      %1084 = vmatpush1.bf16.msra.mxu0 0
      %1085 = vmatprep.subr.bf16.mxu0 0
      %1086 = vmatpush1.bf16.msra.mxu0 0
      %1087 = vmatprep.subr.bf16.mxu0 0
      %1088 = vmatpush1.bf16.msra.mxu0 0
      %1089 = vmatprep.subr.bf16.mxu0 0
      %1090 = vmatpush1.bf16.msra.mxu0 0
      %1091 = vmatprep.subr.bf16.mxu0 0
      %1092 = vmatpush1.bf16.msra.mxu0 0
      %1093 = vmatprep.subr.bf16.mxu0 0
      %1094 = vmatpush1.bf16.msra.mxu0 0
      %1095 = vmatprep.subr.bf16.mxu0 0
      %1096 = vmatpush1.bf16.msra.mxu0 %v1067
      %1097 = vmatprep.subr.bf16.mxu0 0
      %1098 = vmatpush1.bf16.msra.mxu0 %v1066
      %1099 = vmatprep.subr.bf16.mxu0 0
      %1100 = vmatpush2.bf16.msra.mxu0 0
      %1101 = vmatprep.subr.bf16.mxu0 0
      %1102 = vmatpush2.bf16.msra.mxu0 0
      %1103 = vmatprep.subr.bf16.mxu0 0
      %1104 = vmatpush2.bf16.msra.mxu0 0
      %1105 = vmatprep.subr.bf16.mxu0 0
      %1106 = vmatpush2.bf16.msra.mxu0 0
      %1107 = vmatprep.subr.bf16.mxu0 0
      %1108 = vmatpush2.bf16.msra.mxu0 0
      %1109 = vmatprep.subr.bf16.mxu0 0
      %1110 = vmatpush2.bf16.msra.mxu0 0
      %1111 = vmatprep.subr.bf16.mxu0 0
      %1112 = vmatpush2.bf16.msra.mxu0 0
      %1113 = vmatprep.subr.bf16.mxu0 0
      %1114 = vmatpush2.bf16.msra.mxu0 0
      %1115 = vmatprep.mubr.bf16.mxu0 0
      %1116 = vmatmul.mubr.bf16.gmra.mxu0 %v1072
      %v1117 = vpop.f32.mrf.mxu0
      %v1118 = vadd.f32 %v1036, %v1117
      %v1119 = vpop.f32.mrf.mxu0
      %v1120 = vpop.f32.mrf.mxu0
      %v1121 = vadd.f32 %v1036, %v1120
      %v1122 = vpop.f32.mrf.mxu0
      %1123 = vmatprep.mubr.bf16.mxu0 0
      %1124 = vmatmul.mubr.bf16.gmra.mxu0 %v1075
      %v1125 = vpop.f32.mrf.mxu0
      %v1126 = vadd.f32 %v1036, %v1125
      %v1127 = vpop.f32.mrf.mxu0
      %v1128 = vpop.f32.mrf.mxu0
      %v1129 = vadd.f32 %v1036, %v1128
      %v1130 = vpop.f32.mrf.mxu0
      %1131 = vmatprep.mubr.bf16.mxu0 0
      %1132 = vmatmul.mubr.bf16.gmra.mxu0 %v1078
      %v1133 = vpop.f32.mrf.mxu0
      %v1134 = vadd.f32 %v1036, %v1133
      %v1135 = vpop.f32.mrf.mxu0
      %v1136 = vpop.f32.mrf.mxu0
      %v1137 = vadd.f32 %v1036, %v1136
      %v1138 = vpop.f32.mrf.mxu0
      %1139 = vmatprep.mubr.bf16.mxu0 0
      %1140 = vmatmul.mubr.bf16.gmra.mxu0 %v1081
      %v1141 = vpop.f32.mrf.mxu0
      %v1142 = vadd.f32 %v1036, %v1141
      %v1143 = vpop.f32.mrf.mxu0
      %v1144 = vpop.f32.mrf.mxu0
      %v1145 = vadd.f32 %v1036, %v1144
      %v1146 = vpop.f32.mrf.mxu0
      %1147 = vdwg.mxu0
      %v1148 = vmax.f32 %v1118, 0.0
      %v1149 = vmax.f32 %v1121, 0.0
      %v1150 = vmax.f32 %v1126, 0.0
      %v1151 = vmax.f32 %v1129, 0.0
      %v1152 = vmax.f32 %v1134, 0.0
      %v1153 = vmax.f32 %v1137, 0.0
      %v1154 = vmax.f32 %v1142, 0.0
      %v1155 = vmax.f32 %v1145, 0.0
      %v1156 = vld [vmem:[%s7] sm:$0xf]
      %v1157 = vld [vmem:[%s7 + $0x4] sm:$0xf]
      %v1158 = vpack.c.bf16 %v1149, %v1148
      %v1159 = vpack.c.bf16 %v1151, %v1150
      %v1160 = vpack.c.bf16 %v1153, %v1152
      %v1161 = vpack.c.bf16 %v1155, %v1154
      %v1164 = vunpack.c.l.b16 %v1156
      %v1165 = vunpack.c.l.b16 %v1157
      %v1166 = vpack.c.b16 %v1165, %v1164
      %vm1167 = vcmask 523264
      %v1169 = vsel %vm1167, %v1166, 0
      %1171 = vmatprep.subr.bf16.mxu0 0
      %1172 = vmatpush1.bf16.msra.mxu0 0
      %1173 = vmatprep.subr.bf16.mxu0 0
      %1174 = vmatpush1.bf16.msra.mxu0 0
      %1175 = vmatprep.subr.bf16.mxu0 0
      %1176 = vmatpush1.bf16.msra.mxu0 0
      %1177 = vmatprep.subr.bf16.mxu0 0
      %1178 = vmatpush1.bf16.msra.mxu0 0
      %1179 = vmatprep.subr.bf16.mxu0 0
      %1180 = vmatpush1.bf16.msra.mxu0 %v1161
      %1181 = vmatprep.subr.bf16.mxu0 0
      %1182 = vmatpush1.bf16.msra.mxu0 %v1160
      %1183 = vmatprep.subr.bf16.mxu0 0
      %1184 = vmatpush1.bf16.msra.mxu0 %v1159
      %1185 = vmatprep.subr.bf16.mxu0 0
      %1186 = vmatpush1.bf16.msra.mxu0 %v1158
      %1187 = vmatprep.subr.bf16.mxu0 0
      %1188 = vmatpush2.bf16.msra.mxu0 0
      %1189 = vmatprep.subr.bf16.mxu0 0
      %1190 = vmatpush2.bf16.msra.mxu0 0
      %1191 = vmatprep.subr.bf16.mxu0 0
      %1192 = vmatpush2.bf16.msra.mxu0 0
      %1193 = vmatprep.subr.bf16.mxu0 0
      %1194 = vmatpush2.bf16.msra.mxu0 0
      %1195 = vmatprep.subr.bf16.mxu0 0
      %1196 = vmatpush2.bf16.msra.mxu0 0
      %1197 = vmatprep.subr.bf16.mxu0 0
      %1198 = vmatpush2.bf16.msra.mxu0 0
      %1199 = vmatprep.subr.bf16.mxu0 0
      %1200 = vmatpush2.bf16.msra.mxu0 0
      %1201 = vmatprep.subr.bf16.mxu0 0
      %1202 = vmatpush2.bf16.msra.mxu0 0
      %1203 = vmatprep.mubr.bf16.mxu0 0
      %1204 = vmatmul.mubr.bf16.gmra.mxu0 %v1169
      %v1205 = vpop.f32.mrf.mxu0
      %v1206 = vadd.f32 0.0, %v1205
      %v1207 = vpop.f32.mrf.mxu0
      %v1208 = vpop.f32.mrf.mxu0
      %v1209 = vadd.f32 0.0, %v1208
      %v1210 = vpop.f32.mrf.mxu0
      %1211 = vdwg.mxu0
      %v1212 = vld [vmem:[%s9] sm:$0xf]
      %v1213 = vld [vmem:[%s9 + $0x4] sm:$0xf]
      %v1214 = vld [vmem:[%s9 + $0x8] sm:$0xf]
      %v1215 = vld [vmem:[%s9 + $0xc] sm:$0xf]
      %v1216 = vpack.c.bf16 %v1209, %v1206
      %v1221 = vunpack.c.l.b16 %v1212
      %v1222 = vunpack.c.l.b16 %v1213
      %v1223 = vunpack.c.l.b16 %v1214
      %v1224 = vunpack.c.l.b16 %v1215
      %v1225 = vpack.c.b16 %v1222, %v1221
      %v1226 = vpack.c.b16 %v1224, %v1223
      %v1230 = vsel %vm1070, %v1216, 0
      %1232 = vmatprep.subr.bf16.mxu0 0
      %1233 = vmatpush1.bf16.msra.mxu0 0
      %1234 = vmatprep.subr.bf16.mxu0 0
      %1235 = vmatpush1.bf16.msra.mxu0 0
      %1236 = vmatprep.subr.bf16.mxu0 0
      %1237 = vmatpush1.bf16.msra.mxu0 0
      %1238 = vmatprep.subr.bf16.mxu0 0
      %1239 = vmatpush1.bf16.msra.mxu0 0
      %1240 = vmatprep.subr.bf16.mxu0 0
      %1241 = vmatpush1.bf16.msra.mxu0 0
      %1242 = vmatprep.subr.bf16.mxu0 0
      %1243 = vmatpush1.bf16.msra.mxu0 0
      %1244 = vmatprep.subr.bf16.mxu0 0
      %1245 = vmatpush1.bf16.msra.mxu0 %v1226
      %1246 = vmatprep.subr.bf16.mxu0 0
      %1247 = vmatpush1.bf16.msra.mxu0 %v1225
      %1248 = vmatprep.subr.bf16.mxu0 0
      %1249 = vmatpush2.bf16.msra.mxu0 0
      %1250 = vmatprep.subr.bf16.mxu0 0
      %1251 = vmatpush2.bf16.msra.mxu0 0
      %1252 = vmatprep.subr.bf16.mxu0 0
      %1253 = vmatpush2.bf16.msra.mxu0 0
      %1254 = vmatprep.subr.bf16.mxu0 0
      %1255 = vmatpush2.bf16.msra.mxu0 0
      %1256 = vmatprep.subr.bf16.mxu0 0
      %1257 = vmatpush2.bf16.msra.mxu0 0
      %1258 = vmatprep.subr.bf16.mxu0 0
      %1259 = vmatpush2.bf16.msra.mxu0 0
      %1260 = vmatprep.subr.bf16.mxu0 0
      %1261 = vmatpush2.bf16.msra.mxu0 0
      %1262 = vmatprep.subr.bf16.mxu0 0
      %1263 = vmatpush2.bf16.msra.mxu0 0
      %1264 = vmatprep.mubr.bf16.mxu0 0
      %1265 = vmatmul.mubr.bf16.gmra.mxu0 %v1230
      %v1266 = vpop.f32.mrf.mxu0
      %v1267 = vadd.f32 0.0, %v1266
      %v1268 = vpop.f32.mrf.mxu0
      %v1269 = vpop.f32.mrf.mxu0
      %v1270 = vadd.f32 0.0, %v1269
      %v1271 = vpop.f32.mrf.mxu0
      %1272 = vdwg.mxu0
      %v1273 = vld [vmem:[%s11] sm:$0xf]
      %v1274 = vld [vmem:[%s11 + $0x4] sm:$0xf]
      %v1275 = vld [vmem:[%s11 + $0x8] sm:$0xf]
      %v1276 = vld [vmem:[%s11 + $0xc] sm:$0xf]
      %v1277 = vpack.c.bf16 %v1270, %v1267
      %v1278 = vld [vmem:[%s13] sm:$0xff]
      %v1279 = vld [vmem:[%s13 + $0x8] sm:$0xff]
      %v1280 = vld [vmem:[%s13 + $0x10] sm:$0xff]
      %v1281 = vld [vmem:[%s13 + $0x18] sm:$0xff]
      %v1286 = vunpack.c.l.b16 %v1273
      %v1287 = vunpack.c.l.b16 %v1274
      %v1288 = vunpack.c.l.b16 %v1275
      %v1289 = vunpack.c.l.b16 %v1276
      %v1290 = vpack.c.b16 %v1287, %v1286
      %v1291 = vpack.c.b16 %v1289, %v1288
      %vm1292 = vcmask 130048
      %v1294 = vsel %vm1292, %v1290, 0
      %v1297 = vsel %vm1292, %v1291, 0
      %1299 = vmatprep.subr.bf16.mxu0 0
      %1300 = vmatpush1.bf16.msra.mxu0 0
      %1301 = vmatprep.subr.bf16.mxu0 0
      %1302 = vmatpush1.bf16.msra.mxu0 0
      %1303 = vmatprep.subr.bf16.mxu0 0
      %1304 = vmatpush1.bf16.msra.mxu0 0
      %1305 = vmatprep.subr.bf16.mxu0 0
      %1306 = vmatpush1.bf16.msra.mxu0 0
      %1307 = vmatprep.subr.bf16.mxu0 0
      %1308 = vmatpush1.bf16.msra.mxu0 0
      %1309 = vmatprep.subr.bf16.mxu0 0
      %1310 = vmatpush1.bf16.msra.mxu0 0
      %1311 = vmatprep.subr.bf16.mxu0 0
      %1312 = vmatpush1.bf16.msra.mxu0 0
      %1313 = vmatprep.subr.bf16.mxu0 0
      %1314 = vmatpush1.bf16.msra.mxu0 %v1277
      %1315 = vmatprep.subr.bf16.mxu0 0
      %1316 = vmatpush2.bf16.msra.mxu0 0
      %1317 = vmatprep.subr.bf16.mxu0 0
      %1318 = vmatpush2.bf16.msra.mxu0 0
      %1319 = vmatprep.subr.bf16.mxu0 0
      %1320 = vmatpush2.bf16.msra.mxu0 0
      %1321 = vmatprep.subr.bf16.mxu0 0
      %1322 = vmatpush2.bf16.msra.mxu0 0
      %1323 = vmatprep.subr.bf16.mxu0 0
      %1324 = vmatpush2.bf16.msra.mxu0 0
      %1325 = vmatprep.subr.bf16.mxu0 0
      %1326 = vmatpush2.bf16.msra.mxu0 0
      %1327 = vmatprep.subr.bf16.mxu0 0
      %1328 = vmatpush2.bf16.msra.mxu0 0
      %1329 = vmatprep.subr.bf16.mxu0 0
      %1330 = vmatpush2.bf16.msra.mxu0 0
      %1331 = vmatprep.mubr.bf16.mxu0 0
      %1332 = vmatmul.mubr.bf16.gmra.mxu0 %v1294
      %v1333 = vpop.f32.mrf.mxu0
      %v1334 = vadd.f32 %v1278, %v1333
      %v1335 = vpop.f32.mrf.mxu0
      %v1336 = vpop.f32.mrf.mxu0
      %v1337 = vadd.f32 %v1279, %v1336
      %v1338 = vpop.f32.mrf.mxu0
      %1339 = vmatprep.mubr.bf16.mxu0 0
      %1340 = vmatmul.mubr.bf16.gmra.mxu0 %v1297
      %v1341 = vpop.f32.mrf.mxu0
      %v1342 = vadd.f32 %v1280, %v1341
      %v1343 = vpop.f32.mrf.mxu0
      %v1344 = vpop.f32.mrf.mxu0
      %v1345 = vadd.f32 %v1281, %v1344
      %v1346 = vpop.f32.mrf.mxu0
      %1347 = vdwg.mxu0
      %v1348 = vld [vmem:[%s15] sm:$0x1]
      %v1349 = vld [vmem:[%s17] sm:$0x1]
      %v1350 = vsel %vm1070, %v1334, 0.0
      %1351 = vadd.xlane.f32.xlu0 %v1350
      %v1352 = vpop.xlane.xlu0 %1351
      %v1353 = vsel %vm1070, %v1337, 0.0
      %1354 = vadd.xlane.f32.xlu0 %v1353
      %v1355 = vpop.xlane.xlu0 %1354
      %v1356 = vsel %vm1070, %v1342, 0.0
      %1357 = vadd.xlane.f32.xlu0 %v1356
      %v1358 = vpop.xlane.xlu0 %1357
      %v1359 = vsel %vm1070, %v1345, 0.0
      %1360 = vadd.xlane.f32.xlu0 %v1359
      %v1361 = vpop.xlane.xlu0 %1360
      %v1362 = vrcp.pop 32.0
      %v1363 = vmul.f32 %v1352, %v1362
      %v1364 = vmul.f32 %v1355, %v1362
      %v1365 = vmul.f32 %v1358, %v1362
      %v1366 = vmul.f32 %v1361, %v1362
      %v1367 = vsub.f32 %v1334, %v1363
      %v1368 = vsub.f32 %v1337, %v1364
      %v1369 = vsub.f32 %v1342, %v1365
      %v1370 = vsub.f32 %v1345, %v1366
      %v1371 = vmul.f32 %v1367, %v1367
      %v1372 = vmul.f32 %v1368, %v1368
      %v1373 = vmul.f32 %v1369, %v1369
      %v1374 = vmul.f32 %v1370, %v1370
      %v1375 = vsel %vm1070, %v1371, 0.0
      %1376 = vadd.xlane.f32.xlu0 %v1375
      %v1377 = vpop.xlane.xlu0 %1376
      %v1378 = vsel %vm1070, %v1372, 0.0
      %1379 = vadd.xlane.f32.xlu0 %v1378
      %v1380 = vpop.xlane.xlu0 %1379
      %v1381 = vsel %vm1070, %v1373, 0.0
      %1382 = vadd.xlane.f32.xlu0 %v1381
      %v1383 = vpop.xlane.xlu0 %1382
      %v1384 = vsel %vm1070, %v1374, 0.0
      %1385 = vadd.xlane.f32.xlu0 %v1384
      %v1386 = vpop.xlane.xlu0 %1385
      %v1387 = vmul.f32 %v1377, %v1362
      %v1388 = vmul.f32 %v1380, %v1362
      %v1389 = vmul.f32 %v1383, %v1362
      %v1390 = vmul.f32 %v1386, %v1362
      %v1391 = vadd.f32 %v1387, 1e-05
      %v1392 = vadd.f32 %v1388, 1e-05
      %v1393 = vadd.f32 %v1389, 1e-05
      %v1394 = vadd.f32 %v1390, 1e-05
      %v1395 = vrsqrt.pop %v1391
      %v1396 = vrsqrt.pop %v1392
      %v1397 = vrsqrt.pop %v1393
      %v1398 = vrsqrt.pop %v1394
      %v1399 = vmul.f32 %v1367, %v1395
      %v1400 = vmul.f32 %v1368, %v1396
      %v1401 = vmul.f32 %v1369, %v1397
      %v1402 = vmul.f32 %v1370, %v1398
      %v1404 = vlaneseq
      %v1405 = vshrl.u32 %v1404, 7
      %v1406 = vsub.s32 0, %v1405
      %v1407 = vrot.slane %v1348, %v1406
      %v1409 = vmul.f32 %v1399, %v1407
      %v1410 = vmul.f32 %v1400, %v1407
      %v1411 = vmul.f32 %v1401, %v1407
      %v1412 = vmul.f32 %v1402, %v1407
      %v1414 = vlaneseq
      %v1415 = vshrl.u32 %v1414, 7
      %v1416 = vsub.s32 0, %v1415
      %v1417 = vrot.slane %v1349, %v1416
      %v1419 = vadd.f32 %v1409, %v1417
      %v1420 = vadd.f32 %v1410, %v1417
      %v1421 = vadd.f32 %v1411, %v1417
      %v1422 = vadd.f32 %v1412, %v1417
      %v1423 = vpack.c.bf16 %v1420, %v1419
      %v1424 = vpack.c.bf16 %v1422, %v1421
      %v1425 = vld [vmem:[%s19] sm:$0xf]
      %v1426 = vld [vmem:[%s19 + $0x4] sm:$0xf]
      %v1427 = vld [vmem:[%s19 + $0x8] sm:$0xf]
      %v1428 = vld [vmem:[%s19 + $0xc] sm:$0xf]
      %v1429 = vld [vmem:[%s21] sm:$0x1]
      %v1431 = vlaneseq
      %v1432 = vshrl.u32 %v1431, 7
      %v1433 = vsub.s32 0, %v1432
      %v1434 = vrot.slane %v1429, %v1433
      %v1440 = vunpack.c.l.b16 %v1425
      %v1441 = vunpack.c.l.b16 %v1426
      %v1442 = vunpack.c.l.b16 %v1427
      %v1443 = vunpack.c.l.b16 %v1428
      %v1444 = vpack.c.b16 %v1441, %v1440
      %v1445 = vpack.c.b16 %v1443, %v1442
      %v1449 = vsel %vm1070, %v1423, 0
      %v1452 = vsel %vm1070, %v1424, 0
      %1454 = vmatprep.subr.bf16.mxu0 0
      %1455 = vmatpush1.bf16.msra.mxu0 0
      %1456 = vmatprep.subr.bf16.mxu0 0
      %1457 = vmatpush1.bf16.msra.mxu0 0
      %1458 = vmatprep.subr.bf16.mxu0 0
      %1459 = vmatpush1.bf16.msra.mxu0 0
      %1460 = vmatprep.subr.bf16.mxu0 0
      %1461 = vmatpush1.bf16.msra.mxu0 0
      %1462 = vmatprep.subr.bf16.mxu0 0
      %1463 = vmatpush1.bf16.msra.mxu0 0
      %1464 = vmatprep.subr.bf16.mxu0 0
      %1465 = vmatpush1.bf16.msra.mxu0 0
      %1466 = vmatprep.subr.bf16.mxu0 0
      %1467 = vmatpush1.bf16.msra.mxu0 %v1445
      %1468 = vmatprep.subr.bf16.mxu0 0
      %1469 = vmatpush1.bf16.msra.mxu0 %v1444
      %1470 = vmatprep.subr.bf16.mxu0 0
      %1471 = vmatpush2.bf16.msra.mxu0 0
      %1472 = vmatprep.subr.bf16.mxu0 0
      %1473 = vmatpush2.bf16.msra.mxu0 0
      %1474 = vmatprep.subr.bf16.mxu0 0
      %1475 = vmatpush2.bf16.msra.mxu0 0
      %1476 = vmatprep.subr.bf16.mxu0 0
      %1477 = vmatpush2.bf16.msra.mxu0 0
      %1478 = vmatprep.subr.bf16.mxu0 0
      %1479 = vmatpush2.bf16.msra.mxu0 0
      %1480 = vmatprep.subr.bf16.mxu0 0
      %1481 = vmatpush2.bf16.msra.mxu0 0
      %1482 = vmatprep.subr.bf16.mxu0 0
      %1483 = vmatpush2.bf16.msra.mxu0 0
      %1484 = vmatprep.subr.bf16.mxu0 0
      %1485 = vmatpush2.bf16.msra.mxu0 0
      %1486 = vmatprep.mubr.bf16.mxu0 0
      %1487 = vmatmul.mubr.bf16.gmra.mxu0 %v1449
      %v1488 = vpop.f32.mrf.mxu0
      %v1489 = vadd.f32 %v1434, %v1488
      %v1490 = vpop.f32.mrf.mxu0
      %v1491 = vpop.f32.mrf.mxu0
      %v1492 = vadd.f32 %v1434, %v1491
      %v1493 = vpop.f32.mrf.mxu0
      %1494 = vmatprep.mubr.bf16.mxu0 0
      %1495 = vmatmul.mubr.bf16.gmra.mxu0 %v1452
      %v1496 = vpop.f32.mrf.mxu0
      %v1497 = vadd.f32 %v1434, %v1496
      %v1498 = vpop.f32.mrf.mxu0
      %v1499 = vpop.f32.mrf.mxu0
      %v1500 = vadd.f32 %v1434, %v1499
      %v1501 = vpop.f32.mrf.mxu0
      %1502 = vdwg.mxu0
      %v1503 = vld [vmem:[%s23] sm:$0xf]
      %v1504 = vld [vmem:[%s23 + $0x4] sm:$0xf]
      %v1505 = vld [vmem:[%s23 + $0x8] sm:$0xf]
      %v1506 = vld [vmem:[%s23 + $0xc] sm:$0xf]
      %v1507 = vld [vmem:[%s25] sm:$0xff]
      %v1508 = vld [vmem:[%s25 + $0x8] sm:$0xff]
      %v1509 = vld [vmem:[%s25 + $0x10] sm:$0xff]
      %v1510 = vld [vmem:[%s25 + $0x18] sm:$0xff]
      %1512 = vset.pattern.permute.xlu0 0
      %1513 = vperm.xlu0 %1512, %v1507
      %v1514 = vpop.permute.xlu0 %1513
      %1517 = vset.pattern.permute.xlu0 0
      %1518 = vperm.xlu0 %1517, %v1508
      %v1519 = vpop.permute.xlu0 %1518
      %1522 = vset.pattern.permute.xlu0 0
      %1523 = vperm.xlu0 %1522, %v1509
      %v1524 = vpop.permute.xlu0 %1523
      %1527 = vset.pattern.permute.xlu0 0
      %1528 = vperm.xlu0 %1527, %v1510
      %v1529 = vpop.permute.xlu0 %1528
      %v1535 = vunpack.c.l.b16 %v1503
      %v1536 = vunpack.c.l.b16 %v1504
      %v1537 = vunpack.c.l.b16 %v1505
      %v1538 = vunpack.c.l.b16 %v1506
      %v1539 = vpack.c.b16 %v1536, %v1535
      %v1540 = vpack.c.b16 %v1538, %v1537
      %v1542 = vsel %vm1070, %v1539, 0
      %v1545 = vsel %vm1070, %v1540, 0
      %1547 = vmatprep.subr.bf16.mxu0 0
      %1548 = vmatpush1.bf16.xpose.msra.mxu0 0
      %1549 = vmatprep.subr.bf16.mxu0 0
      %1550 = vmatpush1.bf16.xpose.msra.mxu0 0
      %1551 = vmatprep.subr.bf16.mxu0 0
      %1552 = vmatpush1.bf16.xpose.msra.mxu0 0
      %1553 = vmatprep.subr.bf16.mxu0 0
      %1554 = vmatpush1.bf16.xpose.msra.mxu0 0
      %1555 = vmatprep.subr.bf16.mxu0 0
      %1556 = vmatpush1.bf16.xpose.msra.mxu0 0
      %1557 = vmatprep.subr.bf16.mxu0 0
      %1558 = vmatpush1.bf16.xpose.msra.mxu0 0
      %1559 = vmatprep.subr.bf16.mxu0 0
      %1560 = vmatpush1.bf16.xpose.msra.mxu0 %v1452
      %1561 = vmatprep.subr.bf16.mxu0 0
      %1562 = vmatpush1.bf16.xpose.msra.mxu0 %v1449
      %1563 = vmatprep.subr.bf16.mxu0 0
      %1564 = vmatpush2.bf16.xpose.msra.mxu0 0
      %1565 = vmatprep.subr.bf16.mxu0 0
      %1566 = vmatpush2.bf16.xpose.msra.mxu0 0
      %1567 = vmatprep.subr.bf16.mxu0 0
      %1568 = vmatpush2.bf16.xpose.msra.mxu0 0
      %1569 = vmatprep.subr.bf16.mxu0 0
      %1570 = vmatpush2.bf16.xpose.msra.mxu0 0
      %1571 = vmatprep.subr.bf16.mxu0 0
      %1572 = vmatpush2.bf16.xpose.msra.mxu0 0
      %1573 = vmatprep.subr.bf16.mxu0 0
      %1574 = vmatpush2.bf16.xpose.msra.mxu0 0
      %1575 = vmatprep.subr.bf16.mxu0 0
      %1576 = vmatpush2.bf16.xpose.msra.mxu0 0
      %1577 = vmatprep.subr.bf16.mxu0 0
      %1578 = vmatpush2.bf16.xpose.msra.mxu0 0
      %1579 = vmatprep.mubr.bf16.mxu0 0
      %1580 = vmatmul.mubr.bf16.gmra.mxu0 %v1542
      %v1581 = vpop.f32.mrf.mxu0
      %v1582 = vadd.f32 %v1514, %v1581
      %v1583 = vpop.f32.mrf.mxu0
      %v1584 = vpop.f32.mrf.mxu0
      %v1585 = vadd.f32 %v1519, %v1584
      %v1586 = vpop.f32.mrf.mxu0
      %1587 = vmatprep.mubr.bf16.mxu0 0
      %1588 = vmatmul.mubr.bf16.gmra.mxu0 %v1545
      %v1589 = vpop.f32.mrf.mxu0
      %v1590 = vadd.f32 %v1524, %v1589
      %v1591 = vpop.f32.mrf.mxu0
      %v1592 = vpop.f32.mrf.mxu0
      %v1593 = vadd.f32 %v1529, %v1592
      %v1594 = vpop.f32.mrf.mxu0
      %1595 = vdwg.mxu0
      %v1596 = vld [vmem:[%s27] sm:$0xf]
      %v1597 = vld [vmem:[%s27 + $0x4] sm:$0xf]
      %v1598 = vld [vmem:[%s27 + $0x8] sm:$0xf]
      %v1599 = vld [vmem:[%s27 + $0xc] sm:$0xf]
      %v1600 = vld [vmem:[%s29] sm:$0x1]
      %v1602 = vlaneseq
      %v1603 = vshrl.u32 %v1602, 7
      %v1604 = vsub.s32 0, %v1603
      %v1605 = vrot.slane %v1600, %v1604
      %v1611 = vunpack.c.l.b16 %v1596
      %v1612 = vunpack.c.l.b16 %v1597
      %v1613 = vunpack.c.l.b16 %v1598
      %v1614 = vunpack.c.l.b16 %v1599
      %v1615 = vpack.c.b16 %v1612, %v1611
      %v1616 = vpack.c.b16 %v1614, %v1613
      %1619 = vmatprep.subr.bf16.mxu0 0
      %1620 = vmatpush1.bf16.msra.mxu0 0
      %1621 = vmatprep.subr.bf16.mxu0 0
      %1622 = vmatpush1.bf16.msra.mxu0 0
      %1623 = vmatprep.subr.bf16.mxu0 0
      %1624 = vmatpush1.bf16.msra.mxu0 0
      %1625 = vmatprep.subr.bf16.mxu0 0
      %1626 = vmatpush1.bf16.msra.mxu0 0
      %1627 = vmatprep.subr.bf16.mxu0 0
      %1628 = vmatpush1.bf16.msra.mxu0 0
      %1629 = vmatprep.subr.bf16.mxu0 0
      %1630 = vmatpush1.bf16.msra.mxu0 0
      %1631 = vmatprep.subr.bf16.mxu0 0
      %1632 = vmatpush1.bf16.msra.mxu0 %v1616
      %1633 = vmatprep.subr.bf16.mxu0 0
      %1634 = vmatpush1.bf16.msra.mxu0 %v1615
      %1635 = vmatprep.subr.bf16.mxu0 0
      %1636 = vmatpush2.bf16.msra.mxu0 0
      %1637 = vmatprep.subr.bf16.mxu0 0
      %1638 = vmatpush2.bf16.msra.mxu0 0
      %1639 = vmatprep.subr.bf16.mxu0 0
      %1640 = vmatpush2.bf16.msra.mxu0 0
      %1641 = vmatprep.subr.bf16.mxu0 0
      %1642 = vmatpush2.bf16.msra.mxu0 0
      %1643 = vmatprep.subr.bf16.mxu0 0
      %1644 = vmatpush2.bf16.msra.mxu0 0
      %1645 = vmatprep.subr.bf16.mxu0 0
      %1646 = vmatpush2.bf16.msra.mxu0 0
      %1647 = vmatprep.subr.bf16.mxu0 0
      %1648 = vmatpush2.bf16.msra.mxu0 0
      %1649 = vmatprep.subr.bf16.mxu0 0
      %1650 = vmatpush2.bf16.msra.mxu0 0
      %1651 = vmatprep.mubr.bf16.mxu0 0
      %1652 = vmatmul.mubr.bf16.gmra.mxu0 %v1449
      %v1653 = vpop.f32.mrf.mxu0
      %v1654 = vadd.f32 %v1605, %v1653
      %v1655 = vpop.f32.mrf.mxu0
      %v1656 = vpop.f32.mrf.mxu0
      %v1657 = vadd.f32 %v1605, %v1656
      %v1658 = vpop.f32.mrf.mxu0
      %1659 = vmatprep.mubr.bf16.mxu0 0
      %1660 = vmatmul.mubr.bf16.gmra.mxu0 %v1452
      %v1661 = vpop.f32.mrf.mxu0
      %v1662 = vadd.f32 %v1605, %v1661
      %v1663 = vpop.f32.mrf.mxu0
      %v1664 = vpop.f32.mrf.mxu0
      %v1665 = vadd.f32 %v1605, %v1664
      %v1666 = vpop.f32.mrf.mxu0
      %1667 = vdwg.mxu0
      %v1668 = vld [vmem:[%s31] sm:$0xf]
      %v1669 = vld [vmem:[%s31 + $0x4] sm:$0xf]
      %v1670 = vld [vmem:[%s31 + $0x8] sm:$0xf]
      %v1671 = vld [vmem:[%s31 + $0xc] sm:$0xf]
      %v1672 = vpack.c.bf16 %v1585, %v1582
      %v1673 = vpack.c.bf16 %v1593, %v1590
      %v1678 = vunpack.c.l.b16 %v1668
      %v1679 = vunpack.c.l.b16 %v1669
      %v1680 = vunpack.c.l.b16 %v1670
      %v1681 = vunpack.c.l.b16 %v1671
      %v1682 = vpack.c.b16 %v1679, %v1678
      %v1683 = vpack.c.b16 %v1681, %v1680
      %v1687 = vsel %vm1070, %v1672, 0
      %v1690 = vsel %vm1070, %v1673, 0
      %1692 = vmatprep.subr.bf16.mxu0 0
      %1693 = vmatpush1.bf16.msra.mxu0 0
      %1694 = vmatprep.subr.bf16.mxu0 0
      %1695 = vmatpush1.bf16.msra.mxu0 0
      %1696 = vmatprep.subr.bf16.mxu0 0
      %1697 = vmatpush1.bf16.msra.mxu0 0
      %1698 = vmatprep.subr.bf16.mxu0 0
      %1699 = vmatpush1.bf16.msra.mxu0 0
      %1700 = vmatprep.subr.bf16.mxu0 0
      %1701 = vmatpush1.bf16.msra.mxu0 0
      %1702 = vmatprep.subr.bf16.mxu0 0
      %1703 = vmatpush1.bf16.msra.mxu0 0
      %1704 = vmatprep.subr.bf16.mxu0 0
      %1705 = vmatpush1.bf16.msra.mxu0 %v1683
      %1706 = vmatprep.subr.bf16.mxu0 0
      %1707 = vmatpush1.bf16.msra.mxu0 %v1682
      %1708 = vmatprep.subr.bf16.mxu0 0
      %1709 = vmatpush2.bf16.msra.mxu0 0
      %1710 = vmatprep.subr.bf16.mxu0 0
      %1711 = vmatpush2.bf16.msra.mxu0 0
      %1712 = vmatprep.subr.bf16.mxu0 0
      %1713 = vmatpush2.bf16.msra.mxu0 0
      %1714 = vmatprep.subr.bf16.mxu0 0
      %1715 = vmatpush2.bf16.msra.mxu0 0
      %1716 = vmatprep.subr.bf16.mxu0 0
      %1717 = vmatpush2.bf16.msra.mxu0 0
      %1718 = vmatprep.subr.bf16.mxu0 0
      %1719 = vmatpush2.bf16.msra.mxu0 0
      %1720 = vmatprep.subr.bf16.mxu0 0
      %1721 = vmatpush2.bf16.msra.mxu0 0
      %1722 = vmatprep.subr.bf16.mxu0 0
      %1723 = vmatpush2.bf16.msra.mxu0 0
      %1724 = vmatprep.mubr.bf16.mxu0 0
      %1725 = vmatmul.mubr.bf16.gmra.mxu0 %v1687
      %v1726 = vpop.f32.mrf.mxu0
      %v1727 = vadd.f32 0.0, %v1726
      %v1728 = vpop.f32.mrf.mxu0
      %v1729 = vpop.f32.mrf.mxu0
      %v1730 = vadd.f32 0.0, %v1729
      %v1731 = vpop.f32.mrf.mxu0
      %1732 = vmatprep.mubr.bf16.mxu0 0
      %1733 = vmatmul.mubr.bf16.gmra.mxu0 %v1690
      %v1734 = vpop.f32.mrf.mxu0
      %v1735 = vadd.f32 0.0, %v1734
      %v1736 = vpop.f32.mrf.mxu0
      %v1737 = vpop.f32.mrf.mxu0
      %v1738 = vadd.f32 0.0, %v1737
      %v1739 = vpop.f32.mrf.mxu0
      %1740 = vdwg.mxu0
      %v1741 = vld [vmem:[%s33] sm:$0xff]
      %v1742 = vld [vmem:[%s33 + $0x8] sm:$0xff]
      %v1743 = vld [vmem:[%s33 + $0x10] sm:$0xff]
      %v1744 = vld [vmem:[%s33 + $0x18] sm:$0xff]
      %v1745 = vmul.f32 %v1727, %v1741
      %v1746 = vmul.f32 %v1730, %v1742
      %v1747 = vmul.f32 %v1735, %v1743
      %v1748 = vmul.f32 %v1738, %v1744
      %v1749 = vpack.c.bf16 %v1492, %v1489
      %v1750 = vpack.c.bf16 %v1500, %v1497
      %v1751 = vpack.c.bf16 %v1746, %v1745
      %v1752 = vpack.c.bf16 %v1748, %v1747
      %v1754 = vsel %vm1070, %v1749, 0
      %v1757 = vsel %vm1070, %v1750, 0
      %1759 = vmatprep.subr.bf16.mxu0 0
      %1760 = vmatpush1.bf16.msra.mxu0 0
      %1761 = vmatprep.subr.bf16.mxu0 0
      %1762 = vmatpush1.bf16.msra.mxu0 0
      %1763 = vmatprep.subr.bf16.mxu0 0
      %1764 = vmatpush1.bf16.msra.mxu0 0
      %1765 = vmatprep.subr.bf16.mxu0 0
      %1766 = vmatpush1.bf16.msra.mxu0 0
      %1767 = vmatprep.subr.bf16.mxu0 0
      %1768 = vmatpush1.bf16.msra.mxu0 0
      %1769 = vmatprep.subr.bf16.mxu0 0
      %1770 = vmatpush1.bf16.msra.mxu0 0
      %1771 = vmatprep.subr.bf16.mxu0 0
      %1772 = vmatpush1.bf16.msra.mxu0 %v1752
      %1773 = vmatprep.subr.bf16.mxu0 0
      %1774 = vmatpush1.bf16.msra.mxu0 %v1751
      %1775 = vmatprep.subr.bf16.mxu0 0
      %1776 = vmatpush2.bf16.msra.mxu0 0
      %1777 = vmatprep.subr.bf16.mxu0 0
      %1778 = vmatpush2.bf16.msra.mxu0 0
      %1779 = vmatprep.subr.bf16.mxu0 0
      %1780 = vmatpush2.bf16.msra.mxu0 0
      %1781 = vmatprep.subr.bf16.mxu0 0
      %1782 = vmatpush2.bf16.msra.mxu0 0
      %1783 = vmatprep.subr.bf16.mxu0 0
      %1784 = vmatpush2.bf16.msra.mxu0 0
      %1785 = vmatprep.subr.bf16.mxu0 0
      %1786 = vmatpush2.bf16.msra.mxu0 0
      %1787 = vmatprep.subr.bf16.mxu0 0
      %1788 = vmatpush2.bf16.msra.mxu0 0
      %1789 = vmatprep.subr.bf16.mxu0 0
      %1790 = vmatpush2.bf16.msra.mxu0 0
      %1791 = vmatprep.mubr.bf16.mxu0 0
      %1792 = vmatmul.mubr.bf16.gmra.mxu0 %v1754
      %v1793 = vpop.f32.mrf.mxu0
      %v1794 = vadd.f32 0.0, %v1793
      %v1795 = vpop.f32.mrf.mxu0
      %v1796 = vpop.f32.mrf.mxu0
      %v1797 = vadd.f32 0.0, %v1796
      %v1798 = vpop.f32.mrf.mxu0
      %1799 = vmatprep.mubr.bf16.mxu0 0
      %1800 = vmatmul.mubr.bf16.gmra.mxu0 %v1757
      %v1801 = vpop.f32.mrf.mxu0
      %v1802 = vadd.f32 0.0, %v1801
      %v1803 = vpop.f32.mrf.mxu0
      %v1804 = vpop.f32.mrf.mxu0
      %v1805 = vadd.f32 0.0, %v1804
      %v1806 = vpop.f32.mrf.mxu0
      %1807 = vdwg.mxu0
      %v1808 = vmul.f32 %v1794, 0.35355338
      %v1809 = vmul.f32 %v1797, 0.35355338
      %v1810 = vmul.f32 %v1802, 0.35355338
      %v1811 = vmul.f32 %v1805, 0.35355338
      %v1812 = vld [vmem:[%s35] sm:$0x1]
      %v1814 = vlaneseq
      %v1815 = vshrl.u32 %v1814, 7
      %v1816 = vsub.s32 0, %v1815
      %v1817 = vrot.slane %v1812, %v1816
      %v1819 = vadd.f32 %v1808, %v1817
      %v1820 = vadd.f32 %v1809, %v1817
      %v1821 = vadd.f32 %v1810, %v1817
      %v1822 = vadd.f32 %v1811, %v1817
      %1823 = vmax.xlane.f32.xlu0 %v1819
      %v1824 = vpop.xlane.xlu0 %1823
      %1825 = vmax.xlane.f32.xlu0 %v1820
      %v1826 = vpop.xlane.xlu0 %1825
      %1827 = vmax.xlane.f32.xlu0 %v1821
      %v1828 = vpop.xlane.xlu0 %1827
      %1829 = vmax.xlane.f32.xlu0 %v1822
      %v1830 = vpop.xlane.xlu0 %1829
      %v1831 = vsub.f32 %v1819, %v1824
      %v1832 = vsub.f32 %v1820, %v1826
      %v1833 = vsub.f32 %v1821, %v1828
      %v1834 = vsub.f32 %v1822, %v1830
      %v1835 = vmax.f32 %v1831, -30.0
      %v1836 = vmax.f32 %v1832, -30.0
      %v1837 = vmax.f32 %v1833, -30.0
      %v1838 = vmax.f32 %v1834, -30.0
      %v1839 = vmul.f32 %v1835, 1.442695
      %v1840 = vpow.pop %v1839
      %v1841 = vmul.f32 %v1836, 1.442695
      %v1842 = vpow.pop %v1841
      %v1843 = vmul.f32 %v1837, 1.442695
      %v1844 = vpow.pop %v1843
      %v1845 = vmul.f32 %v1838, 1.442695
      %v1846 = vpow.pop %v1845
      %v1847 = vld [vmem:[%s37] sm:$0x1]
      %v1849 = vlaneseq
      %v1850 = vshrl.u32 %v1849, 7
      %v1851 = vsub.s32 0, %v1850
      %v1852 = vrot.slane %v1847, %v1851
      %v1854 = vmul.f32 %v1840, %v1852
      %v1855 = vmul.f32 %v1842, %v1852
      %v1856 = vmul.f32 %v1844, %v1852
      %v1857 = vmul.f32 %v1846, %v1852
      %v1858 = vpack.c.bf16 %v1855, %v1854
      %v1859 = vpack.c.bf16 %v1857, %v1856
      %v1860 = vld [vmem:[%s39] sm:$0xf]
      %v1861 = vld [vmem:[%s39 + $0x4] sm:$0xf]
      %v1862 = vld [vmem:[%s39 + $0x8] sm:$0xf]
      %v1863 = vld [vmem:[%s39 + $0xc] sm:$0xf]
      %v1864 = vld [vmem:[%s39 + $0x10] sm:$0xf]
      %v1865 = vld [vmem:[%s39 + $0x14] sm:$0xf]
      %v1866 = vld [vmem:[%s39 + $0x18] sm:$0xf]
      %v1867 = vld [vmem:[%s39 + $0x1c] sm:$0xf]
      %v1868 = vld [vmem:[%s39 + $0x20] sm:$0xf]
      %v1869 = vld [vmem:[%s39 + $0x24] sm:$0xf]
      %v1870 = vld [vmem:[%s39 + $0x28] sm:$0xf]
      %v1871 = vld [vmem:[%s39 + $0x2c] sm:$0xf]
      %v1872 = vld [vmem:[%s39 + $0x30] sm:$0xf]
      %v1873 = vld [vmem:[%s39 + $0x34] sm:$0xf]
      %v1874 = vld [vmem:[%s39 + $0x38] sm:$0xf]
      %v1875 = vld [vmem:[%s39 + $0x3c] sm:$0xf]
      %v1876 = vpack.c.bf16 %v1657, %v1654
      %v1877 = vpack.c.bf16 %v1665, %v1662
      %v1894 = vunpack.c.l.b16 %v1860
      %v1895 = vunpack.c.l.b16 %v1861
      %v1896 = vunpack.c.l.b16 %v1862
      %v1897 = vunpack.c.l.b16 %v1863
      %v1898 = vunpack.c.l.b16 %v1864
      %v1899 = vunpack.c.l.b16 %v1865
      %v1900 = vunpack.c.l.b16 %v1866
      %v1901 = vunpack.c.l.b16 %v1867
      %v1902 = vunpack.c.l.b16 %v1868
      %v1903 = vunpack.c.l.b16 %v1869
      %v1904 = vunpack.c.l.b16 %v1870
      %v1905 = vunpack.c.l.b16 %v1871
      %v1906 = vunpack.c.l.b16 %v1872
      %v1907 = vunpack.c.l.b16 %v1873
      %v1908 = vunpack.c.l.b16 %v1874
      %v1909 = vunpack.c.l.b16 %v1875
      %v1910 = vpack.c.b16 %v1895, %v1894
      %v1911 = vpack.c.b16 %v1897, %v1896
      %v1912 = vpack.c.b16 %v1899, %v1898
      %v1913 = vpack.c.b16 %v1901, %v1900
      %v1914 = vpack.c.b16 %v1903, %v1902
      %v1915 = vpack.c.b16 %v1905, %v1904
      %v1916 = vpack.c.b16 %v1907, %v1906
      %v1917 = vpack.c.b16 %v1909, %v1908
      %v1919 = vsel %vm1070, %v1910, 0
      %v1922 = vsel %vm1070, %v1911, 0
      %v1925 = vsel %vm1070, %v1912, 0
      %v1928 = vsel %vm1070, %v1913, 0
      %v1931 = vsel %vm1070, %v1914, 0
      %v1934 = vsel %vm1070, %v1915, 0
      %v1937 = vsel %vm1070, %v1916, 0
      %v1940 = vsel %vm1070, %v1917, 0
      %1942 = vmatprep.subr.bf16.mxu0 0
      %1943 = vmatpush1.bf16.msra.mxu0 0
      %1944 = vmatprep.subr.bf16.mxu0 0
      %1945 = vmatpush1.bf16.msra.mxu0 0
      %1946 = vmatprep.subr.bf16.mxu0 0
      %1947 = vmatpush1.bf16.msra.mxu0 0
      %1948 = vmatprep.subr.bf16.mxu0 0
      %1949 = vmatpush1.bf16.msra.mxu0 0
      %1950 = vmatprep.subr.bf16.mxu0 0
      %1951 = vmatpush1.bf16.msra.mxu0 0
      %1952 = vmatprep.subr.bf16.mxu0 0
      %1953 = vmatpush1.bf16.msra.mxu0 0
      %1954 = vmatprep.subr.bf16.mxu0 0
      %1955 = vmatpush1.bf16.msra.mxu0 %v1877
      %1956 = vmatprep.subr.bf16.mxu0 0
      %1957 = vmatpush1.bf16.msra.mxu0 %v1876
      %1958 = vmatprep.subr.bf16.mxu0 0
      %1959 = vmatpush2.bf16.msra.mxu0 0
      %1960 = vmatprep.subr.bf16.mxu0 0
      %1961 = vmatpush2.bf16.msra.mxu0 0
      %1962 = vmatprep.subr.bf16.mxu0 0
      %1963 = vmatpush2.bf16.msra.mxu0 0
      %1964 = vmatprep.subr.bf16.mxu0 0
      %1965 = vmatpush2.bf16.msra.mxu0 0
      %1966 = vmatprep.subr.bf16.mxu0 0
      %1967 = vmatpush2.bf16.msra.mxu0 0
      %1968 = vmatprep.subr.bf16.mxu0 0
      %1969 = vmatpush2.bf16.msra.mxu0 0
      %1970 = vmatprep.subr.bf16.mxu0 0
      %1971 = vmatpush2.bf16.msra.mxu0 0
      %1972 = vmatprep.subr.bf16.mxu0 0
      %1973 = vmatpush2.bf16.msra.mxu0 0
      %1974 = vmatprep.mubr.bf16.mxu0 0
      %1975 = vmatmul.mubr.bf16.gmra.mxu0 %v1919
      %v1976 = vpop.f32.mrf.mxu0
      %v1977 = vadd.f32 0.0, %v1976
      %v1978 = vpop.f32.mrf.mxu0
      %v1979 = vpop.f32.mrf.mxu0
      %v1980 = vadd.f32 0.0, %v1979
      %v1981 = vpop.f32.mrf.mxu0
      %1982 = vmatprep.mubr.bf16.mxu0 0
      %1983 = vmatmul.mubr.bf16.gmra.mxu0 %v1922
      %v1984 = vpop.f32.mrf.mxu0
      %v1985 = vadd.f32 0.0, %v1984
      %v1986 = vpop.f32.mrf.mxu0
      %v1987 = vpop.f32.mrf.mxu0
      %v1988 = vadd.f32 0.0, %v1987
      %v1989 = vpop.f32.mrf.mxu0
      %1990 = vmatprep.mubr.bf16.mxu0 0
      %1991 = vmatmul.mubr.bf16.gmra.mxu0 %v1925
      %v1992 = vpop.f32.mrf.mxu0
      %v1993 = vadd.f32 0.0, %v1992
      %v1994 = vpop.f32.mrf.mxu0
      %v1995 = vpop.f32.mrf.mxu0
      %v1996 = vadd.f32 0.0, %v1995
      %v1997 = vpop.f32.mrf.mxu0
      %1998 = vmatprep.mubr.bf16.mxu0 0
      %1999 = vmatmul.mubr.bf16.gmra.mxu0 %v1928
      %v2000 = vpop.f32.mrf.mxu0
      %v2001 = vadd.f32 0.0, %v2000
      %v2002 = vpop.f32.mrf.mxu0
      %v2003 = vpop.f32.mrf.mxu0
      %v2004 = vadd.f32 0.0, %v2003
      %v2005 = vpop.f32.mrf.mxu0
      %2006 = vmatprep.mubr.bf16.mxu0 0
      %2007 = vmatmul.mubr.bf16.gmra.mxu0 %v1931
      %v2008 = vpop.f32.mrf.mxu0
      %v2009 = vadd.f32 0.0, %v2008
      %v2010 = vpop.f32.mrf.mxu0
      %v2011 = vpop.f32.mrf.mxu0
      %v2012 = vadd.f32 0.0, %v2011
      %v2013 = vpop.f32.mrf.mxu0
      %2014 = vmatprep.mubr.bf16.mxu0 0
      %2015 = vmatmul.mubr.bf16.gmra.mxu0 %v1934
      %v2016 = vpop.f32.mrf.mxu0
      %v2017 = vadd.f32 0.0, %v2016
      %v2018 = vpop.f32.mrf.mxu0
      %v2019 = vpop.f32.mrf.mxu0
      %v2020 = vadd.f32 0.0, %v2019
      %v2021 = vpop.f32.mrf.mxu0
      %2022 = vmatprep.mubr.bf16.mxu0 0
      %2023 = vmatmul.mubr.bf16.gmra.mxu0 %v1937
      %v2024 = vpop.f32.mrf.mxu0
      %v2025 = vadd.f32 0.0, %v2024
      %v2026 = vpop.f32.mrf.mxu0
      %v2027 = vpop.f32.mrf.mxu0
      %v2028 = vadd.f32 0.0, %v2027
      %v2029 = vpop.f32.mrf.mxu0
      %2030 = vmatprep.mubr.bf16.mxu0 0
      %2031 = vmatmul.mubr.bf16.gmra.mxu0 %v1940
      %v2032 = vpop.f32.mrf.mxu0
      %v2033 = vadd.f32 0.0, %v2032
      %v2034 = vpop.f32.mrf.mxu0
      %v2035 = vpop.f32.mrf.mxu0
      %v2036 = vadd.f32 0.0, %v2035
      %v2037 = vpop.f32.mrf.mxu0
      %2038 = vdwg.mxu0
      %v2039 = vld [vmem:[%s41] sm:$0xff]
      %v2040 = vld [vmem:[%s41 + $0x8] sm:$0xff]
      %v2041 = vld [vmem:[%s41 + $0x10] sm:$0xff]
      %v2042 = vld [vmem:[%s41 + $0x18] sm:$0xff]
      %v2043 = vld [vmem:[%s41 + $0x20] sm:$0xff]
      %v2044 = vld [vmem:[%s41 + $0x28] sm:$0xff]
      %v2045 = vld [vmem:[%s41 + $0x30] sm:$0xff]
      %v2046 = vld [vmem:[%s41 + $0x38] sm:$0xff]
      %v2047 = vld [vmem:[%s41 + $0x40] sm:$0xff]
      %v2048 = vld [vmem:[%s41 + $0x48] sm:$0xff]
      %v2049 = vld [vmem:[%s41 + $0x50] sm:$0xff]
      %v2050 = vld [vmem:[%s41 + $0x58] sm:$0xff]
      %v2051 = vld [vmem:[%s41 + $0x60] sm:$0xff]
      %v2052 = vld [vmem:[%s41 + $0x68] sm:$0xff]
      %v2053 = vld [vmem:[%s41 + $0x70] sm:$0xff]
      %v2054 = vld [vmem:[%s41 + $0x78] sm:$0xff]
      %v2055 = vmul.f32 %v1977, %v2039
      %v2056 = vmul.f32 %v1980, %v2040
      %v2057 = vmul.f32 %v1985, %v2041
      %v2058 = vmul.f32 %v1988, %v2042
      %v2059 = vmul.f32 %v1993, %v2043
      %v2060 = vmul.f32 %v1996, %v2044
      %v2061 = vmul.f32 %v2001, %v2045
      %v2062 = vmul.f32 %v2004, %v2046
      %v2063 = vmul.f32 %v2009, %v2047
      %v2064 = vmul.f32 %v2012, %v2048
      %v2065 = vmul.f32 %v2017, %v2049
      %v2066 = vmul.f32 %v2020, %v2050
      %v2067 = vmul.f32 %v2025, %v2051
      %v2068 = vmul.f32 %v2028, %v2052
      %v2069 = vmul.f32 %v2033, %v2053
      %v2070 = vmul.f32 %v2036, %v2054
      %v2071 = vpack.c.bf16 %v2056, %v2055
      %v2072 = vpack.c.bf16 %v2058, %v2057
      %v2073 = vpack.c.bf16 %v2060, %v2059
      %v2074 = vpack.c.bf16 %v2062, %v2061
      %v2075 = vpack.c.bf16 %v2064, %v2063
      %v2076 = vpack.c.bf16 %v2066, %v2065
      %v2077 = vpack.c.bf16 %v2068, %v2067
      %v2078 = vpack.c.bf16 %v2070, %v2069
      %2079 = vmatprep.subr.bf16.mxu0 0
      %2080 = vmatpush1.bf16.msra.mxu0 %v2078
      %2081 = vmatprep.subr.bf16.mxu0 0
      %2082 = vmatpush1.bf16.msra.mxu0 %v2077
      %2083 = vmatprep.subr.bf16.mxu0 0
      %2084 = vmatpush1.bf16.msra.mxu0 %v2076
      %2085 = vmatprep.subr.bf16.mxu0 0
      %2086 = vmatpush1.bf16.msra.mxu0 %v2075
      %2087 = vmatprep.subr.bf16.mxu0 0
      %2088 = vmatpush1.bf16.msra.mxu0 %v2074
      %2089 = vmatprep.subr.bf16.mxu0 0
      %2090 = vmatpush1.bf16.msra.mxu0 %v2073
      %2091 = vmatprep.subr.bf16.mxu0 0
      %2092 = vmatpush1.bf16.msra.mxu0 %v2072
      %2093 = vmatprep.subr.bf16.mxu0 0
      %2094 = vmatpush1.bf16.msra.mxu0 %v2071
      %2095 = vmatprep.subr.bf16.mxu0 0
      %2096 = vmatpush2.bf16.msra.mxu0 0
      %2097 = vmatprep.subr.bf16.mxu0 0
      %2098 = vmatpush2.bf16.msra.mxu0 0
      %2099 = vmatprep.subr.bf16.mxu0 0
      %2100 = vmatpush2.bf16.msra.mxu0 0
      %2101 = vmatprep.subr.bf16.mxu0 0
      %2102 = vmatpush2.bf16.msra.mxu0 0
      %2103 = vmatprep.subr.bf16.mxu0 0
      %2104 = vmatpush2.bf16.msra.mxu0 0
      %2105 = vmatprep.subr.bf16.mxu0 0
      %2106 = vmatpush2.bf16.msra.mxu0 0
      %2107 = vmatprep.subr.bf16.mxu0 0
      %2108 = vmatpush2.bf16.msra.mxu0 0
      %2109 = vmatprep.subr.bf16.mxu0 0
      %2110 = vmatpush2.bf16.msra.mxu0 0
      %2111 = vmatprep.mubr.bf16.mxu0 0
      %2112 = vmatmul.mubr.bf16.gmra.mxu0 %v1858
      %v2113 = vpop.f32.mrf.mxu0
      %v2114 = vadd.f32 0.0, %v2113
      %v2115 = vpop.f32.mrf.mxu0
      %v2116 = vpop.f32.mrf.mxu0
      %v2117 = vadd.f32 0.0, %v2116
      %v2118 = vpop.f32.mrf.mxu0
      %2119 = vmatprep.mubr.bf16.mxu0 0
      %2120 = vmatmul.mubr.bf16.gmra.mxu0 %v1859
      %v2121 = vpop.f32.mrf.mxu0
      %v2122 = vadd.f32 0.0, %v2121
      %v2123 = vpop.f32.mrf.mxu0
      %v2124 = vpop.f32.mrf.mxu0
      %v2125 = vadd.f32 0.0, %v2124
      %v2126 = vpop.f32.mrf.mxu0
      %2127 = vdwg.mxu0
      %v2128 = vpack.c.bf16 %v2040, %v2039
      %v2129 = vpack.c.bf16 %v2042, %v2041
      %v2130 = vpack.c.bf16 %v2044, %v2043
      %v2131 = vpack.c.bf16 %v2046, %v2045
      %v2132 = vpack.c.bf16 %v2048, %v2047
      %v2133 = vpack.c.bf16 %v2050, %v2049
      %v2134 = vpack.c.bf16 %v2052, %v2051
      %v2135 = vpack.c.bf16 %v2054, %v2053
      %2136 = vmatprep.subr.bf16.mxu0 0
      %2137 = vmatpush1.bf16.msra.mxu0 %v2135
      %2138 = vmatprep.subr.bf16.mxu0 0
      %2139 = vmatpush1.bf16.msra.mxu0 %v2134
      %2140 = vmatprep.subr.bf16.mxu0 0
      %2141 = vmatpush1.bf16.msra.mxu0 %v2133
      %2142 = vmatprep.subr.bf16.mxu0 0
      %2143 = vmatpush1.bf16.msra.mxu0 %v2132
      %2144 = vmatprep.subr.bf16.mxu0 0
      %2145 = vmatpush1.bf16.msra.mxu0 %v2131
      %2146 = vmatprep.subr.bf16.mxu0 0
      %2147 = vmatpush1.bf16.msra.mxu0 %v2130
      %2148 = vmatprep.subr.bf16.mxu0 0
      %2149 = vmatpush1.bf16.msra.mxu0 %v2129
      %2150 = vmatprep.subr.bf16.mxu0 0
      %2151 = vmatpush1.bf16.msra.mxu0 %v2128
      %2152 = vmatprep.subr.bf16.mxu0 0
      %2153 = vmatpush2.bf16.msra.mxu0 0
      %2154 = vmatprep.subr.bf16.mxu0 0
      %2155 = vmatpush2.bf16.msra.mxu0 0
      %2156 = vmatprep.subr.bf16.mxu0 0
      %2157 = vmatpush2.bf16.msra.mxu0 0
      %2158 = vmatprep.subr.bf16.mxu0 0
      %2159 = vmatpush2.bf16.msra.mxu0 0
      %2160 = vmatprep.subr.bf16.mxu0 0
      %2161 = vmatpush2.bf16.msra.mxu0 0
      %2162 = vmatprep.subr.bf16.mxu0 0
      %2163 = vmatpush2.bf16.msra.mxu0 0
      %2164 = vmatprep.subr.bf16.mxu0 0
      %2165 = vmatpush2.bf16.msra.mxu0 0
      %2166 = vmatprep.subr.bf16.mxu0 0
      %2167 = vmatpush2.bf16.msra.mxu0 0
      %2168 = vmatprep.mubr.bf16.mxu0 0
      %2169 = vmatmul.mubr.bf16.gmra.mxu0 %v1858
      %v2170 = vpop.f32.mrf.mxu0
      %v2171 = vadd.f32 0.0, %v2170
      %v2172 = vpop.f32.mrf.mxu0
      %v2173 = vpop.f32.mrf.mxu0
      %v2174 = vadd.f32 0.0, %v2173
      %v2175 = vpop.f32.mrf.mxu0
      %2176 = vmatprep.mubr.bf16.mxu0 0
      %2177 = vmatmul.mubr.bf16.gmra.mxu0 %v1859
      %v2178 = vpop.f32.mrf.mxu0
      %v2179 = vadd.f32 0.0, %v2178
      %v2180 = vpop.f32.mrf.mxu0
      %v2181 = vpop.f32.mrf.mxu0
      %v2182 = vadd.f32 0.0, %v2181
      %v2183 = vpop.f32.mrf.mxu0
      %2184 = vdwg.mxu0
      %v2185 = vrcp.pop %v2171
      %v2186 = vrcp.pop %v2174
      %v2187 = vrcp.pop %v2179
      %v2188 = vrcp.pop %v2182
      %v2189 = vmul.f32 %v2114, %v2185
      %v2190 = vmul.f32 %v2117, %v2186
      %v2191 = vmul.f32 %v2122, %v2187
      %v2192 = vmul.f32 %v2125, %v2188
      %v2193 = vld [vmem:[%s43] sm:$0xf]
      %v2194 = vld [vmem:[%s43 + $0x4] sm:$0xf]
      %v2195 = vld [vmem:[%s43 + $0x8] sm:$0xf]
      %v2196 = vld [vmem:[%s43 + $0xc] sm:$0xf]
      %v2197 = vpack.c.bf16 %v2190, %v2189
      %v2198 = vpack.c.bf16 %v2192, %v2191
      %v2203 = vunpack.c.l.b16 %v2193
      %v2204 = vunpack.c.l.b16 %v2194
      %v2205 = vunpack.c.l.b16 %v2195
      %v2206 = vunpack.c.l.b16 %v2196
      %v2207 = vpack.c.b16 %v2204, %v2203
      %v2208 = vpack.c.b16 %v2206, %v2205
      %v2212 = vsel %vm1070, %v2197, 0
      %v2215 = vsel %vm1070, %v2198, 0
      %2217 = vmatprep.subr.bf16.mxu0 0
      %2218 = vmatpush1.bf16.msra.mxu0 0
      %2219 = vmatprep.subr.bf16.mxu0 0
      %2220 = vmatpush1.bf16.msra.mxu0 0
      %2221 = vmatprep.subr.bf16.mxu0 0
      %2222 = vmatpush1.bf16.msra.mxu0 0
      %2223 = vmatprep.subr.bf16.mxu0 0
      %2224 = vmatpush1.bf16.msra.mxu0 0
      %2225 = vmatprep.subr.bf16.mxu0 0
      %2226 = vmatpush1.bf16.msra.mxu0 0
      %2227 = vmatprep.subr.bf16.mxu0 0
      %2228 = vmatpush1.bf16.msra.mxu0 0
      %2229 = vmatprep.subr.bf16.mxu0 0
      %2230 = vmatpush1.bf16.msra.mxu0 %v2208
      %2231 = vmatprep.subr.bf16.mxu0 0
      %2232 = vmatpush1.bf16.msra.mxu0 %v2207
      %2233 = vmatprep.subr.bf16.mxu0 0
      %2234 = vmatpush2.bf16.msra.mxu0 0
      %2235 = vmatprep.subr.bf16.mxu0 0
      %2236 = vmatpush2.bf16.msra.mxu0 0
      %2237 = vmatprep.subr.bf16.mxu0 0
      %2238 = vmatpush2.bf16.msra.mxu0 0
      %2239 = vmatprep.subr.bf16.mxu0 0
      %2240 = vmatpush2.bf16.msra.mxu0 0
      %2241 = vmatprep.subr.bf16.mxu0 0
      %2242 = vmatpush2.bf16.msra.mxu0 0
      %2243 = vmatprep.subr.bf16.mxu0 0
      %2244 = vmatpush2.bf16.msra.mxu0 0
      %2245 = vmatprep.subr.bf16.mxu0 0
      %2246 = vmatpush2.bf16.msra.mxu0 0
      %2247 = vmatprep.subr.bf16.mxu0 0
      %2248 = vmatpush2.bf16.msra.mxu0 0
      %2249 = vmatprep.mubr.bf16.mxu0 0
      %2250 = vmatmul.mubr.bf16.gmra.mxu0 %v2212
      %v2251 = vpop.f32.mrf.mxu0
      %v2252 = vadd.f32 0.0, %v2251
      %v2253 = vpop.f32.mrf.mxu0
      %v2254 = vpop.f32.mrf.mxu0
      %v2255 = vadd.f32 0.0, %v2254
      %v2256 = vpop.f32.mrf.mxu0
      %2257 = vmatprep.mubr.bf16.mxu0 0
      %2258 = vmatmul.mubr.bf16.gmra.mxu0 %v2215
      %v2259 = vpop.f32.mrf.mxu0
      %v2260 = vadd.f32 0.0, %v2259
      %v2261 = vpop.f32.mrf.mxu0
      %v2262 = vpop.f32.mrf.mxu0
      %v2263 = vadd.f32 0.0, %v2262
      %v2264 = vpop.f32.mrf.mxu0
      %2265 = vdwg.mxu0
      %v2266 = vadd.f32 %v1334, %v2252
      %v2267 = vadd.f32 %v1337, %v2255
      %v2268 = vadd.f32 %v1342, %v2260
      %v2269 = vadd.f32 %v1345, %v2263
      %v2270 = vld [vmem:[%s45] sm:$0x1]
      %v2272 = vlaneseq
      %v2273 = vshrl.u32 %v2272, 7
      %v2274 = vsub.s32 0, %v2273
      %v2275 = vrot.slane %v2270, %v2274
      %v2277 = vadd.f32 %v2266, %v2275
      %v2278 = vadd.f32 %v2267, %v2275
      %v2279 = vadd.f32 %v2268, %v2275
      %v2280 = vadd.f32 %v2269, %v2275
      %v2281 = vld [vmem:[%s47] sm:$0x1]
      %v2282 = vld [vmem:[%s49] sm:$0x1]
      %v2283 = vsel %vm1070, %v2277, 0.0
      %2284 = vadd.xlane.f32.xlu0 %v2283
      %v2285 = vpop.xlane.xlu0 %2284
      %v2286 = vsel %vm1070, %v2278, 0.0
      %2287 = vadd.xlane.f32.xlu0 %v2286
      %v2288 = vpop.xlane.xlu0 %2287
      %v2289 = vsel %vm1070, %v2279, 0.0
      %2290 = vadd.xlane.f32.xlu0 %v2289
      %v2291 = vpop.xlane.xlu0 %2290
      %v2292 = vsel %vm1070, %v2280, 0.0
      %2293 = vadd.xlane.f32.xlu0 %v2292
      %v2294 = vpop.xlane.xlu0 %2293
      %v2295 = vmul.f32 %v2285, %v1362
      %v2296 = vmul.f32 %v2288, %v1362
      %v2297 = vmul.f32 %v2291, %v1362
      %v2298 = vmul.f32 %v2294, %v1362
      %v2299 = vsub.f32 %v2277, %v2295
      %v2300 = vsub.f32 %v2278, %v2296
      %v2301 = vsub.f32 %v2279, %v2297
      %v2302 = vsub.f32 %v2280, %v2298
      %v2303 = vmul.f32 %v2299, %v2299
      %v2304 = vmul.f32 %v2300, %v2300
      %v2305 = vmul.f32 %v2301, %v2301
      %v2306 = vmul.f32 %v2302, %v2302
      %v2307 = vsel %vm1070, %v2303, 0.0
      %2308 = vadd.xlane.f32.xlu0 %v2307
      %v2309 = vpop.xlane.xlu0 %2308
      %v2310 = vsel %vm1070, %v2304, 0.0
      %2311 = vadd.xlane.f32.xlu0 %v2310
      %v2312 = vpop.xlane.xlu0 %2311
      %v2313 = vsel %vm1070, %v2305, 0.0
      %2314 = vadd.xlane.f32.xlu0 %v2313
      %v2315 = vpop.xlane.xlu0 %2314
      %v2316 = vsel %vm1070, %v2306, 0.0
      %2317 = vadd.xlane.f32.xlu0 %v2316
      %v2318 = vpop.xlane.xlu0 %2317
      %v2319 = vmul.f32 %v2309, %v1362
      %v2320 = vmul.f32 %v2312, %v1362
      %v2321 = vmul.f32 %v2315, %v1362
      %v2322 = vmul.f32 %v2318, %v1362
      %v2323 = vadd.f32 %v2319, 1e-05
      %v2324 = vadd.f32 %v2320, 1e-05
      %v2325 = vadd.f32 %v2321, 1e-05
      %v2326 = vadd.f32 %v2322, 1e-05
      %v2327 = vrsqrt.pop %v2323
      %v2328 = vrsqrt.pop %v2324
      %v2329 = vrsqrt.pop %v2325
      %v2330 = vrsqrt.pop %v2326
      %v2331 = vmul.f32 %v2299, %v2327
      %v2332 = vmul.f32 %v2300, %v2328
      %v2333 = vmul.f32 %v2301, %v2329
      %v2334 = vmul.f32 %v2302, %v2330
      %v2336 = vlaneseq
      %v2337 = vshrl.u32 %v2336, 7
      %v2338 = vsub.s32 0, %v2337
      %v2339 = vrot.slane %v2281, %v2338
      %v2341 = vmul.f32 %v2331, %v2339
      %v2342 = vmul.f32 %v2332, %v2339
      %v2343 = vmul.f32 %v2333, %v2339
      %v2344 = vmul.f32 %v2334, %v2339
      %v2346 = vlaneseq
      %v2347 = vshrl.u32 %v2346, 7
      %v2348 = vsub.s32 0, %v2347
      %v2349 = vrot.slane %v2282, %v2348
      %v2351 = vadd.f32 %v2341, %v2349
      %v2352 = vadd.f32 %v2342, %v2349
      %v2353 = vadd.f32 %v2343, %v2349
      %v2354 = vadd.f32 %v2344, %v2349
      %v2355 = vld [vmem:[%s51] sm:$0xf]
      %v2356 = vld [vmem:[%s51 + $0x4] sm:$0xf]
      %v2357 = vld [vmem:[%s51 + $0x8] sm:$0xf]
      %v2358 = vld [vmem:[%s51 + $0xc] sm:$0xf]
      %v2359 = vpack.c.bf16 %v2352, %v2351
      %v2360 = vpack.c.bf16 %v2354, %v2353
      %v2361 = vld [vmem:[%s53] sm:$0x1]
      %v2363 = vlaneseq
      %v2364 = vshrl.u32 %v2363, 7
      %v2365 = vsub.s32 0, %v2364
      %v2366 = vrot.slane %v2361, %v2365
      %v2372 = vunpack.c.l.b16 %v2355
      %v2373 = vunpack.c.l.b16 %v2356
      %v2374 = vunpack.c.l.b16 %v2357
      %v2375 = vunpack.c.l.b16 %v2358
      %v2376 = vpack.c.b16 %v2373, %v2372
      %v2377 = vpack.c.b16 %v2375, %v2374
      %v2381 = vsel %vm1070, %v2359, 0
      %v2384 = vsel %vm1070, %v2360, 0
      %2386 = vmatprep.subr.bf16.mxu0 0
      %2387 = vmatpush1.bf16.msra.mxu0 0
      %2388 = vmatprep.subr.bf16.mxu0 0
      %2389 = vmatpush1.bf16.msra.mxu0 0
      %2390 = vmatprep.subr.bf16.mxu0 0
      %2391 = vmatpush1.bf16.msra.mxu0 0
      %2392 = vmatprep.subr.bf16.mxu0 0
      %2393 = vmatpush1.bf16.msra.mxu0 0
      %2394 = vmatprep.subr.bf16.mxu0 0
      %2395 = vmatpush1.bf16.msra.mxu0 0
      %2396 = vmatprep.subr.bf16.mxu0 0
      %2397 = vmatpush1.bf16.msra.mxu0 0
      %2398 = vmatprep.subr.bf16.mxu0 0
      %2399 = vmatpush1.bf16.msra.mxu0 %v2377
      %2400 = vmatprep.subr.bf16.mxu0 0
      %2401 = vmatpush1.bf16.msra.mxu0 %v2376
      %2402 = vmatprep.subr.bf16.mxu0 0
      %2403 = vmatpush2.bf16.msra.mxu0 0
      %2404 = vmatprep.subr.bf16.mxu0 0
      %2405 = vmatpush2.bf16.msra.mxu0 0
      %2406 = vmatprep.subr.bf16.mxu0 0
      %2407 = vmatpush2.bf16.msra.mxu0 0
      %2408 = vmatprep.subr.bf16.mxu0 0
      %2409 = vmatpush2.bf16.msra.mxu0 0
      %2410 = vmatprep.subr.bf16.mxu0 0
      %2411 = vmatpush2.bf16.msra.mxu0 0
      %2412 = vmatprep.subr.bf16.mxu0 0
      %2413 = vmatpush2.bf16.msra.mxu0 0
      %2414 = vmatprep.subr.bf16.mxu0 0
      %2415 = vmatpush2.bf16.msra.mxu0 0
      %2416 = vmatprep.subr.bf16.mxu0 0
      %2417 = vmatpush2.bf16.msra.mxu0 0
      %2418 = vmatprep.mubr.bf16.mxu0 0
      %2419 = vmatmul.mubr.bf16.gmra.mxu0 %v2381
      %v2420 = vpop.f32.mrf.mxu0
      %v2421 = vadd.f32 %v2366, %v2420
      %v2422 = vpop.f32.mrf.mxu0
      %v2423 = vpop.f32.mrf.mxu0
      %v2424 = vadd.f32 %v2366, %v2423
      %v2425 = vpop.f32.mrf.mxu0
      %2426 = vmatprep.mubr.bf16.mxu0 0
      %2427 = vmatmul.mubr.bf16.gmra.mxu0 %v2384
      %v2428 = vpop.f32.mrf.mxu0
      %v2429 = vadd.f32 %v2366, %v2428
      %v2430 = vpop.f32.mrf.mxu0
      %v2431 = vpop.f32.mrf.mxu0
      %v2432 = vadd.f32 %v2366, %v2431
      %v2433 = vpop.f32.mrf.mxu0
      %2434 = vdwg.mxu0
      %v2435 = vmul.f32 %v2421, 0.5
      %v2436 = vmul.f32 %v2424, 0.5
      %v2437 = vmul.f32 %v2429, 0.5
      %v2438 = vmul.f32 %v2432, 0.5
      %v2439 = vmul.f32 %v2421, 0.044715
      %v2440 = vmul.f32 %v2424, 0.044715
      %v2441 = vmul.f32 %v2429, 0.044715
      %v2442 = vmul.f32 %v2432, 0.044715
      %v2443 = vmul.f32 %v2439, %v2421
      %v2444 = vmul.f32 %v2440, %v2424
      %v2445 = vmul.f32 %v2441, %v2429
      %v2446 = vmul.f32 %v2442, %v2432
      %v2447 = vmul.f32 %v2443, %v2421
      %v2448 = vmul.f32 %v2444, %v2424
      %v2449 = vmul.f32 %v2445, %v2429
      %v2450 = vmul.f32 %v2446, %v2432
      %v2451 = vadd.f32 %v2421, %v2447
      %v2452 = vadd.f32 %v2424, %v2448
      %v2453 = vadd.f32 %v2429, %v2449
      %v2454 = vadd.f32 %v2432, %v2450
      %v2455 = vmul.f32 %v2451, 0.7978846
      %v2456 = vmul.f32 %v2452, 0.7978846
      %v2457 = vmul.f32 %v2453, 0.7978846
      %v2458 = vmul.f32 %v2454, 0.7978846
      %v2459 = vtanh.pop %v2455
      %v2460 = vtanh.pop %v2456
      %v2461 = vtanh.pop %v2457
      %v2462 = vtanh.pop %v2458
      %v2463 = vadd.f32 %v2459, 1.0
      %v2464 = vadd.f32 %v2460, 1.0
      %v2465 = vadd.f32 %v2461, 1.0
      %v2466 = vadd.f32 %v2462, 1.0
      %v2467 = vmul.f32 %v2435, %v2463
      %v2468 = vmul.f32 %v2436, %v2464
      %v2469 = vmul.f32 %v2437, %v2465
      %v2470 = vmul.f32 %v2438, %v2466
      %v2471 = vld [vmem:[%s55] sm:$0xf]
      %v2472 = vld [vmem:[%s55 + $0x4] sm:$0xf]
      %v2473 = vld [vmem:[%s55 + $0x8] sm:$0xf]
      %v2474 = vld [vmem:[%s55 + $0xc] sm:$0xf]
      %v2475 = vld [vmem:[%s55 + $0x10] sm:$0xf]
      %v2476 = vld [vmem:[%s55 + $0x14] sm:$0xf]
      %v2477 = vld [vmem:[%s55 + $0x18] sm:$0xf]
      %v2478 = vld [vmem:[%s55 + $0x1c] sm:$0xf]
      %v2479 = vld [vmem:[%s55 + $0x20] sm:$0xf]
      %v2480 = vld [vmem:[%s55 + $0x24] sm:$0xf]
      %v2481 = vld [vmem:[%s55 + $0x28] sm:$0xf]
      %v2482 = vld [vmem:[%s55 + $0x2c] sm:$0xf]
      %v2483 = vld [vmem:[%s55 + $0x30] sm:$0xf]
      %v2484 = vld [vmem:[%s55 + $0x34] sm:$0xf]
      %v2485 = vld [vmem:[%s55 + $0x38] sm:$0xf]
      %v2486 = vld [vmem:[%s55 + $0x3c] sm:$0xf]
      %v2487 = vpack.c.bf16 %v2468, %v2467
      %v2488 = vpack.c.bf16 %v2470, %v2469
      %v2505 = vunpack.c.l.b16 %v2471
      %v2506 = vunpack.c.l.b16 %v2472
      %v2507 = vunpack.c.l.b16 %v2473
      %v2508 = vunpack.c.l.b16 %v2474
      %v2509 = vunpack.c.l.b16 %v2475
      %v2510 = vunpack.c.l.b16 %v2476
      %v2511 = vunpack.c.l.b16 %v2477
      %v2512 = vunpack.c.l.b16 %v2478
      %v2513 = vunpack.c.l.b16 %v2479
      %v2514 = vunpack.c.l.b16 %v2480
      %v2515 = vunpack.c.l.b16 %v2481
      %v2516 = vunpack.c.l.b16 %v2482
      %v2517 = vunpack.c.l.b16 %v2483
      %v2518 = vunpack.c.l.b16 %v2484
      %v2519 = vunpack.c.l.b16 %v2485
      %v2520 = vunpack.c.l.b16 %v2486
      %v2521 = vpack.c.b16 %v2506, %v2505
      %v2522 = vpack.c.b16 %v2508, %v2507
      %v2523 = vpack.c.b16 %v2510, %v2509
      %v2524 = vpack.c.b16 %v2512, %v2511
      %v2525 = vpack.c.b16 %v2514, %v2513
      %v2526 = vpack.c.b16 %v2516, %v2515
      %v2527 = vpack.c.b16 %v2518, %v2517
      %v2528 = vpack.c.b16 %v2520, %v2519
      %2537 = vmatprep.subr.bf16.mxu0 0
      %2538 = vmatpush1.bf16.msra.mxu0 %v2528
      %2539 = vmatprep.subr.bf16.mxu0 0
      %2540 = vmatpush1.bf16.msra.mxu0 %v2527
      %2541 = vmatprep.subr.bf16.mxu0 0
      %2542 = vmatpush1.bf16.msra.mxu0 %v2526
      %2543 = vmatprep.subr.bf16.mxu0 0
      %2544 = vmatpush1.bf16.msra.mxu0 %v2525
      %2545 = vmatprep.subr.bf16.mxu0 0
      %2546 = vmatpush1.bf16.msra.mxu0 %v2524
      %2547 = vmatprep.subr.bf16.mxu0 0
      %2548 = vmatpush1.bf16.msra.mxu0 %v2523
      %2549 = vmatprep.subr.bf16.mxu0 0
      %2550 = vmatpush1.bf16.msra.mxu0 %v2522
      %2551 = vmatprep.subr.bf16.mxu0 0
      %2552 = vmatpush1.bf16.msra.mxu0 %v2521
      %2553 = vmatprep.subr.bf16.mxu0 0
      %2554 = vmatpush2.bf16.msra.mxu0 0
      %2555 = vmatprep.subr.bf16.mxu0 0
      %2556 = vmatpush2.bf16.msra.mxu0 0
      %2557 = vmatprep.subr.bf16.mxu0 0
      %2558 = vmatpush2.bf16.msra.mxu0 0
      %2559 = vmatprep.subr.bf16.mxu0 0
      %2560 = vmatpush2.bf16.msra.mxu0 0
      %2561 = vmatprep.subr.bf16.mxu0 0
      %2562 = vmatpush2.bf16.msra.mxu0 0
      %2563 = vmatprep.subr.bf16.mxu0 0
      %2564 = vmatpush2.bf16.msra.mxu0 0
      %2565 = vmatprep.subr.bf16.mxu0 0
      %2566 = vmatpush2.bf16.msra.mxu0 0
      %2567 = vmatprep.subr.bf16.mxu0 0
      %2568 = vmatpush2.bf16.msra.mxu0 0
      %2569 = vmatprep.mubr.bf16.mxu0 0
      %2570 = vmatmul.mubr.bf16.gmra.mxu0 %v2487
      %v2571 = vpop.f32.mrf.mxu0
      %v2572 = vadd.f32 0.0, %v2571
      %v2573 = vpop.f32.mrf.mxu0
      %v2574 = vpop.f32.mrf.mxu0
      %v2575 = vadd.f32 0.0, %v2574
      %v2576 = vpop.f32.mrf.mxu0
      %2577 = vmatprep.mubr.bf16.mxu0 0
      %2578 = vmatmul.mubr.bf16.gmra.mxu0 %v2488
      %v2579 = vpop.f32.mrf.mxu0
      %v2580 = vadd.f32 0.0, %v2579
      %v2581 = vpop.f32.mrf.mxu0
      %v2582 = vpop.f32.mrf.mxu0
      %v2583 = vadd.f32 0.0, %v2582
      %v2584 = vpop.f32.mrf.mxu0
      %2585 = vdwg.mxu0
      %v2586 = vadd.f32 %v2277, %v2572
      %v2587 = vadd.f32 %v2278, %v2575
      %v2588 = vadd.f32 %v2279, %v2580
      %v2589 = vadd.f32 %v2280, %v2583
      %v2590 = vld [vmem:[%s57] sm:$0x1]
      %v2592 = vlaneseq
      %v2593 = vshrl.u32 %v2592, 7
      %v2594 = vsub.s32 0, %v2593
      %v2595 = vrot.slane %v2590, %v2594
      %v2597 = vadd.f32 %v2586, %v2595
      %v2598 = vadd.f32 %v2587, %v2595
      %v2599 = vadd.f32 %v2588, %v2595
      %v2600 = vadd.f32 %v2589, %v2595
      %v2601 = vld [vmem:[%s59] sm:$0x1]
      %v2602 = vld [vmem:[%s61] sm:$0x1]
      %v2603 = vsel %vm1070, %v2597, 0.0
      %2604 = vadd.xlane.f32.xlu0 %v2603
      %v2605 = vpop.xlane.xlu0 %2604
      %v2606 = vsel %vm1070, %v2598, 0.0
      %2607 = vadd.xlane.f32.xlu0 %v2606
      %v2608 = vpop.xlane.xlu0 %2607
      %v2609 = vsel %vm1070, %v2599, 0.0
      %2610 = vadd.xlane.f32.xlu0 %v2609
      %v2611 = vpop.xlane.xlu0 %2610
      %v2612 = vsel %vm1070, %v2600, 0.0
      %2613 = vadd.xlane.f32.xlu0 %v2612
      %v2614 = vpop.xlane.xlu0 %2613
      %v2615 = vmul.f32 %v2605, %v1362
      %v2616 = vmul.f32 %v2608, %v1362
      %v2617 = vmul.f32 %v2611, %v1362
      %v2618 = vmul.f32 %v2614, %v1362
      %v2619 = vsub.f32 %v2597, %v2615
      %v2620 = vsub.f32 %v2598, %v2616
      %v2621 = vsub.f32 %v2599, %v2617
      %v2622 = vsub.f32 %v2600, %v2618
      %v2623 = vmul.f32 %v2619, %v2619
      %v2624 = vmul.f32 %v2620, %v2620
      %v2625 = vmul.f32 %v2621, %v2621
      %v2626 = vmul.f32 %v2622, %v2622
      %v2627 = vsel %vm1070, %v2623, 0.0
      %2628 = vadd.xlane.f32.xlu0 %v2627
      %v2629 = vpop.xlane.xlu0 %2628
      %v2630 = vsel %vm1070, %v2624, 0.0
      %2631 = vadd.xlane.f32.xlu0 %v2630
      %v2632 = vpop.xlane.xlu0 %2631
      %v2633 = vsel %vm1070, %v2625, 0.0
      %2634 = vadd.xlane.f32.xlu0 %v2633
      %v2635 = vpop.xlane.xlu0 %2634
      %v2636 = vsel %vm1070, %v2626, 0.0
      %2637 = vadd.xlane.f32.xlu0 %v2636
      %v2638 = vpop.xlane.xlu0 %2637
      %v2639 = vmul.f32 %v2629, %v1362
      %v2640 = vmul.f32 %v2632, %v1362
      %v2641 = vmul.f32 %v2635, %v1362
      %v2642 = vmul.f32 %v2638, %v1362
      %v2643 = vadd.f32 %v2639, 1e-05
      %v2644 = vadd.f32 %v2640, 1e-05
      %v2645 = vadd.f32 %v2641, 1e-05
      %v2646 = vadd.f32 %v2642, 1e-05
      %v2647 = vrsqrt.pop %v2643
      %v2648 = vrsqrt.pop %v2644
      %v2649 = vrsqrt.pop %v2645
      %v2650 = vrsqrt.pop %v2646
      %v2651 = vmul.f32 %v2619, %v2647
      %v2652 = vmul.f32 %v2620, %v2648
      %v2653 = vmul.f32 %v2621, %v2649
      %v2654 = vmul.f32 %v2622, %v2650
      %v2656 = vlaneseq
      %v2657 = vshrl.u32 %v2656, 7
      %v2658 = vsub.s32 0, %v2657
      %v2659 = vrot.slane %v2601, %v2658
      %v2661 = vmul.f32 %v2651, %v2659
      %v2662 = vmul.f32 %v2652, %v2659
      %v2663 = vmul.f32 %v2653, %v2659
      %v2664 = vmul.f32 %v2654, %v2659
      %v2666 = vlaneseq
      %v2667 = vshrl.u32 %v2666, 7
      %v2668 = vsub.s32 0, %v2667
      %v2669 = vrot.slane %v2602, %v2668
      %v2671 = vadd.f32 %v2661, %v2669
      %v2672 = vadd.f32 %v2662, %v2669
      %v2673 = vadd.f32 %v2663, %v2669
      %v2674 = vadd.f32 %v2664, %v2669
      %v2675 = vld [vmem:[%s63] sm:$0xf]
      %v2676 = vld [vmem:[%s63 + $0x4] sm:$0xf]
      %v2677 = vld [vmem:[%s63 + $0x8] sm:$0xf]
      %v2678 = vld [vmem:[%s63 + $0xc] sm:$0xf]
      %v2679 = vpack.c.bf16 %v2672, %v2671
      %v2680 = vpack.c.bf16 %v2674, %v2673
      %v2681 = vld [vmem:[%s65] sm:$0x1]
      %v2683 = vlaneseq
      %v2684 = vshrl.u32 %v2683, 7
      %v2685 = vsub.s32 0, %v2684
      %v2686 = vrot.slane %v2681, %v2685
      %v2692 = vunpack.c.l.b16 %v2675
      %v2693 = vunpack.c.l.b16 %v2676
      %v2694 = vunpack.c.l.b16 %v2677
      %v2695 = vunpack.c.l.b16 %v2678
      %v2696 = vpack.c.b16 %v2693, %v2692
      %v2697 = vpack.c.b16 %v2695, %v2694
      %v2701 = vsel %vm1070, %v2679, 0
      %v2704 = vsel %vm1070, %v2680, 0
      %2706 = vmatprep.subr.bf16.mxu0 0
      %2707 = vmatpush1.bf16.msra.mxu0 0
      %2708 = vmatprep.subr.bf16.mxu0 0
      %2709 = vmatpush1.bf16.msra.mxu0 0
      %2710 = vmatprep.subr.bf16.mxu0 0
      %2711 = vmatpush1.bf16.msra.mxu0 0
      %2712 = vmatprep.subr.bf16.mxu0 0
      %2713 = vmatpush1.bf16.msra.mxu0 0
      %2714 = vmatprep.subr.bf16.mxu0 0
      %2715 = vmatpush1.bf16.msra.mxu0 0
      %2716 = vmatprep.subr.bf16.mxu0 0
      %2717 = vmatpush1.bf16.msra.mxu0 0
      %2718 = vmatprep.subr.bf16.mxu0 0
      %2719 = vmatpush1.bf16.msra.mxu0 %v2697
      %2720 = vmatprep.subr.bf16.mxu0 0
      %2721 = vmatpush1.bf16.msra.mxu0 %v2696
      %2722 = vmatprep.subr.bf16.mxu0 0
      %2723 = vmatpush2.bf16.msra.mxu0 0
      %2724 = vmatprep.subr.bf16.mxu0 0
      %2725 = vmatpush2.bf16.msra.mxu0 0
      %2726 = vmatprep.subr.bf16.mxu0 0
      %2727 = vmatpush2.bf16.msra.mxu0 0
      %2728 = vmatprep.subr.bf16.mxu0 0
      %2729 = vmatpush2.bf16.msra.mxu0 0
      %2730 = vmatprep.subr.bf16.mxu0 0
      %2731 = vmatpush2.bf16.msra.mxu0 0
      %2732 = vmatprep.subr.bf16.mxu0 0
      %2733 = vmatpush2.bf16.msra.mxu0 0
      %2734 = vmatprep.subr.bf16.mxu0 0
      %2735 = vmatpush2.bf16.msra.mxu0 0
      %2736 = vmatprep.subr.bf16.mxu0 0
      %2737 = vmatpush2.bf16.msra.mxu0 0
      %2738 = vmatprep.mubr.bf16.mxu0 0
      %2739 = vmatmul.mubr.bf16.gmra.mxu0 %v2701
      %v2740 = vpop.f32.mrf.mxu0
      %v2741 = vadd.f32 %v2686, %v2740
      %v2742 = vpop.f32.mrf.mxu0
      %v2743 = vpop.f32.mrf.mxu0
      %v2744 = vadd.f32 %v2686, %v2743
      %v2745 = vpop.f32.mrf.mxu0
      %2746 = vmatprep.mubr.bf16.mxu0 0
      %2747 = vmatmul.mubr.bf16.gmra.mxu0 %v2704
      %v2748 = vpop.f32.mrf.mxu0
      %v2749 = vadd.f32 %v2686, %v2748
      %v2750 = vpop.f32.mrf.mxu0
      %v2751 = vpop.f32.mrf.mxu0
      %v2752 = vadd.f32 %v2686, %v2751
      %v2753 = vpop.f32.mrf.mxu0
      %2754 = vdwg.mxu0
      %2755 = vst [vmem:[%s1016] sm:$0xff] %v2741
      %2756 = vst [vmem:[%s1016 + $0x8] sm:$0xff] %v2744
      %2757 = vst [vmem:[%s1016 + $0x10] sm:$0xff] %v2749
      %2758 = vst [vmem:[%s1016 + $0x18] sm:$0xff] %v2752
      %s2759 = smul.u32 4, %s78
      %p2760 = scmp.lt.s32.totalorder %s2759, 7
      %s2761 = scalar_select %p2760, %s2759, 7
      %s2762 = smul.addr %s2761, 8
      %s2763 = scalar_lea.vmem %s67, %s2762
      // Predicated region
      $region153: #{hybrid_cnn_vit_forward.1} parent=151 // pred_check
        %p2764 = pneg %p794
      $region154: #{hybrid_cnn_vit_forward.1} parent=151 // pred_check_branch
        %2766 = sbr.rel (%p2764) target = $region156
      $region155: #{hybrid_cnn_vit_forward.1} parent=151 // pred_region
        %s2767 = smul.u32 4, %s78
      $region156: #{hybrid_cnn_vit_forward.1} parent=151 // pred_fallthru
        _
    $region152: #{hybrid_cnn_vit_forward.1} parent=5 // pred_fallthru
      _
    %p2768 = scmp.le.s32.totalorder 2, %s73
    // Predicated region
    $region157: #{hybrid_cnn_vit_forward.1} parent=5 // pred_check
      %p2769 = pneg %p2768
    $region158: #{hybrid_cnn_vit_forward.1} parent=5 // pred_check_branch
      %2771 = sbr.rel (%p2769) target = $region160
    $region159: #{hybrid_cnn_vit_forward.1} parent=5 // pred_region
      %s2772 = ssub.s32 %s73, 2
      // Predicated region
      $region161: #{hybrid_cnn_vit_forward.1} parent=159 // pred_check
        %p2773 = pneg %p800
      $region162: #{hybrid_cnn_vit_forward.1} parent=159 // pred_check_branch
        %2775 = sbr.rel (%p2773) target = $region164
      $region163: #{hybrid_cnn_vit_forward.1} parent=159 // pred_region
        %s2776 = smul.u32 4, %s79
        %p2777 = scmp.lt.s32.totalorder %s2776, 7
        %s2778 = scalar_select %p2777, %s2776, 7
        %s2779 = smul.addr %s2778, 8
        %s2780 = scalar_lea.vmem %s67, %s2779
      $region164: #{hybrid_cnn_vit_forward.1} parent=159 // pred_fallthru
        _
    $region160: #{hybrid_cnn_vit_forward.1} parent=5 // pred_fallthru
      _
  $region6: #{hybrid_cnn_vit_forward.1} parent=0 // loop_footer
    %s77 = sadd.s32 1, %s73
  $region7: #{hybrid_cnn_vit_forward.1} parent=0 // loop_footer_branch
    %72 = sbr.rel target = $region3
  $region8: #{hybrid_cnn_vit_forward.1} parent=0 // loop_exit
    _

</llo_original>
